<compile_context>
chip_gen: v7x
topology: tpu7x:2x2x1
jax: 0.10.0
libtpu: 0.0.40
codegen_flags: <defaults>
</compile_context>

<pallas_src>
import jax
import jax.numpy as jnp
from jax.experimental import pallas as pl
from jax.experimental.pallas import tpu as pltpu


def cnn_fused_kernel(x_ref, w1_ref, b1_ref, w2_ref, b2_ref,
                     fw1_ref, fb1_ref, fw2_ref, fb2_ref,
                     out_ref, xpad1_ref, xpad2_ref):
    # x_ref:    (B, L, Cin)            channels-last input (torch forward input layout)
    # w1_ref:   (3, Cin, H)            conv1 weight, tap-major
    # w2_ref:   (3, H, C2)             conv2 weight, tap-major
    # b*_ref:   (1, C)                 biases
    # fw1_ref:  (C2, NR2, 128)         fc1 weight, permuted + per-batch tiled (see wrapper)
    # fw2_ref:  (128, C2)              fc2 weight (in, out)
    # out_ref:  (B, C2)
    # xpad1/2:  zero-initialised VMEM staging buffers holding the whole batch with
    #           per-batch conv halos (padding=1) already in place.
    B, L, _ = x_ref.shape
    L1 = L // 2                       # length after conv1 + pool
    L2 = L // 4                       # length after conv2 + pool
    C2 = w2_ref.shape[-1]
    S1 = L + 4                        # per-batch row stride in xpad1 (halo+data+halo+2 spacer)
    S2 = L1 + 2                       # per-batch row stride in xpad2 (halo+data+halo)
    NR1 = (B - 1) * S2 + L1           # rows of the stacked conv1(+pool) output
    NR2 = (B - 1) * (L2 + 1) + L2     # rows of the stacked conv2(+pool) output

    # Zero halos / spacers once; only the data rows are overwritten below.
    xpad1_ref[...] = jnp.zeros_like(xpad1_ref)
    xpad2_ref[...] = jnp.zeros_like(xpad2_ref)

    # Stack all batch elements (each with its own zero halo) into one staging buffer so
    # every stage below runs a single time over the whole batch.
    for b in range(B):
        xpad1_ref[pl.ds(b * S1 + 1, L), :] = x_ref[b]

    def conv_relu_pool(xpad_ref, w_ref, b_ref, n_rows):
        # Conv1d(k=3, s=1, p=1) + ReLU + MaxPool1d(2) for the whole stacked batch.
        # MaxPool is fused as two stride-2 im2col branches combined with a max.
        def branch(p):
            y = (jnp.dot(xpad_ref[pl.ds(p + 0, n_rows, stride=2), :], w_ref[0],
                         preferred_element_type=jnp.float32)
                 + jnp.dot(xpad_ref[pl.ds(p + 1, n_rows, stride=2), :], w_ref[1],
                           preferred_element_type=jnp.float32)
                 + jnp.dot(xpad_ref[pl.ds(p + 2, n_rows, stride=2), :], w_ref[2],
                           preferred_element_type=jnp.float32)
                 + b_ref[...])
            return jnp.maximum(y, 0.0)                      # ReLU
        return jnp.maximum(branch(0), branch(1))            # MaxPool over the pair

    # ---- conv1 + relu + pool, all batches at once: -> (NR1, H) ----
    h1 = conv_relu_pool(xpad1_ref, w1_ref, b1_ref, NR1)

    # Rows straddling a batch boundary are junk; they land exactly on the halo rows of
    # the next stage, so zero them and do ONE contiguous store into xpad2.
    ridx1 = jax.lax.broadcasted_iota(jnp.int32, h1.shape, 0)
    junk1 = ridx1 < 0                                        # all-False start
    for b in range(B - 1):
        lo = b * S2 + L1
        junk1 = junk1 | ((ridx1 >= lo) & (ridx1 < lo + 2))
    h1 = jnp.where(junk1, 0.0, h1)
    xpad2_ref[pl.ds(1, NR1), :] = h1

    # ---- conv2 + relu + pool, all batches at once: -> (NR2, C2); stays in vregs ----
    h2 = conv_relu_pool(xpad2_ref, w2_ref, b2_ref, NR2)

    # ---- flatten (torch NCL channel-major) + fc1 + fc2, no transposes ----
    #   g[r, o] = sum_c h2[r, c] * fw1_big[c, r, o]   (fw1_big row at a junk r is zero)
    #   fc1[b]  = fb1 + sel[b] @ g      with sel selecting batch b's L2 rows
    g = h2[:, 0:1] * fw1_ref[0]
    for c in range(1, C2):
        g = g + h2[:, c:c + 1] * fw1_ref[c]                  # (NR2, 128)

    col = jax.lax.broadcasted_iota(jnp.int32, (B, NR2), 1)
    row = jax.lax.broadcasted_iota(jnp.int32, (B, NR2), 0)
    start = row * (L2 + 1)
    sel = ((col >= start) & (col < start + L2)).astype(jnp.float32)   # (B, NR2)

    fc1 = jnp.dot(sel, g, preferred_element_type=jnp.float32) + fb1_ref[...]
    fc2 = jnp.dot(fc1, fw2_ref[...], preferred_element_type=jnp.float32) + fb2_ref[...]
    out_ref[...] = fc2                                       # single (B, C2) store


@jax.jit
def cnn_forward(x, params):
    # x: (B, L, input_size) — same layout the torch forward receives (it permutes to NCL).
    (w1, b1, w2, b2, fw1, fb1, fw2, fb2) = params
    B, L, Cin = x.shape
    H = w1.shape[0]
    C2 = w2.shape[0]
    F1 = fw1.shape[0]
    L1, L2 = L // 2, L // 4

    # Tiny one-time weight re-packing (would normally be cached alongside the params).
    w1_k = jnp.transpose(w1, (2, 1, 0))                        # (3, Cin, H)
    w2_k = jnp.transpose(w2, (2, 1, 0))                        # (3, H, C2)
    # fc1 weight rows re-ordered so the channels-last conv output is consumed directly
    # (fw1_r[c, l, o] == fw1[o, c*L2 + l]), then tiled once per batch with a zero row at
    # the batch boundary so it lines up with the stacked conv2 output rows.
    fw1_r = jnp.transpose(fw1.reshape(F1, C2, L2), (1, 2, 0))  # (C2, L2, F1)
    zrow = jnp.zeros((C2, 1, F1), jnp.float32)
    fw1_big = jnp.concatenate([fw1_r, zrow] * (B - 1) + [fw1_r], axis=1)  # (C2, NR2, F1)
    fw2_io = fw2.T                                             # (F1, C2)

    vmem = lambda: pl.BlockSpec(memory_space=pltpu.MemorySpace.VMEM)
    return pl.pallas_call(
        cnn_fused_kernel,
        out_shape=jax.ShapeDtypeStruct((B, C2), jnp.float32),
        in_specs=[vmem() for _ in range(9)],
        out_specs=vmem(),
        scratch_shapes=[pltpu.VMEM((B * (L + 4), Cin), jnp.float32),   # stacked conv1 halo buffer
                        pltpu.VMEM((B * (L1 + 2), H), jnp.float32)],   # stacked conv2 halo buffer
    )(x, w1_k, b1.reshape(1, H), w2_k, b2.reshape(1, C2),
      fw1_big, fb1.reshape(1, F1), fw2_io, fb2.reshape(1, C2))


def torch_ref_forward(x, params):
    # Pure-JAX reference mirroring the PyTorch module exactly.
    (w1, b1, w2, b2, fw1, fb1, fw2, fb2) = params
    y = jnp.transpose(x, (0, 2, 1))                            # (B, Cin, L)

    def block(y, w, b):
        y = jax.lax.conv_general_dilated(
            y, w, window_strides=(1,), padding=((1, 1),),
            dimension_numbers=("NCH", "OIH", "NCH"))
        y = jax.nn.relu(y + b[None, :, None])
        B_, C_, L_ = y.shape
        return y.reshape(B_, C_, L_ // 2, 2).max(axis=-1)

    y = block(y, w1, b1)
    y = block(y, w2, b2)
    y = y.reshape(y.shape[0], -1)                              # NCL channel-major flatten
    y = y @ fw1.T + fb1
    y = y @ fw2.T + fb2
    return y


if __name__ == "__main__":
    # fc1 = Linear(output_size * (180 // 4), 128) hard-codes seq_len = 180.
    B, L = 2, 180
    input_size, hidden_size, output_size = 16, 32, 5

    key = jax.random.PRNGKey(0)
    ks = jax.random.split(key, 9)
    w1 = 0.1 * jax.random.normal(ks[0], (hidden_size, input_size, 3), jnp.float32)
    b1 = 0.1 * jax.random.normal(ks[1], (hidden_size,), jnp.float32)
    w2 = 0.1 * jax.random.normal(ks[2], (output_size, hidden_size, 3), jnp.float32)
    b2 = 0.1 * jax.random.normal(ks[3], (output_size,), jnp.float32)
    fw1 = 0.1 * jax.random.normal(ks[4], (128, output_size * (180 // 4)), jnp.float32)
    fb1 = 0.1 * jax.random.normal(ks[5], (128,), jnp.float32)
    fw2 = 0.1 * jax.random.normal(ks[6], (output_size, 128), jnp.float32)
    fb2 = 0.1 * jax.random.normal(ks[7], (output_size,), jnp.float32)
    x = jax.random.normal(ks[8], (B, L, input_size), jnp.float32)

    params = (w1, b1, w2, b2, fw1, fb1, fw2, fb2)

    out = jax.block_until_ready(cnn_forward(x, params))
    ref = jax.block_until_ready(torch_ref_forward(x, params))

    assert out.shape == (B, output_size), out.shape
    if not jnp.allclose(out, ref, atol=2e-4, rtol=2e-4):
        raise AssertionError("Pallas output mismatch vs pure-JAX reference")
    print("KERNEL_OK")
</pallas_src>

<mosaic_0001>
module attributes {stable_mosaic.version = 11 : i64} {
  func.func @cnn_fused_kernel(%arg0: memref<2x180x16xf32, #tpu.memory_space<vmem>>, %arg1: memref<3x16x32xf32, #tpu.memory_space<vmem>>, %arg2: memref<1x32xf32, #tpu.memory_space<vmem>>, %arg3: memref<3x32x5xf32, #tpu.memory_space<vmem>>, %arg4: memref<1x5xf32, #tpu.memory_space<vmem>>, %arg5: memref<5x91x128xf32, #tpu.memory_space<vmem>>, %arg6: memref<1x128xf32, #tpu.memory_space<vmem>>, %arg7: memref<128x5xf32, #tpu.memory_space<vmem>>, %arg8: memref<1x5xf32, #tpu.memory_space<vmem>>, %arg9: memref<2x5xf32, #tpu.memory_space<vmem>>, %arg10: memref<368x16xf32, #tpu.memory_space<vmem>>, %arg11: memref<184x32xf32, #tpu.memory_space<vmem>>) attributes {dimension_semantics = [], scalar_prefetch = 0 : i64, scratch_operands = 2 : i64, tpu.core_type = #tpu.core_type<tc>} {
    %cst = arith.constant 0.000000e+00 : f32
    %0 = vector.broadcast %cst : f32 to vector<368x16xf32>
    %c0 = arith.constant 0 : index
    %c0_0 = arith.constant 0 : index
    %1 = vector.load %arg10[%c0, %c0_0] : memref<368x16xf32, #tpu.memory_space<vmem>>, vector<368x16xf32>
    tpu.vector_store %arg10[%c0, %c0_0], %0 {strides = array<i32>} : memref<368x16xf32, #tpu.memory_space<vmem>>, vector<368x16xf32>,
    %cst_1 = arith.constant 0.000000e+00 : f32
    %2 = vector.broadcast %cst_1 : f32 to vector<184x32xf32>
    %c0_2 = arith.constant 0 : index
    %c0_3 = arith.constant 0 : index
    %3 = vector.load %arg11[%c0_2, %c0_3] : memref<184x32xf32, #tpu.memory_space<vmem>>, vector<184x32xf32>
    tpu.vector_store %arg11[%c0_2, %c0_3], %2 {strides = array<i32>} : memref<184x32xf32, #tpu.memory_space<vmem>>, vector<184x32xf32>,
    %c0_4 = arith.constant 0 : index
    %c0_5 = arith.constant 0 : index
    %c0_6 = arith.constant 0 : index
    %4 = vector.load %arg0[%c0_4, %c0_5, %c0_6] : memref<2x180x16xf32, #tpu.memory_space<vmem>>, vector<1x180x16xf32>
    %5 = vector.shape_cast %4 : vector<1x180x16xf32> to vector<180x16xf32>
    %c1 = arith.constant 1 : index
    %c0_7 = arith.constant 0 : index
    %6 = vector.load %arg10[%c1, %c0_7] : memref<368x16xf32, #tpu.memory_space<vmem>>, vector<180x16xf32>
    tpu.vector_store %arg10[%c1, %c0_7], %5 {strides = array<i32>} : memref<368x16xf32, #tpu.memory_space<vmem>>, vector<180x16xf32>,
    %c1_8 = arith.constant 1 : index
    %c0_9 = arith.constant 0 : index
    %c0_10 = arith.constant 0 : index
    %7 = vector.load %arg0[%c1_8, %c0_9, %c0_10] : memref<2x180x16xf32, #tpu.memory_space<vmem>>, vector<1x180x16xf32>
    %8 = vector.shape_cast %7 : vector<1x180x16xf32> to vector<180x16xf32>
    %c185 = arith.constant 185 : index
    %c0_11 = arith.constant 0 : index
    %9 = vector.load %arg10[%c185, %c0_11] : memref<368x16xf32, #tpu.memory_space<vmem>>, vector<180x16xf32>
    tpu.vector_store %arg10[%c185, %c0_11], %8 {strides = array<i32>} : memref<368x16xf32, #tpu.memory_space<vmem>>, vector<180x16xf32>,
    %c0_12 = arith.constant 0 : index
    %c0_13 = arith.constant 0 : index
    %10 = tpu.strided_load %arg10[%c0_12, %c0_13] {strides = array<i32: 2, 1>} : memref<368x16xf32, #tpu.memory_space<vmem>>, vector<182x16xf32>
    %c0_14 = arith.constant 0 : index
    %c0_15 = arith.constant 0 : index
    %c0_16 = arith.constant 0 : index
    %11 = vector.load %arg1[%c0_14, %c0_15, %c0_16] : memref<3x16x32xf32, #tpu.memory_space<vmem>>, vector<1x16x32xf32>
    %12 = vector.shape_cast %11 : vector<1x16x32xf32> to vector<16x32xf32>
    %cst_17 = arith.constant dense<0.000000e+00> : vector<182x32xf32>
    %13 = tpu.matmul %10, %12, %cst_17 {dimension_numbers = #tpu.dot_dimension_numbers<[1], [0], [0], [1], [0, 0, 1, 1], [], []>} : vector<182x16xf32>, vector<16x32xf32>, vector<182x32xf32> -> vector<182x32xf32>
    %c1_18 = arith.constant 1 : index
    %c0_19 = arith.constant 0 : index
    %14 = tpu.strided_load %arg10[%c1_18, %c0_19] {strides = array<i32: 2, 1>} : memref<368x16xf32, #tpu.memory_space<vmem>>, vector<182x16xf32>
    %c1_20 = arith.constant 1 : index
    %c0_21 = arith.constant 0 : index
    %c0_22 = arith.constant 0 : index
    %15 = vector.load %arg1[%c1_20, %c0_21, %c0_22] : memref<3x16x32xf32, #tpu.memory_space<vmem>>, vector<1x16x32xf32>
    %16 = vector.shape_cast %15 : vector<1x16x32xf32> to vector<16x32xf32>
    %cst_23 = arith.constant dense<0.000000e+00> : vector<182x32xf32>
    %17 = tpu.matmul %14, %16, %cst_23 {dimension_numbers = #tpu.dot_dimension_numbers<[1], [0], [0], [1], [0, 0, 1, 1], [], []>} : vector<182x16xf32>, vector<16x32xf32>, vector<182x32xf32> -> vector<182x32xf32>
    %18 = arith.addf %13, %17 : vector<182x32xf32>
    %c2 = arith.constant 2 : index
    %c0_24 = arith.constant 0 : index
    %19 = tpu.strided_load %arg10[%c2, %c0_24] {strides = array<i32: 2, 1>} : memref<368x16xf32, #tpu.memory_space<vmem>>, vector<182x16xf32>
    %c2_25 = arith.constant 2 : index
    %c0_26 = arith.constant 0 : index
    %c0_27 = arith.constant 0 : index
    %20 = vector.load %arg1[%c2_25, %c0_26, %c0_27] : memref<3x16x32xf32, #tpu.memory_space<vmem>>, vector<1x16x32xf32>
    %21 = vector.shape_cast %20 : vector<1x16x32xf32> to vector<16x32xf32>
    %cst_28 = arith.constant dense<0.000000e+00> : vector<182x32xf32>
    %22 = tpu.matmul %19, %21, %cst_28 {dimension_numbers = #tpu.dot_dimension_numbers<[1], [0], [0], [1], [0, 0, 1, 1], [], []>} : vector<182x16xf32>, vector<16x32xf32>, vector<182x32xf32> -> vector<182x32xf32>
    %23 = arith.addf %18, %22 : vector<182x32xf32>
    %c0_29 = arith.constant 0 : index
    %c0_30 = arith.constant 0 : index
    %24 = vector.load %arg2[%c0_29, %c0_30] : memref<1x32xf32, #tpu.memory_space<vmem>>, vector<1x32xf32>
    %25 = vector.broadcast %24 : vector<1x32xf32> to vector<182x32xf32>
    %26 = arith.addf %23, %25 : vector<182x32xf32>
    %cst_31 = arith.constant 0.000000e+00 : f32
    %27 = vector.broadcast %cst_31 : f32 to vector<182x32xf32>
    %28 = arith.maximumf %26, %27 : vector<182x32xf32>
    %c1_32 = arith.constant 1 : index
    %c0_33 = arith.constant 0 : index
    %29 = tpu.strided_load %arg10[%c1_32, %c0_33] {strides = array<i32: 2, 1>} : memref<368x16xf32, #tpu.memory_space<vmem>>, vector<182x16xf32>
    %c0_34 = arith.constant 0 : index
    %c0_35 = arith.constant 0 : index
    %c0_36 = arith.constant 0 : index
    %30 = vector.load %arg1[%c0_34, %c0_35, %c0_36] : memref<3x16x32xf32, #tpu.memory_space<vmem>>, vector<1x16x32xf32>
    %31 = vector.shape_cast %30 : vector<1x16x32xf32> to vector<16x32xf32>
    %cst_37 = arith.constant dense<0.000000e+00> : vector<182x32xf32>
    %32 = tpu.matmul %29, %31, %cst_37 {dimension_numbers = #tpu.dot_dimension_numbers<[1], [0], [0], [1], [0, 0, 1, 1], [], []>} : vector<182x16xf32>, vector<16x32xf32>, vector<182x32xf32> -> vector<182x32xf32>
    %c2_38 = arith.constant 2 : index
    %c0_39 = arith.constant 0 : index
    %33 = tpu.strided_load %arg10[%c2_38, %c0_39] {strides = array<i32: 2, 1>} : memref<368x16xf32, #tpu.memory_space<vmem>>, vector<182x16xf32>
    %c1_40 = arith.constant 1 : index
    %c0_41 = arith.constant 0 : index
    %c0_42 = arith.constant 0 : index
    %34 = vector.load %arg1[%c1_40, %c0_41, %c0_42] : memref<3x16x32xf32, #tpu.memory_space<vmem>>, vector<1x16x32xf32>
    %35 = vector.shape_cast %34 : vector<1x16x32xf32> to vector<16x32xf32>
    %cst_43 = arith.constant dense<0.000000e+00> : vector<182x32xf32>
    %36 = tpu.matmul %33, %35, %cst_43 {dimension_numbers = #tpu.dot_dimension_numbers<[1], [0], [0], [1], [0, 0, 1, 1], [], []>} : vector<182x16xf32>, vector<16x32xf32>, vector<182x32xf32> -> vector<182x32xf32>
    %37 = arith.addf %32, %36 : vector<182x32xf32>
    %c3 = arith.constant 3 : index
    %c0_44 = arith.constant 0 : index
    %38 = tpu.strided_load %arg10[%c3, %c0_44] {strides = array<i32: 2, 1>} : memref<368x16xf32, #tpu.memory_space<vmem>>, vector<182x16xf32>
    %c2_45 = arith.constant 2 : index
    %c0_46 = arith.constant 0 : index
    %c0_47 = arith.constant 0 : index
    %39 = vector.load %arg1[%c2_45, %c0_46, %c0_47] : memref<3x16x32xf32, #tpu.memory_space<vmem>>, vector<1x16x32xf32>
    %40 = vector.shape_cast %39 : vector<1x16x32xf32> to vector<16x32xf32>
    %cst_48 = arith.constant dense<0.000000e+00> : vector<182x32xf32>
    %41 = tpu.matmul %38, %40, %cst_48 {dimension_numbers = #tpu.dot_dimension_numbers<[1], [0], [0], [1], [0, 0, 1, 1], [], []>} : vector<182x16xf32>, vector<16x32xf32>, vector<182x32xf32> -> vector<182x32xf32>
    %42 = arith.addf %37, %41 : vector<182x32xf32>
    %c0_49 = arith.constant 0 : index
    %c0_50 = arith.constant 0 : index
    %43 = vector.load %arg2[%c0_49, %c0_50] : memref<1x32xf32, #tpu.memory_space<vmem>>, vector<1x32xf32>
    %44 = vector.broadcast %43 : vector<1x32xf32> to vector<182x32xf32>
    %45 = arith.addf %42, %44 : vector<182x32xf32>
    %cst_51 = arith.constant 0.000000e+00 : f32
    %46 = vector.broadcast %cst_51 : f32 to vector<182x32xf32>
    %47 = arith.maximumf %45, %46 : vector<182x32xf32>
    %48 = arith.maximumf %28, %47 : vector<182x32xf32>
    %49 = tpu.iota {dimensions = array<i32: 0>} : vector<182x32xi32>
    %c0_i32 = arith.constant 0 : i32
    %50 = vector.broadcast %c0_i32 : i32 to vector<182x32xi32>
    %51 = arith.cmpi slt, %49, %50 : vector<182x32xi32>
    %c90_i32 = arith.constant 90 : i32
    %52 = vector.broadcast %c90_i32 : i32 to vector<182x32xi32>
    %53 = arith.cmpi sge, %49, %52 : vector<182x32xi32>
    %c92_i32 = arith.constant 92 : i32
    %54 = vector.broadcast %c92_i32 : i32 to vector<182x32xi32>
    %55 = arith.cmpi slt, %49, %54 : vector<182x32xi32>
    %56 = arith.andi %53, %55 : vector<182x32xi1>
    %57 = arith.ori %51, %56 : vector<182x32xi1>
    %cst_52 = arith.constant 0.000000e+00 : f32
    %58 = vector.broadcast %cst_52 : f32 to vector<182x32xf32>
    %59 = arith.select %57, %58, %48 : vector<182x32xi1>, vector<182x32xf32>
    %c1_53 = arith.constant 1 : index
    %c0_54 = arith.constant 0 : index
    %60 = vector.load %arg11[%c1_53, %c0_54] : memref<184x32xf32, #tpu.memory_space<vmem>>, vector<182x32xf32>
    tpu.vector_store %arg11[%c1_53, %c0_54], %59 {strides = array<i32>} : memref<184x32xf32, #tpu.memory_space<vmem>>, vector<182x32xf32>,
    %c0_55 = arith.constant 0 : index
    %c0_56 = arith.constant 0 : index
    %61 = tpu.strided_load %arg11[%c0_55, %c0_56] {strides = array<i32: 2, 1>} : memref<184x32xf32, #tpu.memory_space<vmem>>, vector<91x32xf32>
    %c0_57 = arith.constant 0 : index
    %c0_58 = arith.constant 0 : index
    %c0_59 = arith.constant 0 : index
    %62 = vector.load %arg3[%c0_57, %c0_58, %c0_59] : memref<3x32x5xf32, #tpu.memory_space<vmem>>, vector<1x32x5xf32>
    %63 = vector.shape_cast %62 : vector<1x32x5xf32> to vector<32x5xf32>
    %cst_60 = arith.constant dense<0.000000e+00> : vector<91x5xf32>
    %64 = tpu.matmul %61, %63, %cst_60 {dimension_numbers = #tpu.dot_dimension_numbers<[1], [0], [0], [1], [0, 0, 1, 1], [], []>} : vector<91x32xf32>, vector<32x5xf32>, vector<91x5xf32> -> vector<91x5xf32>
    %c1_61 = arith.constant 1 : index
    %c0_62 = arith.constant 0 : index
    %65 = tpu.strided_load %arg11[%c1_61, %c0_62] {strides = array<i32: 2, 1>} : memref<184x32xf32, #tpu.memory_space<vmem>>, vector<91x32xf32>
    %c1_63 = arith.constant 1 : index
    %c0_64 = arith.constant 0 : index
    %c0_65 = arith.constant 0 : index
    %66 = vector.load %arg3[%c1_63, %c0_64, %c0_65] : memref<3x32x5xf32, #tpu.memory_space<vmem>>, vector<1x32x5xf32>
    %67 = vector.shape_cast %66 : vector<1x32x5xf32> to vector<32x5xf32>
    %cst_66 = arith.constant dense<0.000000e+00> : vector<91x5xf32>
    %68 = tpu.matmul %65, %67, %cst_66 {dimension_numbers = #tpu.dot_dimension_numbers<[1], [0], [0], [1], [0, 0, 1, 1], [], []>} : vector<91x32xf32>, vector<32x5xf32>, vector<91x5xf32> -> vector<91x5xf32>
    %69 = arith.addf %64, %68 : vector<91x5xf32>
    %c2_67 = arith.constant 2 : index
    %c0_68 = arith.constant 0 : index
    %70 = tpu.strided_load %arg11[%c2_67, %c0_68] {strides = array<i32: 2, 1>} : memref<184x32xf32, #tpu.memory_space<vmem>>, vector<91x32xf32>
    %c2_69 = arith.constant 2 : index
    %c0_70 = arith.constant 0 : index
    %c0_71 = arith.constant 0 : index
    %71 = vector.load %arg3[%c2_69, %c0_70, %c0_71] : memref<3x32x5xf32, #tpu.memory_space<vmem>>, vector<1x32x5xf32>
    %72 = vector.shape_cast %71 : vector<1x32x5xf32> to vector<32x5xf32>
    %cst_72 = arith.constant dense<0.000000e+00> : vector<91x5xf32>
    %73 = tpu.matmul %70, %72, %cst_72 {dimension_numbers = #tpu.dot_dimension_numbers<[1], [0], [0], [1], [0, 0, 1, 1], [], []>} : vector<91x32xf32>, vector<32x5xf32>, vector<91x5xf32> -> vector<91x5xf32>
    %74 = arith.addf %69, %73 : vector<91x5xf32>
    %c0_73 = arith.constant 0 : index
    %c0_74 = arith.constant 0 : index
    %75 = vector.load %arg4[%c0_73, %c0_74] : memref<1x5xf32, #tpu.memory_space<vmem>>, vector<1x5xf32>
    %76 = vector.broadcast %75 : vector<1x5xf32> to vector<91x5xf32>
    %77 = arith.addf %74, %76 : vector<91x5xf32>
    %cst_75 = arith.constant 0.000000e+00 : f32
    %78 = vector.broadcast %cst_75 : f32 to vector<91x5xf32>
    %79 = arith.maximumf %77, %78 : vector<91x5xf32>
    %c1_76 = arith.constant 1 : index
    %c0_77 = arith.constant 0 : index
    %80 = tpu.strided_load %arg11[%c1_76, %c0_77] {strides = array<i32: 2, 1>} : memref<184x32xf32, #tpu.memory_space<vmem>>, vector<91x32xf32>
    %c0_78 = arith.constant 0 : index
    %c0_79 = arith.constant 0 : index
    %c0_80 = arith.constant 0 : index
    %81 = vector.load %arg3[%c0_78, %c0_79, %c0_80] : memref<3x32x5xf32, #tpu.memory_space<vmem>>, vector<1x32x5xf32>
    %82 = vector.shape_cast %81 : vector<1x32x5xf32> to vector<32x5xf32>
    %cst_81 = arith.constant dense<0.000000e+00> : vector<91x5xf32>
    %83 = tpu.matmul %80, %82, %cst_81 {dimension_numbers = #tpu.dot_dimension_numbers<[1], [0], [0], [1], [0, 0, 1, 1], [], []>} : vector<91x32xf32>, vector<32x5xf32>, vector<91x5xf32> -> vector<91x5xf32>
    %c2_82 = arith.constant 2 : index
    %c0_83 = arith.constant 0 : index
    %84 = tpu.strided_load %arg11[%c2_82, %c0_83] {strides = array<i32: 2, 1>} : memref<184x32xf32, #tpu.memory_space<vmem>>, vector<91x32xf32>
    %c1_84 = arith.constant 1 : index
    %c0_85 = arith.constant 0 : index
    %c0_86 = arith.constant 0 : index
    %85 = vector.load %arg3[%c1_84, %c0_85, %c0_86] : memref<3x32x5xf32, #tpu.memory_space<vmem>>, vector<1x32x5xf32>
    %86 = vector.shape_cast %85 : vector<1x32x5xf32> to vector<32x5xf32>
    %cst_87 = arith.constant dense<0.000000e+00> : vector<91x5xf32>
    %87 = tpu.matmul %84, %86, %cst_87 {dimension_numbers = #tpu.dot_dimension_numbers<[1], [0], [0], [1], [0, 0, 1, 1], [], []>} : vector<91x32xf32>, vector<32x5xf32>, vector<91x5xf32> -> vector<91x5xf32>
    %88 = arith.addf %83, %87 : vector<91x5xf32>
    %c3_88 = arith.constant 3 : index
    %c0_89 = arith.constant 0 : index
    %89 = tpu.strided_load %arg11[%c3_88, %c0_89] {strides = array<i32: 2, 1>} : memref<184x32xf32, #tpu.memory_space<vmem>>, vector<91x32xf32>
    %c2_90 = arith.constant 2 : index
    %c0_91 = arith.constant 0 : index
    %c0_92 = arith.constant 0 : index
    %90 = vector.load %arg3[%c2_90, %c0_91, %c0_92] : memref<3x32x5xf32, #tpu.memory_space<vmem>>, vector<1x32x5xf32>
    %91 = vector.shape_cast %90 : vector<1x32x5xf32> to vector<32x5xf32>
    %cst_93 = arith.constant dense<0.000000e+00> : vector<91x5xf32>
    %92 = tpu.matmul %89, %91, %cst_93 {dimension_numbers = #tpu.dot_dimension_numbers<[1], [0], [0], [1], [0, 0, 1, 1], [], []>} : vector<91x32xf32>, vector<32x5xf32>, vector<91x5xf32> -> vector<91x5xf32>
    %93 = arith.addf %88, %92 : vector<91x5xf32>
    %c0_94 = arith.constant 0 : index
    %c0_95 = arith.constant 0 : index
    %94 = vector.load %arg4[%c0_94, %c0_95] : memref<1x5xf32, #tpu.memory_space<vmem>>, vector<1x5xf32>
    %95 = vector.broadcast %94 : vector<1x5xf32> to vector<91x5xf32>
    %96 = arith.addf %93, %95 : vector<91x5xf32>
    %cst_96 = arith.constant 0.000000e+00 : f32
    %97 = vector.broadcast %cst_96 : f32 to vector<91x5xf32>
    %98 = arith.maximumf %96, %97 : vector<91x5xf32>
    %99 = arith.maximumf %79, %98 : vector<91x5xf32>
    %100 = vector.extract_strided_slice %99 {offsets = [0, 0], sizes = [91, 1], strides = [1, 1]} : vector<91x5xf32> to vector<91x1xf32>
    %c0_97 = arith.constant 0 : index
    %c0_98 = arith.constant 0 : index
    %c0_99 = arith.constant 0 : index
    %101 = vector.load %arg5[%c0_97, %c0_98, %c0_99] : memref<5x91x128xf32, #tpu.memory_space<vmem>>, vector<1x91x128xf32>
    %102 = vector.shape_cast %101 : vector<1x91x128xf32> to vector<91x128xf32>
    %103 = vector.broadcast %100 : vector<91x1xf32> to vector<91x128xf32>
    %104 = arith.mulf %103, %102 : vector<91x128xf32>
    %105 = vector.extract_strided_slice %99 {offsets = [0, 1], sizes = [91, 1], strides = [1, 1]} : vector<91x5xf32> to vector<91x1xf32>
    %c1_100 = arith.constant 1 : index
    %c0_101 = arith.constant 0 : index
    %c0_102 = arith.constant 0 : index
    %106 = vector.load %arg5[%c1_100, %c0_101, %c0_102] : memref<5x91x128xf32, #tpu.memory_space<vmem>>, vector<1x91x128xf32>
    %107 = vector.shape_cast %106 : vector<1x91x128xf32> to vector<91x128xf32>
    %108 = vector.broadcast %105 : vector<91x1xf32> to vector<91x128xf32>
    %109 = arith.mulf %108, %107 : vector<91x128xf32>
    %110 = arith.addf %104, %109 : vector<91x128xf32>
    %111 = vector.extract_strided_slice %99 {offsets = [0, 2], sizes = [91, 1], strides = [1, 1]} : vector<91x5xf32> to vector<91x1xf32>
    %c2_103 = arith.constant 2 : index
    %c0_104 = arith.constant 0 : index
    %c0_105 = arith.constant 0 : index
    %112 = vector.load %arg5[%c2_103, %c0_104, %c0_105] : memref<5x91x128xf32, #tpu.memory_space<vmem>>, vector<1x91x128xf32>
    %113 = vector.shape_cast %112 : vector<1x91x128xf32> to vector<91x128xf32>
    %114 = vector.broadcast %111 : vector<91x1xf32> to vector<91x128xf32>
    %115 = arith.mulf %114, %113 : vector<91x128xf32>
    %116 = arith.addf %110, %115 : vector<91x128xf32>
    %117 = vector.extract_strided_slice %99 {offsets = [0, 3], sizes = [91, 1], strides = [1, 1]} : vector<91x5xf32> to vector<91x1xf32>
    %c3_106 = arith.constant 3 : index
    %c0_107 = arith.constant 0 : index
    %c0_108 = arith.constant 0 : index
    %118 = vector.load %arg5[%c3_106, %c0_107, %c0_108] : memref<5x91x128xf32, #tpu.memory_space<vmem>>, vector<1x91x128xf32>
    %119 = vector.shape_cast %118 : vector<1x91x128xf32> to vector<91x128xf32>
    %120 = vector.broadcast %117 : vector<91x1xf32> to vector<91x128xf32>
    %121 = arith.mulf %120, %119 : vector<91x128xf32>
    %122 = arith.addf %116, %121 : vector<91x128xf32>
    %123 = vector.extract_strided_slice %99 {offsets = [0, 4], sizes = [91, 1], strides = [1, 1]} : vector<91x5xf32> to vector<91x1xf32>
    %c4 = arith.constant 4 : index
    %c0_109 = arith.constant 0 : index
    %c0_110 = arith.constant 0 : index
    %124 = vector.load %arg5[%c4, %c0_109, %c0_110] : memref<5x91x128xf32, #tpu.memory_space<vmem>>, vector<1x91x128xf32>
    %125 = vector.shape_cast %124 : vector<1x91x128xf32> to vector<91x128xf32>
    %126 = vector.broadcast %123 : vector<91x1xf32> to vector<91x128xf32>
    %127 = arith.mulf %126, %125 : vector<91x128xf32>
    %128 = arith.addf %122, %127 : vector<91x128xf32>
    %129 = tpu.iota {dimensions = array<i32: 1>} : vector<2x91xi32>
    %130 = tpu.iota {dimensions = array<i32: 0>} : vector<2x91xi32>
    %c46_i32 = arith.constant 46 : i32
    %131 = vector.broadcast %c46_i32 : i32 to vector<2x91xi32>
    %132 = arith.muli %130, %131 : vector<2x91xi32>
    %133 = arith.cmpi sge, %129, %132 : vector<2x91xi32>
    %c45_i32 = arith.constant 45 : i32
    %134 = vector.broadcast %c45_i32 : i32 to vector<2x91xi32>
    %135 = arith.addi %132, %134 : vector<2x91xi32>
    %136 = arith.cmpi slt, %129, %135 : vector<2x91xi32>
    %137 = arith.andi %133, %136 : vector<2x91xi1>
    %138 = arith.extui %137 : vector<2x91xi1> to vector<2x91xi32>
    %139 = arith.sitofp %138 : vector<2x91xi32> to vector<2x91xf32>
    %cst_111 = arith.constant dense<0.000000e+00> : vector<2x128xf32>
    %140 = tpu.matmul %139, %128, %cst_111 {dimension_numbers = #tpu.dot_dimension_numbers<[1], [0], [0], [1], [0, 0, 1, 1], [], []>} : vector<2x91xf32>, vector<91x128xf32>, vector<2x128xf32> -> vector<2x128xf32>
    %c0_112 = arith.constant 0 : index
    %c0_113 = arith.constant 0 : index
    %141 = vector.load %arg6[%c0_112, %c0_113] : memref<1x128xf32, #tpu.memory_space<vmem>>, vector<1x128xf32>
    %142 = vector.broadcast %141 : vector<1x128xf32> to vector<2x128xf32>
    %143 = arith.addf %140, %142 : vector<2x128xf32>
    %c0_114 = arith.constant 0 : index
    %c0_115 = arith.constant 0 : index
    %144 = vector.load %arg7[%c0_114, %c0_115] : memref<128x5xf32, #tpu.memory_space<vmem>>, vector<128x5xf32>
    %cst_116 = arith.constant dense<0.000000e+00> : vector<2x5xf32>
    %145 = tpu.matmul %143, %144, %cst_116 {dimension_numbers = #tpu.dot_dimension_numbers<[1], [0], [0], [1], [0, 0, 1, 1], [], []>} : vector<2x128xf32>, vector<128x5xf32>, vector<2x5xf32> -> vector<2x5xf32>
    %c0_117 = arith.constant 0 : index
    %c0_118 = arith.constant 0 : index
    %146 = vector.load %arg8[%c0_117, %c0_118] : memref<1x5xf32, #tpu.memory_space<vmem>>, vector<1x5xf32>
    %147 = vector.broadcast %146 : vector<1x5xf32> to vector<2x5xf32>
    %148 = arith.addf %145, %147 : vector<2x5xf32>
    %c0_119 = arith.constant 0 : index
    %c0_120 = arith.constant 0 : index
    %149 = vector.load %arg9[%c0_119, %c0_120] : memref<2x5xf32, #tpu.memory_space<vmem>>, vector<2x5xf32>
    tpu.vector_store %arg9[%c0_119, %c0_120], %148 {strides = array<i32>} : memref<2x5xf32, #tpu.memory_space<vmem>>, vector<2x5xf32>,
    return
  }
}

</mosaic_0001>

<llo_original>
// kernel: cnn_forward.1
$region0: #{cnn_forward.1}
  #allocation0 [shape = 'u32[]', space=smem, size = 0x4, offset = 0x4, fixed_abs, tag = 'smem constant byte address 0x4 - core index']
  #allocation1 [shape = 'u32[144,128]{1,0:T(1,128)}', space=vmem, size = 0x12000, scoped, tag = 'internal scratch']
  #allocation2 [shape = 'f32[368,16]{1,0:T(8,128)}', space=vmem, size = 0x2e000, scoped, tag = 'scratch operand']
  #allocation3 [shape = 'f32[184,32]{1,0:T(8,128)}', space=vmem, size = 0x17000, scoped, tag = 'scratch operand']
  %s0 = inlined_call_operand.vmem [shape: f32[2,180,16], index: 0, kind: input, shape index: {}]
  %s1 = inlined_call_operand.vmem [shape: f32[3,16,32], index: 1, kind: input, shape index: {}]
  %s2 = inlined_call_operand.vmem [shape: f32[1,32], index: 2, kind: input, shape index: {}]
  %s3 = inlined_call_operand.vmem [shape: f32[3,32,5], index: 3, kind: input, shape index: {}]
  %s4 = inlined_call_operand.vmem [shape: f32[1,5], index: 4, kind: input, shape index: {}]
  %s5 = inlined_call_operand.vmem [shape: f32[5,91,128], index: 5, kind: input, shape index: {}]
  %s6 = inlined_call_operand.vmem [shape: f32[1,128], index: 6, kind: input, shape index: {}]
  %s7 = inlined_call_operand.vmem [shape: f32[128,5], index: 7, kind: input, shape index: {}]
  %s8 = inlined_call_operand.vmem [shape: f32[1,5], index: 8, kind: input, shape index: {}]
  %s9 = inlined_call_operand.hbm [shape: f32[2,5], index: 9, kind: output, shape index: {}]
  %s10 = sld [smem:[#allocation0]]
  $region46: #{cnn_forward.1} parent=0
    _
  %s12 = ssub.s32 1, %s10
  %s13 = scalar_select 0, %s12, %s10
  $region1: #{cnn_forward.1} parent=0
    #allocation4 [shape = 'u8[1024]{0}', space=vmem, size = 0x400, scoped, tag = 'output window, operand 0, single buffered']
    #allocation5 [shape = 's32[1]{0}', space=sflag, size = 0x4, scoped, tag = 'scoped memory for cnn_forward.1']
    %14 = vsyncpa [#allocation5], 0
    // Predicated region
    $region2: #{cnn_forward.1} parent=1 // pred_check
      _
    $region3: #{cnn_forward.1} parent=1 // pred_check_branch
      %16 = sbr.rel (0) target = $region5
    $region4: #{cnn_forward.1} parent=1 // pred_region
      _
    $region5: #{cnn_forward.1} parent=1 // pred_fallthru
      _
    // Predicated region
    $region6: #{cnn_forward.1} parent=1 // pred_check
      _
    $region7: #{cnn_forward.1} parent=1 // pred_check_branch
      %18 = sbr.rel (0) target = $region9
    $region8: #{cnn_forward.1} parent=1 // pred_region
      _
    $region9: #{cnn_forward.1} parent=1 // pred_fallthru
      _
    // Predicated region
    $region10: #{cnn_forward.1} parent=1 // pred_check
      _
    $region11: #{cnn_forward.1} parent=1 // pred_check_branch
      %20 = sbr.rel (0) target = $region13
    $region12: #{cnn_forward.1} parent=1 // pred_region
      _
    $region13: #{cnn_forward.1} parent=1 // pred_fallthru
      _
    // Predicated region
    $region14: #{cnn_forward.1} parent=1 // pred_check
      _
    $region15: #{cnn_forward.1} parent=1 // pred_check_branch
      %22 = sbr.rel (0) target = $region17
    $region16: #{cnn_forward.1} parent=1 // pred_region
      _
    $region17: #{cnn_forward.1} parent=1 // pred_fallthru
      _
    // Predicated region
    $region18: #{cnn_forward.1} parent=1 // pred_check
      _
    $region19: #{cnn_forward.1} parent=1 // pred_check_branch
      %24 = sbr.rel (0) target = $region21
    $region20: #{cnn_forward.1} parent=1 // pred_region
      _
    $region21: #{cnn_forward.1} parent=1 // pred_fallthru
      _
    // Predicated region
    $region22: #{cnn_forward.1} parent=1 // pred_check
      _
    $region23: #{cnn_forward.1} parent=1 // pred_check_branch
      %26 = sbr.rel (0) target = $region25
    $region24: #{cnn_forward.1} parent=1 // pred_region
      _
    $region25: #{cnn_forward.1} parent=1 // pred_fallthru
      _
    // Predicated region
    $region26: #{cnn_forward.1} parent=1 // pred_check
      _
    $region27: #{cnn_forward.1} parent=1 // pred_check_branch
      %28 = sbr.rel (0) target = $region29
    $region28: #{cnn_forward.1} parent=1 // pred_region
      _
    $region29: #{cnn_forward.1} parent=1 // pred_fallthru
      _
    // Predicated region
    $region30: #{cnn_forward.1} parent=1 // pred_check
      _
    $region31: #{cnn_forward.1} parent=1 // pred_check_branch
      %30 = sbr.rel (0) target = $region33
    $region32: #{cnn_forward.1} parent=1 // pred_region
      _
    $region33: #{cnn_forward.1} parent=1 // pred_fallthru
      _
    // Predicated region
    $region34: #{cnn_forward.1} parent=1 // pred_check
      _
    $region35: #{cnn_forward.1} parent=1 // pred_check_branch
      %32 = sbr.rel (0) target = $region37
    $region36: #{cnn_forward.1} parent=1 // pred_region
      _
    $region37: #{cnn_forward.1} parent=1 // pred_fallthru
      _
    %vm33 = vcmask 130048
    %34 = vst.msk [vmem:[#allocation2] sm:$0xff] %vm33, 0.0
    %35 = vst.msk [vmem:[#allocation2 + $0x8] sm:$0xff] %vm33, 0.0
    %36 = vst.msk [vmem:[#allocation2 + $0x10] sm:$0xff] %vm33, 0.0
    %37 = vst.msk [vmem:[#allocation2 + $0x18] sm:$0xff] %vm33, 0.0
    %38 = vst.msk [vmem:[#allocation2 + $0x20] sm:$0xff] %vm33, 0.0
    %39 = vst.msk [vmem:[#allocation2 + $0x28] sm:$0xff] %vm33, 0.0
    %40 = vst.msk [vmem:[#allocation2 + $0x30] sm:$0xff] %vm33, 0.0
    %41 = vst.msk [vmem:[#allocation2 + $0x38] sm:$0xff] %vm33, 0.0
    %42 = vst.msk [vmem:[#allocation2 + $0x40] sm:$0xff] %vm33, 0.0
    %43 = vst.msk [vmem:[#allocation2 + $0x48] sm:$0xff] %vm33, 0.0
    %44 = vst.msk [vmem:[#allocation2 + $0x50] sm:$0xff] %vm33, 0.0
    %45 = vst.msk [vmem:[#allocation2 + $0x58] sm:$0xff] %vm33, 0.0
    %46 = vst.msk [vmem:[#allocation2 + $0x60] sm:$0xff] %vm33, 0.0
    %47 = vst.msk [vmem:[#allocation2 + $0x68] sm:$0xff] %vm33, 0.0
    %48 = vst.msk [vmem:[#allocation2 + $0x70] sm:$0xff] %vm33, 0.0
    %49 = vst.msk [vmem:[#allocation2 + $0x78] sm:$0xff] %vm33, 0.0
    %50 = vst.msk [vmem:[#allocation2 + $0x80] sm:$0xff] %vm33, 0.0
    %51 = vst.msk [vmem:[#allocation2 + $0x88] sm:$0xff] %vm33, 0.0
    %52 = vst.msk [vmem:[#allocation2 + $0x90] sm:$0xff] %vm33, 0.0
    %53 = vst.msk [vmem:[#allocation2 + $0x98] sm:$0xff] %vm33, 0.0
    %54 = vst.msk [vmem:[#allocation2 + $0xa0] sm:$0xff] %vm33, 0.0
    %55 = vst.msk [vmem:[#allocation2 + $0xa8] sm:$0xff] %vm33, 0.0
    %56 = vst.msk [vmem:[#allocation2 + $0xb0] sm:$0xff] %vm33, 0.0
    %57 = vst.msk [vmem:[#allocation2 + $0xb8] sm:$0xff] %vm33, 0.0
    %58 = vst.msk [vmem:[#allocation2 + $0xc0] sm:$0xff] %vm33, 0.0
    %59 = vst.msk [vmem:[#allocation2 + $0xc8] sm:$0xff] %vm33, 0.0
    %60 = vst.msk [vmem:[#allocation2 + $0xd0] sm:$0xff] %vm33, 0.0
    %61 = vst.msk [vmem:[#allocation2 + $0xd8] sm:$0xff] %vm33, 0.0
    %62 = vst.msk [vmem:[#allocation2 + $0xe0] sm:$0xff] %vm33, 0.0
    %63 = vst.msk [vmem:[#allocation2 + $0xe8] sm:$0xff] %vm33, 0.0
    %64 = vst.msk [vmem:[#allocation2 + $0xf0] sm:$0xff] %vm33, 0.0
    %65 = vst.msk [vmem:[#allocation2 + $0xf8] sm:$0xff] %vm33, 0.0
    %66 = vst.msk [vmem:[#allocation2 + $0x100] sm:$0xff] %vm33, 0.0
    %67 = vst.msk [vmem:[#allocation2 + $0x108] sm:$0xff] %vm33, 0.0
    %68 = vst.msk [vmem:[#allocation2 + $0x110] sm:$0xff] %vm33, 0.0
    %69 = vst.msk [vmem:[#allocation2 + $0x118] sm:$0xff] %vm33, 0.0
    %70 = vst.msk [vmem:[#allocation2 + $0x120] sm:$0xff] %vm33, 0.0
    %71 = vst.msk [vmem:[#allocation2 + $0x128] sm:$0xff] %vm33, 0.0
    %72 = vst.msk [vmem:[#allocation2 + $0x130] sm:$0xff] %vm33, 0.0
    %73 = vst.msk [vmem:[#allocation2 + $0x138] sm:$0xff] %vm33, 0.0
    %74 = vst.msk [vmem:[#allocation2 + $0x140] sm:$0xff] %vm33, 0.0
    %75 = vst.msk [vmem:[#allocation2 + $0x148] sm:$0xff] %vm33, 0.0
    %76 = vst.msk [vmem:[#allocation2 + $0x150] sm:$0xff] %vm33, 0.0
    %77 = vst.msk [vmem:[#allocation2 + $0x158] sm:$0xff] %vm33, 0.0
    %78 = vst.msk [vmem:[#allocation2 + $0x160] sm:$0xff] %vm33, 0.0
    %79 = vst.msk [vmem:[#allocation2 + $0x168] sm:$0xff] %vm33, 0.0
    %vm80 = vcmask 261120
    %81 = vst.msk [vmem:[#allocation3] sm:$0xff] %vm80, 0.0
    %82 = vst.msk [vmem:[#allocation3 + $0x8] sm:$0xff] %vm80, 0.0
    %83 = vst.msk [vmem:[#allocation3 + $0x10] sm:$0xff] %vm80, 0.0
    %84 = vst.msk [vmem:[#allocation3 + $0x18] sm:$0xff] %vm80, 0.0
    %85 = vst.msk [vmem:[#allocation3 + $0x20] sm:$0xff] %vm80, 0.0
    %86 = vst.msk [vmem:[#allocation3 + $0x28] sm:$0xff] %vm80, 0.0
    %87 = vst.msk [vmem:[#allocation3 + $0x30] sm:$0xff] %vm80, 0.0
    %88 = vst.msk [vmem:[#allocation3 + $0x38] sm:$0xff] %vm80, 0.0
    %89 = vst.msk [vmem:[#allocation3 + $0x40] sm:$0xff] %vm80, 0.0
    %90 = vst.msk [vmem:[#allocation3 + $0x48] sm:$0xff] %vm80, 0.0
    %91 = vst.msk [vmem:[#allocation3 + $0x50] sm:$0xff] %vm80, 0.0
    %92 = vst.msk [vmem:[#allocation3 + $0x58] sm:$0xff] %vm80, 0.0
    %93 = vst.msk [vmem:[#allocation3 + $0x60] sm:$0xff] %vm80, 0.0
    %94 = vst.msk [vmem:[#allocation3 + $0x68] sm:$0xff] %vm80, 0.0
    %95 = vst.msk [vmem:[#allocation3 + $0x70] sm:$0xff] %vm80, 0.0
    %96 = vst.msk [vmem:[#allocation3 + $0x78] sm:$0xff] %vm80, 0.0
    %97 = vst.msk [vmem:[#allocation3 + $0x80] sm:$0xff] %vm80, 0.0
    %98 = vst.msk [vmem:[#allocation3 + $0x88] sm:$0xff] %vm80, 0.0
    %99 = vst.msk [vmem:[#allocation3 + $0x90] sm:$0xff] %vm80, 0.0
    %100 = vst.msk [vmem:[#allocation3 + $0x98] sm:$0xff] %vm80, 0.0
    %101 = vst.msk [vmem:[#allocation3 + $0xa0] sm:$0xff] %vm80, 0.0
    %102 = vst.msk [vmem:[#allocation3 + $0xa8] sm:$0xff] %vm80, 0.0
    %103 = vst.msk [vmem:[#allocation3 + $0xb0] sm:$0xff] %vm80, 0.0
    %v104 = vld [vmem:[%s0] sm:$0xff]
    %v105 = vld [vmem:[%s0 + $0x8] sm:$0xff]
    %v106 = vld [vmem:[%s0 + $0x10] sm:$0xff]
    %v107 = vld [vmem:[%s0 + $0x18] sm:$0xff]
    %v108 = vld [vmem:[%s0 + $0x20] sm:$0xff]
    %v109 = vld [vmem:[%s0 + $0x28] sm:$0xff]
    %v110 = vld [vmem:[%s0 + $0x30] sm:$0xff]
    %v111 = vld [vmem:[%s0 + $0x38] sm:$0xff]
    %v112 = vld [vmem:[%s0 + $0x40] sm:$0xff]
    %v113 = vld [vmem:[%s0 + $0x48] sm:$0xff]
    %v114 = vld [vmem:[%s0 + $0x50] sm:$0xff]
    %v115 = vld [vmem:[%s0 + $0x58] sm:$0xff]
    %v116 = vld [vmem:[%s0 + $0x60] sm:$0xff]
    %v117 = vld [vmem:[%s0 + $0x68] sm:$0xff]
    %v118 = vld [vmem:[%s0 + $0x70] sm:$0xff]
    %v119 = vld [vmem:[%s0 + $0x78] sm:$0xff]
    %v120 = vld [vmem:[%s0 + $0x80] sm:$0xff]
    %v121 = vld [vmem:[%s0 + $0x88] sm:$0xff]
    %v122 = vld [vmem:[%s0 + $0x90] sm:$0xff]
    %v123 = vld [vmem:[%s0 + $0x98] sm:$0xff]
    %v124 = vld [vmem:[%s0 + $0xa0] sm:$0xff]
    %v125 = vld [vmem:[%s0 + $0xa8] sm:$0xff]
    %v126 = vld [vmem:[%s0 + $0xb0] sm:$0xf]
    %127 = vst.msk [vmem:[#allocation2 + $0x1] sm:$0xff] %vm33, %v104
    %128 = vst.msk [vmem:[#allocation2 + $0x9] sm:$0xff] %vm33, %v105
    %129 = vst.msk [vmem:[#allocation2 + $0x11] sm:$0xff] %vm33, %v106
    %130 = vst.msk [vmem:[#allocation2 + $0x19] sm:$0xff] %vm33, %v107
    %131 = vst.msk [vmem:[#allocation2 + $0x21] sm:$0xff] %vm33, %v108
    %132 = vst.msk [vmem:[#allocation2 + $0x29] sm:$0xff] %vm33, %v109
    %133 = vst.msk [vmem:[#allocation2 + $0x31] sm:$0xff] %vm33, %v110
    %134 = vst.msk [vmem:[#allocation2 + $0x39] sm:$0xff] %vm33, %v111
    %135 = vst.msk [vmem:[#allocation2 + $0x41] sm:$0xff] %vm33, %v112
    %136 = vst.msk [vmem:[#allocation2 + $0x49] sm:$0xff] %vm33, %v113
    %137 = vst.msk [vmem:[#allocation2 + $0x51] sm:$0xff] %vm33, %v114
    %138 = vst.msk [vmem:[#allocation2 + $0x59] sm:$0xff] %vm33, %v115
    %139 = vst.msk [vmem:[#allocation2 + $0x61] sm:$0xff] %vm33, %v116
    %140 = vst.msk [vmem:[#allocation2 + $0x69] sm:$0xff] %vm33, %v117
    %141 = vst.msk [vmem:[#allocation2 + $0x71] sm:$0xff] %vm33, %v118
    %142 = vst.msk [vmem:[#allocation2 + $0x79] sm:$0xff] %vm33, %v119
    %143 = vst.msk [vmem:[#allocation2 + $0x81] sm:$0xff] %vm33, %v120
    %144 = vst.msk [vmem:[#allocation2 + $0x89] sm:$0xff] %vm33, %v121
    %145 = vst.msk [vmem:[#allocation2 + $0x91] sm:$0xff] %vm33, %v122
    %146 = vst.msk [vmem:[#allocation2 + $0x99] sm:$0xff] %vm33, %v123
    %147 = vst.msk [vmem:[#allocation2 + $0xa1] sm:$0xff] %vm33, %v124
    %148 = vst.msk [vmem:[#allocation2 + $0xa9] sm:$0xff] %vm33, %v125
    %vm149 = vcmask 125952
    %150 = vst.msk [vmem:[#allocation2 + $0xb1] sm:$0xf] %vm149, %v126
    %s151 = scalar_lea.vmem %s0, 184
    %v152 = vld [vmem:[%s151] sm:$0xff]
    %v153 = vld [vmem:[%s151 + $0x8] sm:$0xff]
    %v154 = vld [vmem:[%s151 + $0x10] sm:$0xff]
    %v155 = vld [vmem:[%s151 + $0x18] sm:$0xff]
    %v156 = vld [vmem:[%s151 + $0x20] sm:$0xff]
    %v157 = vld [vmem:[%s151 + $0x28] sm:$0xff]
    %v158 = vld [vmem:[%s151 + $0x30] sm:$0xff]
    %v159 = vld [vmem:[%s151 + $0x38] sm:$0xff]
    %v160 = vld [vmem:[%s151 + $0x40] sm:$0xff]
    %v161 = vld [vmem:[%s151 + $0x48] sm:$0xff]
    %v162 = vld [vmem:[%s151 + $0x50] sm:$0xff]
    %v163 = vld [vmem:[%s151 + $0x58] sm:$0xff]
    %v164 = vld [vmem:[%s151 + $0x60] sm:$0xff]
    %v165 = vld [vmem:[%s151 + $0x68] sm:$0xff]
    %v166 = vld [vmem:[%s151 + $0x70] sm:$0xff]
    %v167 = vld [vmem:[%s151 + $0x78] sm:$0xff]
    %v168 = vld [vmem:[%s151 + $0x80] sm:$0xff]
    %v169 = vld [vmem:[%s151 + $0x88] sm:$0xff]
    %v170 = vld [vmem:[%s151 + $0x90] sm:$0xff]
    %v171 = vld [vmem:[%s151 + $0x98] sm:$0xff]
    %v172 = vld [vmem:[%s151 + $0xa0] sm:$0xff]
    %v173 = vld [vmem:[%s151 + $0xa8] sm:$0xff]
    %v174 = vld [vmem:[%s151 + $0xb0] sm:$0xf]
    %175 = vst.msk [vmem:[#allocation2 + $0xb9] sm:$0xff] %vm33, %v152
    %176 = vst.msk [vmem:[#allocation2 + $0xc1] sm:$0xff] %vm33, %v153
    %177 = vst.msk [vmem:[#allocation2 + $0xc9] sm:$0xff] %vm33, %v154
    %178 = vst.msk [vmem:[#allocation2 + $0xd1] sm:$0xff] %vm33, %v155
    %179 = vst.msk [vmem:[#allocation2 + $0xd9] sm:$0xff] %vm33, %v156
    %180 = vst.msk [vmem:[#allocation2 + $0xe1] sm:$0xff] %vm33, %v157
    %181 = vst.msk [vmem:[#allocation2 + $0xe9] sm:$0xff] %vm33, %v158
    %182 = vst.msk [vmem:[#allocation2 + $0xf1] sm:$0xff] %vm33, %v159
    %183 = vst.msk [vmem:[#allocation2 + $0xf9] sm:$0xff] %vm33, %v160
    %184 = vst.msk [vmem:[#allocation2 + $0x101] sm:$0xff] %vm33, %v161
    %185 = vst.msk [vmem:[#allocation2 + $0x109] sm:$0xff] %vm33, %v162
    %186 = vst.msk [vmem:[#allocation2 + $0x111] sm:$0xff] %vm33, %v163
    %187 = vst.msk [vmem:[#allocation2 + $0x119] sm:$0xff] %vm33, %v164
    %188 = vst.msk [vmem:[#allocation2 + $0x121] sm:$0xff] %vm33, %v165
    %189 = vst.msk [vmem:[#allocation2 + $0x129] sm:$0xff] %vm33, %v166
    %190 = vst.msk [vmem:[#allocation2 + $0x131] sm:$0xff] %vm33, %v167
    %191 = vst.msk [vmem:[#allocation2 + $0x139] sm:$0xff] %vm33, %v168
    %192 = vst.msk [vmem:[#allocation2 + $0x141] sm:$0xff] %vm33, %v169
    %193 = vst.msk [vmem:[#allocation2 + $0x149] sm:$0xff] %vm33, %v170
    %194 = vst.msk [vmem:[#allocation2 + $0x151] sm:$0xff] %vm33, %v171
    %195 = vst.msk [vmem:[#allocation2 + $0x159] sm:$0xff] %vm33, %v172
    %196 = vst.msk [vmem:[#allocation2 + $0x161] sm:$0xff] %vm33, %v173
    %197 = vst.msk [vmem:[#allocation2 + $0x169] sm:$0xf] %vm149, %v174
    %v198 = vld [vmem:[#allocation2] ss:$2 sm:$0xff]
    %s199 = scalar_lea.vmem [#allocation2], 16
    %v200 = vld [vmem:[%s199] ss:$2 sm:$0xff]
    %s201 = scalar_lea.vmem [#allocation2], 32
    %v202 = vld [vmem:[%s201] ss:$2 sm:$0xff]
    %s203 = scalar_lea.vmem [#allocation2], 48
    %v204 = vld [vmem:[%s203] ss:$2 sm:$0xff]
    %s205 = scalar_lea.vmem [#allocation2], 64
    %v206 = vld [vmem:[%s205] ss:$2 sm:$0xff]
    %s207 = scalar_lea.vmem [#allocation2], 80
    %v208 = vld [vmem:[%s207] ss:$2 sm:$0xff]
    %s209 = scalar_lea.vmem [#allocation2], 96
    %v210 = vld [vmem:[%s209] ss:$2 sm:$0xff]
    %s211 = scalar_lea.vmem [#allocation2], 112
    %v212 = vld [vmem:[%s211] ss:$2 sm:$0xff]
    %s213 = scalar_lea.vmem [#allocation2], 128
    %v214 = vld [vmem:[%s213] ss:$2 sm:$0xff]
    %s215 = scalar_lea.vmem [#allocation2], 144
    %v216 = vld [vmem:[%s215] ss:$2 sm:$0xff]
    %s217 = scalar_lea.vmem [#allocation2], 160
    %v218 = vld [vmem:[%s217] ss:$2 sm:$0xff]
    %s219 = scalar_lea.vmem [#allocation2], 176
    %v220 = vld [vmem:[%s219] ss:$2 sm:$0xff]
    %s221 = scalar_lea.vmem [#allocation2], 192
    %v222 = vld [vmem:[%s221] ss:$2 sm:$0xff]
    %s223 = scalar_lea.vmem [#allocation2], 208
    %v224 = vld [vmem:[%s223] ss:$2 sm:$0xff]
    %s225 = scalar_lea.vmem [#allocation2], 224
    %v226 = vld [vmem:[%s225] ss:$2 sm:$0xff]
    %s227 = scalar_lea.vmem [#allocation2], 240
    %v228 = vld [vmem:[%s227] ss:$2 sm:$0xff]
    %s229 = scalar_lea.vmem [#allocation2], 256
    %v230 = vld [vmem:[%s229] ss:$2 sm:$0xff]
    %s231 = scalar_lea.vmem [#allocation2], 272
    %v232 = vld [vmem:[%s231] ss:$2 sm:$0xff]
    %s233 = scalar_lea.vmem [#allocation2], 288
    %v234 = vld [vmem:[%s233] ss:$2 sm:$0xff]
    %s235 = scalar_lea.vmem [#allocation2], 304
    %v236 = vld [vmem:[%s235] ss:$2 sm:$0xff]
    %s237 = scalar_lea.vmem [#allocation2], 320
    %v238 = vld [vmem:[%s237] ss:$2 sm:$0xff]
    %s239 = scalar_lea.vmem [#allocation2], 336
    %v240 = vld [vmem:[%s239] ss:$2 sm:$0xff]
    %s241 = scalar_lea.vmem [#allocation2], 352
    %v242 = vld [vmem:[%s241] ss:$2 sm:$0x3f]
    %v243 = vld [vmem:[%s1] sm:$0xff]
    %v244 = vld [vmem:[%s1 + $0x8] sm:$0xff]
    %s245 = scalar_lea.vmem [#allocation2], 1
    %v246 = vld [vmem:[%s245] ss:$2 sm:$0xff]
    %s247 = scalar_lea.vmem [#allocation2], 17
    %v248 = vld [vmem:[%s247] ss:$2 sm:$0xff]
    %s249 = scalar_lea.vmem [#allocation2], 33
    %v250 = vld [vmem:[%s249] ss:$2 sm:$0xff]
    %s251 = scalar_lea.vmem [#allocation2], 49
    %v252 = vld [vmem:[%s251] ss:$2 sm:$0xff]
    %s253 = scalar_lea.vmem [#allocation2], 65
    %v254 = vld [vmem:[%s253] ss:$2 sm:$0xff]
    %s255 = scalar_lea.vmem [#allocation2], 81
    %v256 = vld [vmem:[%s255] ss:$2 sm:$0xff]
    %s257 = scalar_lea.vmem [#allocation2], 97
    %v258 = vld [vmem:[%s257] ss:$2 sm:$0xff]
    %s259 = scalar_lea.vmem [#allocation2], 113
    %v260 = vld [vmem:[%s259] ss:$2 sm:$0xff]
    %s261 = scalar_lea.vmem [#allocation2], 129
    %v262 = vld [vmem:[%s261] ss:$2 sm:$0xff]
    %s263 = scalar_lea.vmem [#allocation2], 145
    %v264 = vld [vmem:[%s263] ss:$2 sm:$0xff]
    %s265 = scalar_lea.vmem [#allocation2], 161
    %v266 = vld [vmem:[%s265] ss:$2 sm:$0xff]
    %s267 = scalar_lea.vmem [#allocation2], 177
    %v268 = vld [vmem:[%s267] ss:$2 sm:$0xff]
    %s269 = scalar_lea.vmem [#allocation2], 193
    %v270 = vld [vmem:[%s269] ss:$2 sm:$0xff]
    %s271 = scalar_lea.vmem [#allocation2], 209
    %v272 = vld [vmem:[%s271] ss:$2 sm:$0xff]
    %s273 = scalar_lea.vmem [#allocation2], 225
    %v274 = vld [vmem:[%s273] ss:$2 sm:$0xff]
    %s275 = scalar_lea.vmem [#allocation2], 241
    %v276 = vld [vmem:[%s275] ss:$2 sm:$0xff]
    %s277 = scalar_lea.vmem [#allocation2], 257
    %v278 = vld [vmem:[%s277] ss:$2 sm:$0xff]
    %s279 = scalar_lea.vmem [#allocation2], 273
    %v280 = vld [vmem:[%s279] ss:$2 sm:$0xff]
    %s281 = scalar_lea.vmem [#allocation2], 289
    %v282 = vld [vmem:[%s281] ss:$2 sm:$0xff]
    %s283 = scalar_lea.vmem [#allocation2], 305
    %v284 = vld [vmem:[%s283] ss:$2 sm:$0xff]
    %s285 = scalar_lea.vmem [#allocation2], 321
    %v286 = vld [vmem:[%s285] ss:$2 sm:$0xff]
    %s287 = scalar_lea.vmem [#allocation2], 337
    %v288 = vld [vmem:[%s287] ss:$2 sm:$0xff]
    %s289 = scalar_lea.vmem [#allocation2], 353
    %v290 = vld [vmem:[%s289] ss:$2 sm:$0x3f]
    %s291 = scalar_lea.vmem %s1, 16
    %v292 = vld [vmem:[%s291] sm:$0xff]
    %v293 = vld [vmem:[%s291 + $0x8] sm:$0xff]
    %v295 = vsel %vm33, %v246, 0
    %v298 = vsel %vm33, %v248, 0
    %v301 = vsel %vm33, %v250, 0
    %v304 = vsel %vm33, %v252, 0
    %v307 = vsel %vm33, %v254, 0
    %v310 = vsel %vm33, %v256, 0
    %v313 = vsel %vm33, %v258, 0
    %v316 = vsel %vm33, %v260, 0
    %v319 = vsel %vm33, %v262, 0
    %v322 = vsel %vm33, %v264, 0
    %v325 = vsel %vm33, %v266, 0
    %v328 = vsel %vm33, %v268, 0
    %v331 = vsel %vm33, %v270, 0
    %v334 = vsel %vm33, %v272, 0
    %v337 = vsel %vm33, %v274, 0
    %v340 = vsel %vm33, %v276, 0
    %v343 = vsel %vm33, %v278, 0
    %v346 = vsel %vm33, %v280, 0
    %v349 = vsel %vm33, %v282, 0
    %v352 = vsel %vm33, %v284, 0
    %v355 = vsel %vm33, %v286, 0
    %v358 = vsel %vm33, %v288, 0
    %v361 = vsel %vm33, %v290, 0
    %363 = vmatprep.subr.mxu0 0.0
    %364 = vmatpush1.msra.mxu0 %v292
    %365 = vmatprep.subr.mxu0 0.0
    %366 = vmatpush1.msra.mxu0 %v293
    %367 = vmatprep.subr.mxu0 0.0
    %368 = vmatpush1.msra.mxu0 0.0
    %369 = vmatprep.subr.mxu0 0.0
    %370 = vmatpush1.msra.mxu0 0.0
    %371 = vmatprep.subr.mxu0 0.0
    %372 = vmatpush1.msra.mxu0 0.0
    %373 = vmatprep.subr.mxu0 0.0
    %374 = vmatpush1.msra.mxu0 0.0
    %375 = vmatprep.subr.mxu0 0.0
    %376 = vmatpush1.msra.mxu0 0.0
    %377 = vmatprep.subr.mxu0 0.0
    %378 = vmatpush1.msra.mxu0 0.0
    %379 = vmatprep.subr.mxu0 0.0
    %380 = vmatpush1.msra.mxu0 0.0
    %381 = vmatprep.subr.mxu0 0.0
    %382 = vmatpush1.msra.mxu0 0.0
    %383 = vmatprep.subr.mxu0 0.0
    %384 = vmatpush1.msra.mxu0 0.0
    %385 = vmatprep.subr.mxu0 0.0
    %386 = vmatpush1.msra.mxu0 0.0
    %387 = vmatprep.subr.mxu0 0.0
    %388 = vmatpush1.msra.mxu0 0.0
    %389 = vmatprep.subr.mxu0 0.0
    %390 = vmatpush1.msra.mxu0 0.0
    %391 = vmatprep.subr.mxu0 0.0
    %392 = vmatpush1.msra.mxu0 0.0
    %393 = vmatprep.subr.mxu0 0.0
    %394 = vmatpush1.msra.mxu0 0.0
    %395 = vmatprep.subr.mxu0 0.0
    %396 = vmatpush1.msra.mxu0 0.0
    %397 = vmatprep.subr.mxu0 0.0
    %398 = vmatpush1.msra.mxu0 0.0
    %399 = vmatprep.subr.mxu0 0.0
    %400 = vmatpush1.msra.mxu0 0.0
    %401 = vmatprep.subr.mxu0 0.0
    %402 = vmatpush1.msra.mxu0 0.0
    %403 = vmatprep.subr.mxu0 0.0
    %404 = vmatpush1.msra.mxu0 0.0
    %405 = vmatprep.subr.mxu0 0.0
    %406 = vmatpush1.msra.mxu0 0.0
    %407 = vmatprep.subr.mxu0 0.0
    %408 = vmatpush1.msra.mxu0 0.0
    %409 = vmatprep.subr.mxu0 0.0
    %410 = vmatpush1.msra.mxu0 0.0
    %411 = vmatprep.subr.mxu0 0.0
    %412 = vmatpush1.msra.mxu0 0.0
    %413 = vmatprep.subr.mxu0 0.0
    %414 = vmatpush1.msra.mxu0 0.0
    %415 = vmatprep.subr.mxu0 0.0
    %416 = vmatpush1.msra.mxu0 0.0
    %417 = vmatprep.subr.mxu0 0.0
    %418 = vmatpush1.msra.mxu0 0.0
    %419 = vmatprep.subr.mxu0 0.0
    %420 = vmatpush1.msra.mxu0 0.0
    %421 = vmatprep.subr.mxu0 0.0
    %422 = vmatpush1.msra.mxu0 0.0
    %423 = vmatprep.subr.mxu0 0.0
    %424 = vmatpush1.msra.mxu0 0.0
    %425 = vmatprep.subr.mxu0 0.0
    %426 = vmatpush1.msra.mxu0 0.0
    %427 = vmatprep.mubr.f32.mxu0 0.0
    %428 = vmatmul.mubr.f32.gmra.mrb[0].mxu0 %v295
    %v429 = vpop.f32.mrb[0].mxu0
    %v430 = vadd.f32 0.0, %v429
    %v431 = vpop.f32.mrb[0].mxu0
    %432 = vmatprep.mubr.f32.mxu0 0.0
    %433 = vmatmul.mubr.f32.gmra.mrb[0].mxu0 %v298
    %v434 = vpop.f32.mrb[0].mxu0
    %v435 = vadd.f32 0.0, %v434
    %v436 = vpop.f32.mrb[0].mxu0
    %437 = vmatprep.mubr.f32.mxu0 0.0
    %438 = vmatmul.mubr.f32.gmra.mrb[0].mxu0 %v301
    %v439 = vpop.f32.mrb[0].mxu0
    %v440 = vadd.f32 0.0, %v439
    %v441 = vpop.f32.mrb[0].mxu0
    %442 = vmatprep.mubr.f32.mxu0 0.0
    %443 = vmatmul.mubr.f32.gmra.mrb[0].mxu0 %v304
    %v444 = vpop.f32.mrb[0].mxu0
    %v445 = vadd.f32 0.0, %v444
    %v446 = vpop.f32.mrb[0].mxu0
    %447 = vmatprep.mubr.f32.mxu0 0.0
    %448 = vmatmul.mubr.f32.gmra.mrb[0].mxu0 %v307
    %v449 = vpop.f32.mrb[0].mxu0
    %v450 = vadd.f32 0.0, %v449
    %v451 = vpop.f32.mrb[0].mxu0
    %452 = vmatprep.mubr.f32.mxu0 0.0
    %453 = vmatmul.mubr.f32.gmra.mrb[0].mxu0 %v310
    %v454 = vpop.f32.mrb[0].mxu0
    %v455 = vadd.f32 0.0, %v454
    %v456 = vpop.f32.mrb[0].mxu0
    %457 = vmatprep.mubr.f32.mxu0 0.0
    %458 = vmatmul.mubr.f32.gmra.mrb[0].mxu0 %v313
    %v459 = vpop.f32.mrb[0].mxu0
    %v460 = vadd.f32 0.0, %v459
    %v461 = vpop.f32.mrb[0].mxu0
    %462 = vmatprep.mubr.f32.mxu0 0.0
    %463 = vmatmul.mubr.f32.gmra.mrb[0].mxu0 %v316
    %v464 = vpop.f32.mrb[0].mxu0
    %v465 = vadd.f32 0.0, %v464
    %v466 = vpop.f32.mrb[0].mxu0
    %467 = vmatprep.mubr.f32.mxu0 0.0
    %468 = vmatmul.mubr.f32.gmra.mrb[0].mxu0 %v319
    %v469 = vpop.f32.mrb[0].mxu0
    %v470 = vadd.f32 0.0, %v469
    %v471 = vpop.f32.mrb[0].mxu0
    %472 = vmatprep.mubr.f32.mxu0 0.0
    %473 = vmatmul.mubr.f32.gmra.mrb[0].mxu0 %v322
    %v474 = vpop.f32.mrb[0].mxu0
    %v475 = vadd.f32 0.0, %v474
    %v476 = vpop.f32.mrb[0].mxu0
    %477 = vmatprep.mubr.f32.mxu0 0.0
    %478 = vmatmul.mubr.f32.gmra.mrb[0].mxu0 %v325
    %v479 = vpop.f32.mrb[0].mxu0
    %v480 = vadd.f32 0.0, %v479
    %v481 = vpop.f32.mrb[0].mxu0
    %482 = vmatprep.mubr.f32.mxu0 0.0
    %483 = vmatmul.mubr.f32.gmra.mrb[0].mxu0 %v328
    %v484 = vpop.f32.mrb[0].mxu0
    %v485 = vadd.f32 0.0, %v484
    %v486 = vpop.f32.mrb[0].mxu0
    %487 = vmatprep.mubr.f32.mxu0 0.0
    %488 = vmatmul.mubr.f32.gmra.mrb[0].mxu0 %v331
    %v489 = vpop.f32.mrb[0].mxu0
    %v490 = vadd.f32 0.0, %v489
    %v491 = vpop.f32.mrb[0].mxu0
    %492 = vmatprep.mubr.f32.mxu0 0.0
    %493 = vmatmul.mubr.f32.gmra.mrb[0].mxu0 %v334
    %v494 = vpop.f32.mrb[0].mxu0
    %v495 = vadd.f32 0.0, %v494
    %v496 = vpop.f32.mrb[0].mxu0
    %497 = vmatprep.mubr.f32.mxu0 0.0
    %498 = vmatmul.mubr.f32.gmra.mrb[0].mxu0 %v337
    %v499 = vpop.f32.mrb[0].mxu0
    %v500 = vadd.f32 0.0, %v499
    %v501 = vpop.f32.mrb[0].mxu0
    %502 = vmatprep.mubr.f32.mxu0 0.0
    %503 = vmatmul.mubr.f32.gmra.mrb[0].mxu0 %v340
    %v504 = vpop.f32.mrb[0].mxu0
    %v505 = vadd.f32 0.0, %v504
    %v506 = vpop.f32.mrb[0].mxu0
    %507 = vmatprep.mubr.f32.mxu0 0.0
    %508 = vmatmul.mubr.f32.gmra.mrb[0].mxu0 %v343
    %v509 = vpop.f32.mrb[0].mxu0
    %v510 = vadd.f32 0.0, %v509
    %v511 = vpop.f32.mrb[0].mxu0
    %512 = vmatprep.mubr.f32.mxu0 0.0
    %513 = vmatmul.mubr.f32.gmra.mrb[0].mxu0 %v346
    %v514 = vpop.f32.mrb[0].mxu0
    %v515 = vadd.f32 0.0, %v514
    %v516 = vpop.f32.mrb[0].mxu0
    %517 = vmatprep.mubr.f32.mxu0 0.0
    %518 = vmatmul.mubr.f32.gmra.mrb[0].mxu0 %v349
    %v519 = vpop.f32.mrb[0].mxu0
    %v520 = vadd.f32 0.0, %v519
    %v521 = vpop.f32.mrb[0].mxu0
    %522 = vmatprep.mubr.f32.mxu0 0.0
    %523 = vmatmul.mubr.f32.gmra.mrb[0].mxu0 %v352
    %v524 = vpop.f32.mrb[0].mxu0
    %v525 = vadd.f32 0.0, %v524
    %v526 = vpop.f32.mrb[0].mxu0
    %527 = vmatprep.mubr.f32.mxu0 0.0
    %528 = vmatmul.mubr.f32.gmra.mrb[0].mxu0 %v355
    %v529 = vpop.f32.mrb[0].mxu0
    %v530 = vadd.f32 0.0, %v529
    %v531 = vpop.f32.mrb[0].mxu0
    %532 = vmatprep.mubr.f32.mxu0 0.0
    %533 = vmatmul.mubr.f32.gmra.mrb[0].mxu0 %v358
    %v534 = vpop.f32.mrb[0].mxu0
    %v535 = vadd.f32 0.0, %v534
    %v536 = vpop.f32.mrb[0].mxu0
    %537 = vmatprep.mubr.f32.mxu0 0.0
    %538 = vmatmul.mubr.f32.gmra.mrb[0].mxu0 %v361
    %v539 = vpop.f32.mrb[0].mxu0
    %v540 = vadd.f32 0.0, %v539
    %v541 = vpop.f32.mrb[0].mxu0
    %542 = vdwg.mxu0
    %v544 = vsel %vm33, %v198, 0
    %v547 = vsel %vm33, %v200, 0
    %v550 = vsel %vm33, %v202, 0
    %v553 = vsel %vm33, %v204, 0
    %v556 = vsel %vm33, %v206, 0
    %v559 = vsel %vm33, %v208, 0
    %v562 = vsel %vm33, %v210, 0
    %v565 = vsel %vm33, %v212, 0
    %v568 = vsel %vm33, %v214, 0
    %v571 = vsel %vm33, %v216, 0
    %v574 = vsel %vm33, %v218, 0
    %v577 = vsel %vm33, %v220, 0
    %v580 = vsel %vm33, %v222, 0
    %v583 = vsel %vm33, %v224, 0
    %v586 = vsel %vm33, %v226, 0
    %v589 = vsel %vm33, %v228, 0
    %v592 = vsel %vm33, %v230, 0
    %v595 = vsel %vm33, %v232, 0
    %v598 = vsel %vm33, %v234, 0
    %v601 = vsel %vm33, %v236, 0
    %v604 = vsel %vm33, %v238, 0
    %v607 = vsel %vm33, %v240, 0
    %v610 = vsel %vm33, %v242, 0
    %612 = vmatprep.subr.mxu0 0.0
    %613 = vmatpush1.msra.mxu0 %v243
    %614 = vmatprep.subr.mxu0 0.0
    %615 = vmatpush1.msra.mxu0 %v244
    %616 = vmatprep.subr.mxu0 0.0
    %617 = vmatpush1.msra.mxu0 0.0
    %618 = vmatprep.subr.mxu0 0.0
    %619 = vmatpush1.msra.mxu0 0.0
    %620 = vmatprep.subr.mxu0 0.0
    %621 = vmatpush1.msra.mxu0 0.0
    %622 = vmatprep.subr.mxu0 0.0
    %623 = vmatpush1.msra.mxu0 0.0
    %624 = vmatprep.subr.mxu0 0.0
    %625 = vmatpush1.msra.mxu0 0.0
    %626 = vmatprep.subr.mxu0 0.0
    %627 = vmatpush1.msra.mxu0 0.0
    %628 = vmatprep.subr.mxu0 0.0
    %629 = vmatpush1.msra.mxu0 0.0
    %630 = vmatprep.subr.mxu0 0.0
    %631 = vmatpush1.msra.mxu0 0.0
    %632 = vmatprep.subr.mxu0 0.0
    %633 = vmatpush1.msra.mxu0 0.0
    %634 = vmatprep.subr.mxu0 0.0
    %635 = vmatpush1.msra.mxu0 0.0
    %636 = vmatprep.subr.mxu0 0.0
    %637 = vmatpush1.msra.mxu0 0.0
    %638 = vmatprep.subr.mxu0 0.0
    %639 = vmatpush1.msra.mxu0 0.0
    %640 = vmatprep.subr.mxu0 0.0
    %641 = vmatpush1.msra.mxu0 0.0
    %642 = vmatprep.subr.mxu0 0.0
    %643 = vmatpush1.msra.mxu0 0.0
    %644 = vmatprep.subr.mxu0 0.0
    %645 = vmatpush1.msra.mxu0 0.0
    %646 = vmatprep.subr.mxu0 0.0
    %647 = vmatpush1.msra.mxu0 0.0
    %648 = vmatprep.subr.mxu0 0.0
    %649 = vmatpush1.msra.mxu0 0.0
    %650 = vmatprep.subr.mxu0 0.0
    %651 = vmatpush1.msra.mxu0 0.0
    %652 = vmatprep.subr.mxu0 0.0
    %653 = vmatpush1.msra.mxu0 0.0
    %654 = vmatprep.subr.mxu0 0.0
    %655 = vmatpush1.msra.mxu0 0.0
    %656 = vmatprep.subr.mxu0 0.0
    %657 = vmatpush1.msra.mxu0 0.0
    %658 = vmatprep.subr.mxu0 0.0
    %659 = vmatpush1.msra.mxu0 0.0
    %660 = vmatprep.subr.mxu0 0.0
    %661 = vmatpush1.msra.mxu0 0.0
    %662 = vmatprep.subr.mxu0 0.0
    %663 = vmatpush1.msra.mxu0 0.0
    %664 = vmatprep.subr.mxu0 0.0
    %665 = vmatpush1.msra.mxu0 0.0
    %666 = vmatprep.subr.mxu0 0.0
    %667 = vmatpush1.msra.mxu0 0.0
    %668 = vmatprep.subr.mxu0 0.0
    %669 = vmatpush1.msra.mxu0 0.0
    %670 = vmatprep.subr.mxu0 0.0
    %671 = vmatpush1.msra.mxu0 0.0
    %672 = vmatprep.subr.mxu0 0.0
    %673 = vmatpush1.msra.mxu0 0.0
    %674 = vmatprep.subr.mxu0 0.0
    %675 = vmatpush1.msra.mxu0 0.0
    %676 = vmatprep.mubr.f32.mxu0 0.0
    %677 = vmatmul.mubr.f32.gmra.mrb[0].mxu0 %v544
    %v678 = vpop.f32.mrb[0].mxu0
    %v679 = vadd.f32 %v430, %v678
    %v680 = vpop.f32.mrb[0].mxu0
    %681 = vmatprep.mubr.f32.mxu0 0.0
    %682 = vmatmul.mubr.f32.gmra.mrb[0].mxu0 %v547
    %v683 = vpop.f32.mrb[0].mxu0
    %v684 = vadd.f32 %v435, %v683
    %v685 = vpop.f32.mrb[0].mxu0
    %686 = vmatprep.mubr.f32.mxu0 0.0
    %687 = vmatmul.mubr.f32.gmra.mrb[0].mxu0 %v550
    %v688 = vpop.f32.mrb[0].mxu0
    %v689 = vadd.f32 %v440, %v688
    %v690 = vpop.f32.mrb[0].mxu0
    %691 = vmatprep.mubr.f32.mxu0 0.0
    %692 = vmatmul.mubr.f32.gmra.mrb[0].mxu0 %v553
    %v693 = vpop.f32.mrb[0].mxu0
    %v694 = vadd.f32 %v445, %v693
    %v695 = vpop.f32.mrb[0].mxu0
    %696 = vmatprep.mubr.f32.mxu0 0.0
    %697 = vmatmul.mubr.f32.gmra.mrb[0].mxu0 %v556
    %v698 = vpop.f32.mrb[0].mxu0
    %v699 = vadd.f32 %v450, %v698
    %v700 = vpop.f32.mrb[0].mxu0
    %701 = vmatprep.mubr.f32.mxu0 0.0
    %702 = vmatmul.mubr.f32.gmra.mrb[0].mxu0 %v559
    %v703 = vpop.f32.mrb[0].mxu0
    %v704 = vadd.f32 %v455, %v703
    %v705 = vpop.f32.mrb[0].mxu0
    %706 = vmatprep.mubr.f32.mxu0 0.0
    %707 = vmatmul.mubr.f32.gmra.mrb[0].mxu0 %v562
    %v708 = vpop.f32.mrb[0].mxu0
    %v709 = vadd.f32 %v460, %v708
    %v710 = vpop.f32.mrb[0].mxu0
    %711 = vmatprep.mubr.f32.mxu0 0.0
    %712 = vmatmul.mubr.f32.gmra.mrb[0].mxu0 %v565
    %v713 = vpop.f32.mrb[0].mxu0
    %v714 = vadd.f32 %v465, %v713
    %v715 = vpop.f32.mrb[0].mxu0
    %716 = vmatprep.mubr.f32.mxu0 0.0
    %717 = vmatmul.mubr.f32.gmra.mrb[0].mxu0 %v568
    %v718 = vpop.f32.mrb[0].mxu0
    %v719 = vadd.f32 %v470, %v718
    %v720 = vpop.f32.mrb[0].mxu0
    %721 = vmatprep.mubr.f32.mxu0 0.0
    %722 = vmatmul.mubr.f32.gmra.mrb[0].mxu0 %v571
    %v723 = vpop.f32.mrb[0].mxu0
    %v724 = vadd.f32 %v475, %v723
    %v725 = vpop.f32.mrb[0].mxu0
    %726 = vmatprep.mubr.f32.mxu0 0.0
    %727 = vmatmul.mubr.f32.gmra.mrb[0].mxu0 %v574
    %v728 = vpop.f32.mrb[0].mxu0
    %v729 = vadd.f32 %v480, %v728
    %v730 = vpop.f32.mrb[0].mxu0
    %731 = vmatprep.mubr.f32.mxu0 0.0
    %732 = vmatmul.mubr.f32.gmra.mrb[0].mxu0 %v577
    %v733 = vpop.f32.mrb[0].mxu0
    %v734 = vadd.f32 %v485, %v733
    %v735 = vpop.f32.mrb[0].mxu0
    %736 = vmatprep.mubr.f32.mxu0 0.0
    %737 = vmatmul.mubr.f32.gmra.mrb[0].mxu0 %v580
    %v738 = vpop.f32.mrb[0].mxu0
    %v739 = vadd.f32 %v490, %v738
    %v740 = vpop.f32.mrb[0].mxu0
    %741 = vmatprep.mubr.f32.mxu0 0.0
    %742 = vmatmul.mubr.f32.gmra.mrb[0].mxu0 %v583
    %v743 = vpop.f32.mrb[0].mxu0
    %v744 = vadd.f32 %v495, %v743
    %v745 = vpop.f32.mrb[0].mxu0
    %746 = vmatprep.mubr.f32.mxu0 0.0
    %747 = vmatmul.mubr.f32.gmra.mrb[0].mxu0 %v586
    %v748 = vpop.f32.mrb[0].mxu0
    %v749 = vadd.f32 %v500, %v748
    %v750 = vpop.f32.mrb[0].mxu0
    %751 = vmatprep.mubr.f32.mxu0 0.0
    %752 = vmatmul.mubr.f32.gmra.mrb[0].mxu0 %v589
    %v753 = vpop.f32.mrb[0].mxu0
    %v754 = vadd.f32 %v505, %v753
    %v755 = vpop.f32.mrb[0].mxu0
    %756 = vmatprep.mubr.f32.mxu0 0.0
    %757 = vmatmul.mubr.f32.gmra.mrb[0].mxu0 %v592
    %v758 = vpop.f32.mrb[0].mxu0
    %v759 = vadd.f32 %v510, %v758
    %v760 = vpop.f32.mrb[0].mxu0
    %761 = vmatprep.mubr.f32.mxu0 0.0
    %762 = vmatmul.mubr.f32.gmra.mrb[0].mxu0 %v595
    %v763 = vpop.f32.mrb[0].mxu0
    %v764 = vadd.f32 %v515, %v763
    %v765 = vpop.f32.mrb[0].mxu0
    %766 = vmatprep.mubr.f32.mxu0 0.0
    %767 = vmatmul.mubr.f32.gmra.mrb[0].mxu0 %v598
    %v768 = vpop.f32.mrb[0].mxu0
    %v769 = vadd.f32 %v520, %v768
    %v770 = vpop.f32.mrb[0].mxu0
    %771 = vmatprep.mubr.f32.mxu0 0.0
    %772 = vmatmul.mubr.f32.gmra.mrb[0].mxu0 %v601
    %v773 = vpop.f32.mrb[0].mxu0
    %v774 = vadd.f32 %v525, %v773
    %v775 = vpop.f32.mrb[0].mxu0
    %776 = vmatprep.mubr.f32.mxu0 0.0
    %777 = vmatmul.mubr.f32.gmra.mrb[0].mxu0 %v604
    %v778 = vpop.f32.mrb[0].mxu0
    %v779 = vadd.f32 %v530, %v778
    %v780 = vpop.f32.mrb[0].mxu0
    %781 = vmatprep.mubr.f32.mxu0 0.0
    %782 = vmatmul.mubr.f32.gmra.mrb[0].mxu0 %v607
    %v783 = vpop.f32.mrb[0].mxu0
    %v784 = vadd.f32 %v535, %v783
    %v785 = vpop.f32.mrb[0].mxu0
    %786 = vmatprep.mubr.f32.mxu0 0.0
    %787 = vmatmul.mubr.f32.gmra.mrb[0].mxu0 %v610
    %v788 = vpop.f32.mrb[0].mxu0
    %v789 = vadd.f32 %v540, %v788
    %v790 = vpop.f32.mrb[0].mxu0
    %791 = vdwg.mxu0
    %s792 = scalar_lea.vmem [#allocation2], 2
    %v793 = vld [vmem:[%s792] ss:$2 sm:$0xff]
    %s794 = scalar_lea.vmem [#allocation2], 18
    %v795 = vld [vmem:[%s794] ss:$2 sm:$0xff]
    %s796 = scalar_lea.vmem [#allocation2], 34
    %v797 = vld [vmem:[%s796] ss:$2 sm:$0xff]
    %s798 = scalar_lea.vmem [#allocation2], 50
    %v799 = vld [vmem:[%s798] ss:$2 sm:$0xff]
    %s800 = scalar_lea.vmem [#allocation2], 66
    %v801 = vld [vmem:[%s800] ss:$2 sm:$0xff]
    %s802 = scalar_lea.vmem [#allocation2], 82
    %v803 = vld [vmem:[%s802] ss:$2 sm:$0xff]
    %s804 = scalar_lea.vmem [#allocation2], 98
    %v805 = vld [vmem:[%s804] ss:$2 sm:$0xff]
    %s806 = scalar_lea.vmem [#allocation2], 114
    %v807 = vld [vmem:[%s806] ss:$2 sm:$0xff]
    %s808 = scalar_lea.vmem [#allocation2], 130
    %v809 = vld [vmem:[%s808] ss:$2 sm:$0xff]
    %s810 = scalar_lea.vmem [#allocation2], 146
    %v811 = vld [vmem:[%s810] ss:$2 sm:$0xff]
    %s812 = scalar_lea.vmem [#allocation2], 162
    %v813 = vld [vmem:[%s812] ss:$2 sm:$0xff]
    %s814 = scalar_lea.vmem [#allocation2], 178
    %v815 = vld [vmem:[%s814] ss:$2 sm:$0xff]
    %s816 = scalar_lea.vmem [#allocation2], 194
    %v817 = vld [vmem:[%s816] ss:$2 sm:$0xff]
    %s818 = scalar_lea.vmem [#allocation2], 210
    %v819 = vld [vmem:[%s818] ss:$2 sm:$0xff]
    %s820 = scalar_lea.vmem [#allocation2], 226
    %v821 = vld [vmem:[%s820] ss:$2 sm:$0xff]
    %s822 = scalar_lea.vmem [#allocation2], 242
    %v823 = vld [vmem:[%s822] ss:$2 sm:$0xff]
    %s824 = scalar_lea.vmem [#allocation2], 258
    %v825 = vld [vmem:[%s824] ss:$2 sm:$0xff]
    %s826 = scalar_lea.vmem [#allocation2], 274
    %v827 = vld [vmem:[%s826] ss:$2 sm:$0xff]
    %s828 = scalar_lea.vmem [#allocation2], 290
    %v829 = vld [vmem:[%s828] ss:$2 sm:$0xff]
    %s830 = scalar_lea.vmem [#allocation2], 306
    %v831 = vld [vmem:[%s830] ss:$2 sm:$0xff]
    %s832 = scalar_lea.vmem [#allocation2], 322
    %v833 = vld [vmem:[%s832] ss:$2 sm:$0xff]
    %s834 = scalar_lea.vmem [#allocation2], 338
    %v835 = vld [vmem:[%s834] ss:$2 sm:$0xff]
    %s836 = scalar_lea.vmem [#allocation2], 354
    %v837 = vld [vmem:[%s836] ss:$2 sm:$0x3f]
    %s838 = scalar_lea.vmem %s1, 32
    %v839 = vld [vmem:[%s838] sm:$0xff]
    %v840 = vld [vmem:[%s838 + $0x8] sm:$0xff]
    %v842 = vsel %vm33, %v793, 0
    %v845 = vsel %vm33, %v795, 0
    %v848 = vsel %vm33, %v797, 0
    %v851 = vsel %vm33, %v799, 0
    %v854 = vsel %vm33, %v801, 0
    %v857 = vsel %vm33, %v803, 0
    %v860 = vsel %vm33, %v805, 0
    %v863 = vsel %vm33, %v807, 0
    %v866 = vsel %vm33, %v809, 0
    %v869 = vsel %vm33, %v811, 0
    %v872 = vsel %vm33, %v813, 0
    %v875 = vsel %vm33, %v815, 0
    %v878 = vsel %vm33, %v817, 0
    %v881 = vsel %vm33, %v819, 0
    %v884 = vsel %vm33, %v821, 0
    %v887 = vsel %vm33, %v823, 0
    %v890 = vsel %vm33, %v825, 0
    %v893 = vsel %vm33, %v827, 0
    %v896 = vsel %vm33, %v829, 0
    %v899 = vsel %vm33, %v831, 0
    %v902 = vsel %vm33, %v833, 0
    %v905 = vsel %vm33, %v835, 0
    %v908 = vsel %vm33, %v837, 0
    %910 = vmatprep.subr.mxu0 0.0
    %911 = vmatpush1.msra.mxu0 %v839
    %912 = vmatprep.subr.mxu0 0.0
    %913 = vmatpush1.msra.mxu0 %v840
    %914 = vmatprep.subr.mxu0 0.0
    %915 = vmatpush1.msra.mxu0 0.0
    %916 = vmatprep.subr.mxu0 0.0
    %917 = vmatpush1.msra.mxu0 0.0
    %918 = vmatprep.subr.mxu0 0.0
    %919 = vmatpush1.msra.mxu0 0.0
    %920 = vmatprep.subr.mxu0 0.0
    %921 = vmatpush1.msra.mxu0 0.0
    %922 = vmatprep.subr.mxu0 0.0
    %923 = vmatpush1.msra.mxu0 0.0
    %924 = vmatprep.subr.mxu0 0.0
    %925 = vmatpush1.msra.mxu0 0.0
    %926 = vmatprep.subr.mxu0 0.0
    %927 = vmatpush1.msra.mxu0 0.0
    %928 = vmatprep.subr.mxu0 0.0
    %929 = vmatpush1.msra.mxu0 0.0
    %930 = vmatprep.subr.mxu0 0.0
    %931 = vmatpush1.msra.mxu0 0.0
    %932 = vmatprep.subr.mxu0 0.0
    %933 = vmatpush1.msra.mxu0 0.0
    %934 = vmatprep.subr.mxu0 0.0
    %935 = vmatpush1.msra.mxu0 0.0
    %936 = vmatprep.subr.mxu0 0.0
    %937 = vmatpush1.msra.mxu0 0.0
    %938 = vmatprep.subr.mxu0 0.0
    %939 = vmatpush1.msra.mxu0 0.0
    %940 = vmatprep.subr.mxu0 0.0
    %941 = vmatpush1.msra.mxu0 0.0
    %942 = vmatprep.subr.mxu0 0.0
    %943 = vmatpush1.msra.mxu0 0.0
    %944 = vmatprep.subr.mxu0 0.0
    %945 = vmatpush1.msra.mxu0 0.0
    %946 = vmatprep.subr.mxu0 0.0
    %947 = vmatpush1.msra.mxu0 0.0
    %948 = vmatprep.subr.mxu0 0.0
    %949 = vmatpush1.msra.mxu0 0.0
    %950 = vmatprep.subr.mxu0 0.0
    %951 = vmatpush1.msra.mxu0 0.0
    %952 = vmatprep.subr.mxu0 0.0
    %953 = vmatpush1.msra.mxu0 0.0
    %954 = vmatprep.subr.mxu0 0.0
    %955 = vmatpush1.msra.mxu0 0.0
    %956 = vmatprep.subr.mxu0 0.0
    %957 = vmatpush1.msra.mxu0 0.0
    %958 = vmatprep.subr.mxu0 0.0
    %959 = vmatpush1.msra.mxu0 0.0
    %960 = vmatprep.subr.mxu0 0.0
    %961 = vmatpush1.msra.mxu0 0.0
    %962 = vmatprep.subr.mxu0 0.0
    %963 = vmatpush1.msra.mxu0 0.0
    %964 = vmatprep.subr.mxu0 0.0
    %965 = vmatpush1.msra.mxu0 0.0
    %966 = vmatprep.subr.mxu0 0.0
    %967 = vmatpush1.msra.mxu0 0.0
    %968 = vmatprep.subr.mxu0 0.0
    %969 = vmatpush1.msra.mxu0 0.0
    %970 = vmatprep.subr.mxu0 0.0
    %971 = vmatpush1.msra.mxu0 0.0
    %972 = vmatprep.subr.mxu0 0.0
    %973 = vmatpush1.msra.mxu0 0.0
    %974 = vmatprep.mubr.f32.mxu0 0.0
    %975 = vmatmul.mubr.f32.gmra.mrb[0].mxu0 %v842
    %v976 = vpop.f32.mrb[0].mxu0
    %v977 = vadd.f32 0.0, %v976
    %v978 = vpop.f32.mrb[0].mxu0
    %979 = vmatprep.mubr.f32.mxu0 0.0
    %980 = vmatmul.mubr.f32.gmra.mrb[0].mxu0 %v845
    %v981 = vpop.f32.mrb[0].mxu0
    %v982 = vadd.f32 0.0, %v981
    %v983 = vpop.f32.mrb[0].mxu0
    %984 = vmatprep.mubr.f32.mxu0 0.0
    %985 = vmatmul.mubr.f32.gmra.mrb[0].mxu0 %v848
    %v986 = vpop.f32.mrb[0].mxu0
    %v987 = vadd.f32 0.0, %v986
    %v988 = vpop.f32.mrb[0].mxu0
    %989 = vmatprep.mubr.f32.mxu0 0.0
    %990 = vmatmul.mubr.f32.gmra.mrb[0].mxu0 %v851
    %v991 = vpop.f32.mrb[0].mxu0
    %v992 = vadd.f32 0.0, %v991
    %v993 = vpop.f32.mrb[0].mxu0
    %994 = vmatprep.mubr.f32.mxu0 0.0
    %995 = vmatmul.mubr.f32.gmra.mrb[0].mxu0 %v854
    %v996 = vpop.f32.mrb[0].mxu0
    %v997 = vadd.f32 0.0, %v996
    %v998 = vpop.f32.mrb[0].mxu0
    %999 = vmatprep.mubr.f32.mxu0 0.0
    %1000 = vmatmul.mubr.f32.gmra.mrb[0].mxu0 %v857
    %v1001 = vpop.f32.mrb[0].mxu0
    %v1002 = vadd.f32 0.0, %v1001
    %v1003 = vpop.f32.mrb[0].mxu0
    %1004 = vmatprep.mubr.f32.mxu0 0.0
    %1005 = vmatmul.mubr.f32.gmra.mrb[0].mxu0 %v860
    %v1006 = vpop.f32.mrb[0].mxu0
    %v1007 = vadd.f32 0.0, %v1006
    %v1008 = vpop.f32.mrb[0].mxu0
    %1009 = vmatprep.mubr.f32.mxu0 0.0
    %1010 = vmatmul.mubr.f32.gmra.mrb[0].mxu0 %v863
    %v1011 = vpop.f32.mrb[0].mxu0
    %v1012 = vadd.f32 0.0, %v1011
    %v1013 = vpop.f32.mrb[0].mxu0
    %1014 = vmatprep.mubr.f32.mxu0 0.0
    %1015 = vmatmul.mubr.f32.gmra.mrb[0].mxu0 %v866
    %v1016 = vpop.f32.mrb[0].mxu0
    %v1017 = vadd.f32 0.0, %v1016
    %v1018 = vpop.f32.mrb[0].mxu0
    %1019 = vmatprep.mubr.f32.mxu0 0.0
    %1020 = vmatmul.mubr.f32.gmra.mrb[0].mxu0 %v869
    %v1021 = vpop.f32.mrb[0].mxu0
    %v1022 = vadd.f32 0.0, %v1021
    %v1023 = vpop.f32.mrb[0].mxu0
    %1024 = vmatprep.mubr.f32.mxu0 0.0
    %1025 = vmatmul.mubr.f32.gmra.mrb[0].mxu0 %v872
    %v1026 = vpop.f32.mrb[0].mxu0
    %v1027 = vadd.f32 0.0, %v1026
    %v1028 = vpop.f32.mrb[0].mxu0
    %1029 = vmatprep.mubr.f32.mxu0 0.0
    %1030 = vmatmul.mubr.f32.gmra.mrb[0].mxu0 %v875
    %v1031 = vpop.f32.mrb[0].mxu0
    %v1032 = vadd.f32 0.0, %v1031
    %v1033 = vpop.f32.mrb[0].mxu0
    %1034 = vmatprep.mubr.f32.mxu0 0.0
    %1035 = vmatmul.mubr.f32.gmra.mrb[0].mxu0 %v878
    %v1036 = vpop.f32.mrb[0].mxu0
    %v1037 = vadd.f32 0.0, %v1036
    %v1038 = vpop.f32.mrb[0].mxu0
    %1039 = vmatprep.mubr.f32.mxu0 0.0
    %1040 = vmatmul.mubr.f32.gmra.mrb[0].mxu0 %v881
    %v1041 = vpop.f32.mrb[0].mxu0
    %v1042 = vadd.f32 0.0, %v1041
    %v1043 = vpop.f32.mrb[0].mxu0
    %1044 = vmatprep.mubr.f32.mxu0 0.0
    %1045 = vmatmul.mubr.f32.gmra.mrb[0].mxu0 %v884
    %v1046 = vpop.f32.mrb[0].mxu0
    %v1047 = vadd.f32 0.0, %v1046
    %v1048 = vpop.f32.mrb[0].mxu0
    %1049 = vmatprep.mubr.f32.mxu0 0.0
    %1050 = vmatmul.mubr.f32.gmra.mrb[0].mxu0 %v887
    %v1051 = vpop.f32.mrb[0].mxu0
    %v1052 = vadd.f32 0.0, %v1051
    %v1053 = vpop.f32.mrb[0].mxu0
    %1054 = vmatprep.mubr.f32.mxu0 0.0
    %1055 = vmatmul.mubr.f32.gmra.mrb[0].mxu0 %v890
    %v1056 = vpop.f32.mrb[0].mxu0
    %v1057 = vadd.f32 0.0, %v1056
    %v1058 = vpop.f32.mrb[0].mxu0
    %1059 = vmatprep.mubr.f32.mxu0 0.0
    %1060 = vmatmul.mubr.f32.gmra.mrb[0].mxu0 %v893
    %v1061 = vpop.f32.mrb[0].mxu0
    %v1062 = vadd.f32 0.0, %v1061
    %v1063 = vpop.f32.mrb[0].mxu0
    %1064 = vmatprep.mubr.f32.mxu0 0.0
    %1065 = vmatmul.mubr.f32.gmra.mrb[0].mxu0 %v896
    %v1066 = vpop.f32.mrb[0].mxu0
    %v1067 = vadd.f32 0.0, %v1066
    %v1068 = vpop.f32.mrb[0].mxu0
    %1069 = vmatprep.mubr.f32.mxu0 0.0
    %1070 = vmatmul.mubr.f32.gmra.mrb[0].mxu0 %v899
    %v1071 = vpop.f32.mrb[0].mxu0
    %v1072 = vadd.f32 0.0, %v1071
    %v1073 = vpop.f32.mrb[0].mxu0
    %1074 = vmatprep.mubr.f32.mxu0 0.0
    %1075 = vmatmul.mubr.f32.gmra.mrb[0].mxu0 %v902
    %v1076 = vpop.f32.mrb[0].mxu0
    %v1077 = vadd.f32 0.0, %v1076
    %v1078 = vpop.f32.mrb[0].mxu0
    %1079 = vmatprep.mubr.f32.mxu0 0.0
    %1080 = vmatmul.mubr.f32.gmra.mrb[0].mxu0 %v905
    %v1081 = vpop.f32.mrb[0].mxu0
    %v1082 = vadd.f32 0.0, %v1081
    %v1083 = vpop.f32.mrb[0].mxu0
    %1084 = vmatprep.mubr.f32.mxu0 0.0
    %1085 = vmatmul.mubr.f32.gmra.mrb[0].mxu0 %v908
    %v1086 = vpop.f32.mrb[0].mxu0
    %v1087 = vadd.f32 0.0, %v1086
    %v1088 = vpop.f32.mrb[0].mxu0
    %1089 = vdwg.mxu0
    %v1090 = vadd.f32 %v679, %v977
    %v1091 = vadd.f32 %v684, %v982
    %v1092 = vadd.f32 %v689, %v987
    %v1093 = vadd.f32 %v694, %v992
    %v1094 = vadd.f32 %v699, %v997
    %v1095 = vadd.f32 %v704, %v1002
    %v1096 = vadd.f32 %v709, %v1007
    %v1097 = vadd.f32 %v714, %v1012
    %v1098 = vadd.f32 %v719, %v1017
    %v1099 = vadd.f32 %v724, %v1022
    %v1100 = vadd.f32 %v729, %v1027
    %v1101 = vadd.f32 %v734, %v1032
    %v1102 = vadd.f32 %v739, %v1037
    %v1103 = vadd.f32 %v744, %v1042
    %v1104 = vadd.f32 %v749, %v1047
    %v1105 = vadd.f32 %v754, %v1052
    %v1106 = vadd.f32 %v759, %v1057
    %v1107 = vadd.f32 %v764, %v1062
    %v1108 = vadd.f32 %v769, %v1067
    %v1109 = vadd.f32 %v774, %v1072
    %v1110 = vadd.f32 %v779, %v1077
    %v1111 = vadd.f32 %v784, %v1082
    %v1112 = vadd.f32 %v789, %v1087
    %v1113 = vld [vmem:[%s2] sm:$0x1]
    %v1115 = vlaneseq
    %v1116 = vshrl.u32 %v1115, 7
    %v1117 = vsub.s32 0, %v1116
    %v1118 = vrot.slane %v1113, %v1117
    %v1120 = vadd.f32 %v1090, %v1118
    %v1121 = vadd.f32 %v1091, %v1118
    %v1122 = vadd.f32 %v1092, %v1118
    %v1123 = vadd.f32 %v1093, %v1118
    %v1124 = vadd.f32 %v1094, %v1118
    %v1125 = vadd.f32 %v1095, %v1118
    %v1126 = vadd.f32 %v1096, %v1118
    %v1127 = vadd.f32 %v1097, %v1118
    %v1128 = vadd.f32 %v1098, %v1118
    %v1129 = vadd.f32 %v1099, %v1118
    %v1130 = vadd.f32 %v1100, %v1118
    %v1131 = vadd.f32 %v1101, %v1118
    %v1132 = vadd.f32 %v1102, %v1118
    %v1133 = vadd.f32 %v1103, %v1118
    %v1134 = vadd.f32 %v1104, %v1118
    %v1135 = vadd.f32 %v1105, %v1118
    %v1136 = vadd.f32 %v1106, %v1118
    %v1137 = vadd.f32 %v1107, %v1118
    %v1138 = vadd.f32 %v1108, %v1118
    %v1139 = vadd.f32 %v1109, %v1118
    %v1140 = vadd.f32 %v1110, %v1118
    %v1141 = vadd.f32 %v1111, %v1118
    %v1142 = vadd.f32 %v1112, %v1118
    %v1143 = vmax.f32 %v1120, 0.0
    %v1144 = vmax.f32 %v1121, 0.0
    %v1145 = vmax.f32 %v1122, 0.0
    %v1146 = vmax.f32 %v1123, 0.0
    %v1147 = vmax.f32 %v1124, 0.0
    %v1148 = vmax.f32 %v1125, 0.0
    %v1149 = vmax.f32 %v1126, 0.0
    %v1150 = vmax.f32 %v1127, 0.0
    %v1151 = vmax.f32 %v1128, 0.0
    %v1152 = vmax.f32 %v1129, 0.0
    %v1153 = vmax.f32 %v1130, 0.0
    %v1154 = vmax.f32 %v1131, 0.0
    %v1155 = vmax.f32 %v1132, 0.0
    %v1156 = vmax.f32 %v1133, 0.0
    %v1157 = vmax.f32 %v1134, 0.0
    %v1158 = vmax.f32 %v1135, 0.0
    %v1159 = vmax.f32 %v1136, 0.0
    %v1160 = vmax.f32 %v1137, 0.0
    %v1161 = vmax.f32 %v1138, 0.0
    %v1162 = vmax.f32 %v1139, 0.0
    %v1163 = vmax.f32 %v1140, 0.0
    %v1164 = vmax.f32 %v1141, 0.0
    %v1165 = vmax.f32 %v1142, 0.0
    %1166 = vmatprep.subr.mxu0 0.0
    %1167 = vmatpush1.msra.mxu0 %v292
    %1168 = vmatprep.subr.mxu0 0.0
    %1169 = vmatpush1.msra.mxu0 %v293
    %1170 = vmatprep.subr.mxu0 0.0
    %1171 = vmatpush1.msra.mxu0 0.0
    %1172 = vmatprep.subr.mxu0 0.0
    %1173 = vmatpush1.msra.mxu0 0.0
    %1174 = vmatprep.subr.mxu0 0.0
    %1175 = vmatpush1.msra.mxu0 0.0
    %1176 = vmatprep.subr.mxu0 0.0
    %1177 = vmatpush1.msra.mxu0 0.0
    %1178 = vmatprep.subr.mxu0 0.0
    %1179 = vmatpush1.msra.mxu0 0.0
    %1180 = vmatprep.subr.mxu0 0.0
    %1181 = vmatpush1.msra.mxu0 0.0
    %1182 = vmatprep.subr.mxu0 0.0
    %1183 = vmatpush1.msra.mxu0 0.0
    %1184 = vmatprep.subr.mxu0 0.0
    %1185 = vmatpush1.msra.mxu0 0.0
    %1186 = vmatprep.subr.mxu0 0.0
    %1187 = vmatpush1.msra.mxu0 0.0
    %1188 = vmatprep.subr.mxu0 0.0
    %1189 = vmatpush1.msra.mxu0 0.0
    %1190 = vmatprep.subr.mxu0 0.0
    %1191 = vmatpush1.msra.mxu0 0.0
    %1192 = vmatprep.subr.mxu0 0.0
    %1193 = vmatpush1.msra.mxu0 0.0
    %1194 = vmatprep.subr.mxu0 0.0
    %1195 = vmatpush1.msra.mxu0 0.0
    %1196 = vmatprep.subr.mxu0 0.0
    %1197 = vmatpush1.msra.mxu0 0.0
    %1198 = vmatprep.subr.mxu0 0.0
    %1199 = vmatpush1.msra.mxu0 0.0
    %1200 = vmatprep.subr.mxu0 0.0
    %1201 = vmatpush1.msra.mxu0 0.0
    %1202 = vmatprep.subr.mxu0 0.0
    %1203 = vmatpush1.msra.mxu0 0.0
    %1204 = vmatprep.subr.mxu0 0.0
    %1205 = vmatpush1.msra.mxu0 0.0
    %1206 = vmatprep.subr.mxu0 0.0
    %1207 = vmatpush1.msra.mxu0 0.0
    %1208 = vmatprep.subr.mxu0 0.0
    %1209 = vmatpush1.msra.mxu0 0.0
    %1210 = vmatprep.subr.mxu0 0.0
    %1211 = vmatpush1.msra.mxu0 0.0
    %1212 = vmatprep.subr.mxu0 0.0
    %1213 = vmatpush1.msra.mxu0 0.0
    %1214 = vmatprep.subr.mxu0 0.0
    %1215 = vmatpush1.msra.mxu0 0.0
    %1216 = vmatprep.subr.mxu0 0.0
    %1217 = vmatpush1.msra.mxu0 0.0
    %1218 = vmatprep.subr.mxu0 0.0
    %1219 = vmatpush1.msra.mxu0 0.0
    %1220 = vmatprep.subr.mxu0 0.0
    %1221 = vmatpush1.msra.mxu0 0.0
    %1222 = vmatprep.subr.mxu0 0.0
    %1223 = vmatpush1.msra.mxu0 0.0
    %1224 = vmatprep.subr.mxu0 0.0
    %1225 = vmatpush1.msra.mxu0 0.0
    %1226 = vmatprep.subr.mxu0 0.0
    %1227 = vmatpush1.msra.mxu0 0.0
    %1228 = vmatprep.subr.mxu0 0.0
    %1229 = vmatpush1.msra.mxu0 0.0
    %1230 = vmatprep.mubr.f32.mxu0 0.0
    %1231 = vmatmul.mubr.f32.gmra.mrb[0].mxu0 %v842
    %v1232 = vpop.f32.mrb[0].mxu0
    %v1233 = vadd.f32 0.0, %v1232
    %v1234 = vpop.f32.mrb[0].mxu0
    %1235 = vmatprep.mubr.f32.mxu0 0.0
    %1236 = vmatmul.mubr.f32.gmra.mrb[0].mxu0 %v845
    %v1237 = vpop.f32.mrb[0].mxu0
    %v1238 = vadd.f32 0.0, %v1237
    %v1239 = vpop.f32.mrb[0].mxu0
    %1240 = vmatprep.mubr.f32.mxu0 0.0
    %1241 = vmatmul.mubr.f32.gmra.mrb[0].mxu0 %v848
    %v1242 = vpop.f32.mrb[0].mxu0
    %v1243 = vadd.f32 0.0, %v1242
    %v1244 = vpop.f32.mrb[0].mxu0
    %1245 = vmatprep.mubr.f32.mxu0 0.0
    %1246 = vmatmul.mubr.f32.gmra.mrb[0].mxu0 %v851
    %v1247 = vpop.f32.mrb[0].mxu0
    %v1248 = vadd.f32 0.0, %v1247
    %v1249 = vpop.f32.mrb[0].mxu0
    %1250 = vmatprep.mubr.f32.mxu0 0.0
    %1251 = vmatmul.mubr.f32.gmra.mrb[0].mxu0 %v854
    %v1252 = vpop.f32.mrb[0].mxu0
    %v1253 = vadd.f32 0.0, %v1252
    %v1254 = vpop.f32.mrb[0].mxu0
    %1255 = vmatprep.mubr.f32.mxu0 0.0
    %1256 = vmatmul.mubr.f32.gmra.mrb[0].mxu0 %v857
    %v1257 = vpop.f32.mrb[0].mxu0
    %v1258 = vadd.f32 0.0, %v1257
    %v1259 = vpop.f32.mrb[0].mxu0
    %1260 = vmatprep.mubr.f32.mxu0 0.0
    %1261 = vmatmul.mubr.f32.gmra.mrb[0].mxu0 %v860
    %v1262 = vpop.f32.mrb[0].mxu0
    %v1263 = vadd.f32 0.0, %v1262
    %v1264 = vpop.f32.mrb[0].mxu0
    %1265 = vmatprep.mubr.f32.mxu0 0.0
    %1266 = vmatmul.mubr.f32.gmra.mrb[0].mxu0 %v863
    %v1267 = vpop.f32.mrb[0].mxu0
    %v1268 = vadd.f32 0.0, %v1267
    %v1269 = vpop.f32.mrb[0].mxu0
    %1270 = vmatprep.mubr.f32.mxu0 0.0
    %1271 = vmatmul.mubr.f32.gmra.mrb[0].mxu0 %v866
    %v1272 = vpop.f32.mrb[0].mxu0
    %v1273 = vadd.f32 0.0, %v1272
    %v1274 = vpop.f32.mrb[0].mxu0
    %1275 = vmatprep.mubr.f32.mxu0 0.0
    %1276 = vmatmul.mubr.f32.gmra.mrb[0].mxu0 %v869
    %v1277 = vpop.f32.mrb[0].mxu0
    %v1278 = vadd.f32 0.0, %v1277
    %v1279 = vpop.f32.mrb[0].mxu0
    %1280 = vmatprep.mubr.f32.mxu0 0.0
    %1281 = vmatmul.mubr.f32.gmra.mrb[0].mxu0 %v872
    %v1282 = vpop.f32.mrb[0].mxu0
    %v1283 = vadd.f32 0.0, %v1282
    %v1284 = vpop.f32.mrb[0].mxu0
    %1285 = vmatprep.mubr.f32.mxu0 0.0
    %1286 = vmatmul.mubr.f32.gmra.mrb[0].mxu0 %v875
    %v1287 = vpop.f32.mrb[0].mxu0
    %v1288 = vadd.f32 0.0, %v1287
    %v1289 = vpop.f32.mrb[0].mxu0
    %1290 = vmatprep.mubr.f32.mxu0 0.0
    %1291 = vmatmul.mubr.f32.gmra.mrb[0].mxu0 %v878
    %v1292 = vpop.f32.mrb[0].mxu0
    %v1293 = vadd.f32 0.0, %v1292
    %v1294 = vpop.f32.mrb[0].mxu0
    %1295 = vmatprep.mubr.f32.mxu0 0.0
    %1296 = vmatmul.mubr.f32.gmra.mrb[0].mxu0 %v881
    %v1297 = vpop.f32.mrb[0].mxu0
    %v1298 = vadd.f32 0.0, %v1297
    %v1299 = vpop.f32.mrb[0].mxu0
    %1300 = vmatprep.mubr.f32.mxu0 0.0
    %1301 = vmatmul.mubr.f32.gmra.mrb[0].mxu0 %v884
    %v1302 = vpop.f32.mrb[0].mxu0
    %v1303 = vadd.f32 0.0, %v1302
    %v1304 = vpop.f32.mrb[0].mxu0
    %1305 = vmatprep.mubr.f32.mxu0 0.0
    %1306 = vmatmul.mubr.f32.gmra.mrb[0].mxu0 %v887
    %v1307 = vpop.f32.mrb[0].mxu0
    %v1308 = vadd.f32 0.0, %v1307
    %v1309 = vpop.f32.mrb[0].mxu0
    %1310 = vmatprep.mubr.f32.mxu0 0.0
    %1311 = vmatmul.mubr.f32.gmra.mrb[0].mxu0 %v890
    %v1312 = vpop.f32.mrb[0].mxu0
    %v1313 = vadd.f32 0.0, %v1312
    %v1314 = vpop.f32.mrb[0].mxu0
    %1315 = vmatprep.mubr.f32.mxu0 0.0
    %1316 = vmatmul.mubr.f32.gmra.mrb[0].mxu0 %v893
    %v1317 = vpop.f32.mrb[0].mxu0
    %v1318 = vadd.f32 0.0, %v1317
    %v1319 = vpop.f32.mrb[0].mxu0
    %1320 = vmatprep.mubr.f32.mxu0 0.0
    %1321 = vmatmul.mubr.f32.gmra.mrb[0].mxu0 %v896
    %v1322 = vpop.f32.mrb[0].mxu0
    %v1323 = vadd.f32 0.0, %v1322
    %v1324 = vpop.f32.mrb[0].mxu0
    %1325 = vmatprep.mubr.f32.mxu0 0.0
    %1326 = vmatmul.mubr.f32.gmra.mrb[0].mxu0 %v899
    %v1327 = vpop.f32.mrb[0].mxu0
    %v1328 = vadd.f32 0.0, %v1327
    %v1329 = vpop.f32.mrb[0].mxu0
    %1330 = vmatprep.mubr.f32.mxu0 0.0
    %1331 = vmatmul.mubr.f32.gmra.mrb[0].mxu0 %v902
    %v1332 = vpop.f32.mrb[0].mxu0
    %v1333 = vadd.f32 0.0, %v1332
    %v1334 = vpop.f32.mrb[0].mxu0
    %1335 = vmatprep.mubr.f32.mxu0 0.0
    %1336 = vmatmul.mubr.f32.gmra.mrb[0].mxu0 %v905
    %v1337 = vpop.f32.mrb[0].mxu0
    %v1338 = vadd.f32 0.0, %v1337
    %v1339 = vpop.f32.mrb[0].mxu0
    %1340 = vmatprep.mubr.f32.mxu0 0.0
    %1341 = vmatmul.mubr.f32.gmra.mrb[0].mxu0 %v908
    %v1342 = vpop.f32.mrb[0].mxu0
    %v1343 = vadd.f32 0.0, %v1342
    %v1344 = vpop.f32.mrb[0].mxu0
    %1345 = vdwg.mxu0
    %1346 = vmatprep.subr.mxu0 0.0
    %1347 = vmatpush1.msra.mxu0 %v243
    %1348 = vmatprep.subr.mxu0 0.0
    %1349 = vmatpush1.msra.mxu0 %v244
    %1350 = vmatprep.subr.mxu0 0.0
    %1351 = vmatpush1.msra.mxu0 0.0
    %1352 = vmatprep.subr.mxu0 0.0
    %1353 = vmatpush1.msra.mxu0 0.0
    %1354 = vmatprep.subr.mxu0 0.0
    %1355 = vmatpush1.msra.mxu0 0.0
    %1356 = vmatprep.subr.mxu0 0.0
    %1357 = vmatpush1.msra.mxu0 0.0
    %1358 = vmatprep.subr.mxu0 0.0
    %1359 = vmatpush1.msra.mxu0 0.0
    %1360 = vmatprep.subr.mxu0 0.0
    %1361 = vmatpush1.msra.mxu0 0.0
    %1362 = vmatprep.subr.mxu0 0.0
    %1363 = vmatpush1.msra.mxu0 0.0
    %1364 = vmatprep.subr.mxu0 0.0
    %1365 = vmatpush1.msra.mxu0 0.0
    %1366 = vmatprep.subr.mxu0 0.0
    %1367 = vmatpush1.msra.mxu0 0.0
    %1368 = vmatprep.subr.mxu0 0.0
    %1369 = vmatpush1.msra.mxu0 0.0
    %1370 = vmatprep.subr.mxu0 0.0
    %1371 = vmatpush1.msra.mxu0 0.0
    %1372 = vmatprep.subr.mxu0 0.0
    %1373 = vmatpush1.msra.mxu0 0.0
    %1374 = vmatprep.subr.mxu0 0.0
    %1375 = vmatpush1.msra.mxu0 0.0
    %1376 = vmatprep.subr.mxu0 0.0
    %1377 = vmatpush1.msra.mxu0 0.0
    %1378 = vmatprep.subr.mxu0 0.0
    %1379 = vmatpush1.msra.mxu0 0.0
    %1380 = vmatprep.subr.mxu0 0.0
    %1381 = vmatpush1.msra.mxu0 0.0
    %1382 = vmatprep.subr.mxu0 0.0
    %1383 = vmatpush1.msra.mxu0 0.0
    %1384 = vmatprep.subr.mxu0 0.0
    %1385 = vmatpush1.msra.mxu0 0.0
    %1386 = vmatprep.subr.mxu0 0.0
    %1387 = vmatpush1.msra.mxu0 0.0
    %1388 = vmatprep.subr.mxu0 0.0
    %1389 = vmatpush1.msra.mxu0 0.0
    %1390 = vmatprep.subr.mxu0 0.0
    %1391 = vmatpush1.msra.mxu0 0.0
    %1392 = vmatprep.subr.mxu0 0.0
    %1393 = vmatpush1.msra.mxu0 0.0
    %1394 = vmatprep.subr.mxu0 0.0
    %1395 = vmatpush1.msra.mxu0 0.0
    %1396 = vmatprep.subr.mxu0 0.0
    %1397 = vmatpush1.msra.mxu0 0.0
    %1398 = vmatprep.subr.mxu0 0.0
    %1399 = vmatpush1.msra.mxu0 0.0
    %1400 = vmatprep.subr.mxu0 0.0
    %1401 = vmatpush1.msra.mxu0 0.0
    %1402 = vmatprep.subr.mxu0 0.0
    %1403 = vmatpush1.msra.mxu0 0.0
    %1404 = vmatprep.subr.mxu0 0.0
    %1405 = vmatpush1.msra.mxu0 0.0
    %1406 = vmatprep.subr.mxu0 0.0
    %1407 = vmatpush1.msra.mxu0 0.0
    %1408 = vmatprep.subr.mxu0 0.0
    %1409 = vmatpush1.msra.mxu0 0.0
    %1410 = vmatprep.mubr.f32.mxu0 0.0
    %1411 = vmatmul.mubr.f32.gmra.mrb[0].mxu0 %v295
    %v1412 = vpop.f32.mrb[0].mxu0
    %v1413 = vadd.f32 %v1233, %v1412
    %v1414 = vpop.f32.mrb[0].mxu0
    %1415 = vmatprep.mubr.f32.mxu0 0.0
    %1416 = vmatmul.mubr.f32.gmra.mrb[0].mxu0 %v298
    %v1417 = vpop.f32.mrb[0].mxu0
    %v1418 = vadd.f32 %v1238, %v1417
    %v1419 = vpop.f32.mrb[0].mxu0
    %1420 = vmatprep.mubr.f32.mxu0 0.0
    %1421 = vmatmul.mubr.f32.gmra.mrb[0].mxu0 %v301
    %v1422 = vpop.f32.mrb[0].mxu0
    %v1423 = vadd.f32 %v1243, %v1422
    %v1424 = vpop.f32.mrb[0].mxu0
    %1425 = vmatprep.mubr.f32.mxu0 0.0
    %1426 = vmatmul.mubr.f32.gmra.mrb[0].mxu0 %v304
    %v1427 = vpop.f32.mrb[0].mxu0
    %v1428 = vadd.f32 %v1248, %v1427
    %v1429 = vpop.f32.mrb[0].mxu0
    %1430 = vmatprep.mubr.f32.mxu0 0.0
    %1431 = vmatmul.mubr.f32.gmra.mrb[0].mxu0 %v307
    %v1432 = vpop.f32.mrb[0].mxu0
    %v1433 = vadd.f32 %v1253, %v1432
    %v1434 = vpop.f32.mrb[0].mxu0
    %1435 = vmatprep.mubr.f32.mxu0 0.0
    %1436 = vmatmul.mubr.f32.gmra.mrb[0].mxu0 %v310
    %v1437 = vpop.f32.mrb[0].mxu0
    %v1438 = vadd.f32 %v1258, %v1437
    %v1439 = vpop.f32.mrb[0].mxu0
    %1440 = vmatprep.mubr.f32.mxu0 0.0
    %1441 = vmatmul.mubr.f32.gmra.mrb[0].mxu0 %v313
    %v1442 = vpop.f32.mrb[0].mxu0
    %v1443 = vadd.f32 %v1263, %v1442
    %v1444 = vpop.f32.mrb[0].mxu0
    %1445 = vmatprep.mubr.f32.mxu0 0.0
    %1446 = vmatmul.mubr.f32.gmra.mrb[0].mxu0 %v316
    %v1447 = vpop.f32.mrb[0].mxu0
    %v1448 = vadd.f32 %v1268, %v1447
    %v1449 = vpop.f32.mrb[0].mxu0
    %1450 = vmatprep.mubr.f32.mxu0 0.0
    %1451 = vmatmul.mubr.f32.gmra.mrb[0].mxu0 %v319
    %v1452 = vpop.f32.mrb[0].mxu0
    %v1453 = vadd.f32 %v1273, %v1452
    %v1454 = vpop.f32.mrb[0].mxu0
    %1455 = vmatprep.mubr.f32.mxu0 0.0
    %1456 = vmatmul.mubr.f32.gmra.mrb[0].mxu0 %v322
    %v1457 = vpop.f32.mrb[0].mxu0
    %v1458 = vadd.f32 %v1278, %v1457
    %v1459 = vpop.f32.mrb[0].mxu0
    %1460 = vmatprep.mubr.f32.mxu0 0.0
    %1461 = vmatmul.mubr.f32.gmra.mrb[0].mxu0 %v325
    %v1462 = vpop.f32.mrb[0].mxu0
    %v1463 = vadd.f32 %v1283, %v1462
    %v1464 = vpop.f32.mrb[0].mxu0
    %1465 = vmatprep.mubr.f32.mxu0 0.0
    %1466 = vmatmul.mubr.f32.gmra.mrb[0].mxu0 %v328
    %v1467 = vpop.f32.mrb[0].mxu0
    %v1468 = vadd.f32 %v1288, %v1467
    %v1469 = vpop.f32.mrb[0].mxu0
    %1470 = vmatprep.mubr.f32.mxu0 0.0
    %1471 = vmatmul.mubr.f32.gmra.mrb[0].mxu0 %v331
    %v1472 = vpop.f32.mrb[0].mxu0
    %v1473 = vadd.f32 %v1293, %v1472
    %v1474 = vpop.f32.mrb[0].mxu0
    %1475 = vmatprep.mubr.f32.mxu0 0.0
    %1476 = vmatmul.mubr.f32.gmra.mrb[0].mxu0 %v334
    %v1477 = vpop.f32.mrb[0].mxu0
    %v1478 = vadd.f32 %v1298, %v1477
    %v1479 = vpop.f32.mrb[0].mxu0
    %1480 = vmatprep.mubr.f32.mxu0 0.0
    %1481 = vmatmul.mubr.f32.gmra.mrb[0].mxu0 %v337
    %v1482 = vpop.f32.mrb[0].mxu0
    %v1483 = vadd.f32 %v1303, %v1482
    %v1484 = vpop.f32.mrb[0].mxu0
    %1485 = vmatprep.mubr.f32.mxu0 0.0
    %1486 = vmatmul.mubr.f32.gmra.mrb[0].mxu0 %v340
    %v1487 = vpop.f32.mrb[0].mxu0
    %v1488 = vadd.f32 %v1308, %v1487
    %v1489 = vpop.f32.mrb[0].mxu0
    %1490 = vmatprep.mubr.f32.mxu0 0.0
    %1491 = vmatmul.mubr.f32.gmra.mrb[0].mxu0 %v343
    %v1492 = vpop.f32.mrb[0].mxu0
    %v1493 = vadd.f32 %v1313, %v1492
    %v1494 = vpop.f32.mrb[0].mxu0
    %1495 = vmatprep.mubr.f32.mxu0 0.0
    %1496 = vmatmul.mubr.f32.gmra.mrb[0].mxu0 %v346
    %v1497 = vpop.f32.mrb[0].mxu0
    %v1498 = vadd.f32 %v1318, %v1497
    %v1499 = vpop.f32.mrb[0].mxu0
    %1500 = vmatprep.mubr.f32.mxu0 0.0
    %1501 = vmatmul.mubr.f32.gmra.mrb[0].mxu0 %v349
    %v1502 = vpop.f32.mrb[0].mxu0
    %v1503 = vadd.f32 %v1323, %v1502
    %v1504 = vpop.f32.mrb[0].mxu0
    %1505 = vmatprep.mubr.f32.mxu0 0.0
    %1506 = vmatmul.mubr.f32.gmra.mrb[0].mxu0 %v352
    %v1507 = vpop.f32.mrb[0].mxu0
    %v1508 = vadd.f32 %v1328, %v1507
    %v1509 = vpop.f32.mrb[0].mxu0
    %1510 = vmatprep.mubr.f32.mxu0 0.0
    %1511 = vmatmul.mubr.f32.gmra.mrb[0].mxu0 %v355
    %v1512 = vpop.f32.mrb[0].mxu0
    %v1513 = vadd.f32 %v1333, %v1512
    %v1514 = vpop.f32.mrb[0].mxu0
    %1515 = vmatprep.mubr.f32.mxu0 0.0
    %1516 = vmatmul.mubr.f32.gmra.mrb[0].mxu0 %v358
    %v1517 = vpop.f32.mrb[0].mxu0
    %v1518 = vadd.f32 %v1338, %v1517
    %v1519 = vpop.f32.mrb[0].mxu0
    %1520 = vmatprep.mubr.f32.mxu0 0.0
    %1521 = vmatmul.mubr.f32.gmra.mrb[0].mxu0 %v361
    %v1522 = vpop.f32.mrb[0].mxu0
    %v1523 = vadd.f32 %v1343, %v1522
    %v1524 = vpop.f32.mrb[0].mxu0
    %1525 = vdwg.mxu0
    %s1526 = scalar_lea.vmem [#allocation2], 3
    %v1527 = vld [vmem:[%s1526] ss:$2 sm:$0xff]
    %s1528 = scalar_lea.vmem [#allocation2], 19
    %v1529 = vld [vmem:[%s1528] ss:$2 sm:$0xff]
    %s1530 = scalar_lea.vmem [#allocation2], 35
    %v1531 = vld [vmem:[%s1530] ss:$2 sm:$0xff]
    %s1532 = scalar_lea.vmem [#allocation2], 51
    %v1533 = vld [vmem:[%s1532] ss:$2 sm:$0xff]
    %s1534 = scalar_lea.vmem [#allocation2], 67
    %v1535 = vld [vmem:[%s1534] ss:$2 sm:$0xff]
    %s1536 = scalar_lea.vmem [#allocation2], 83
    %v1537 = vld [vmem:[%s1536] ss:$2 sm:$0xff]
    %s1538 = scalar_lea.vmem [#allocation2], 99
    %v1539 = vld [vmem:[%s1538] ss:$2 sm:$0xff]
    %s1540 = scalar_lea.vmem [#allocation2], 115
    %v1541 = vld [vmem:[%s1540] ss:$2 sm:$0xff]
    %s1542 = scalar_lea.vmem [#allocation2], 131
    %v1543 = vld [vmem:[%s1542] ss:$2 sm:$0xff]
    %s1544 = scalar_lea.vmem [#allocation2], 147
    %v1545 = vld [vmem:[%s1544] ss:$2 sm:$0xff]
    %s1546 = scalar_lea.vmem [#allocation2], 163
    %v1547 = vld [vmem:[%s1546] ss:$2 sm:$0xff]
    %s1548 = scalar_lea.vmem [#allocation2], 179
    %v1549 = vld [vmem:[%s1548] ss:$2 sm:$0xff]
    %s1550 = scalar_lea.vmem [#allocation2], 195
    %v1551 = vld [vmem:[%s1550] ss:$2 sm:$0xff]
    %s1552 = scalar_lea.vmem [#allocation2], 211
    %v1553 = vld [vmem:[%s1552] ss:$2 sm:$0xff]
    %s1554 = scalar_lea.vmem [#allocation2], 227
    %v1555 = vld [vmem:[%s1554] ss:$2 sm:$0xff]
    %s1556 = scalar_lea.vmem [#allocation2], 243
    %v1557 = vld [vmem:[%s1556] ss:$2 sm:$0xff]
    %s1558 = scalar_lea.vmem [#allocation2], 259
    %v1559 = vld [vmem:[%s1558] ss:$2 sm:$0xff]
    %s1560 = scalar_lea.vmem [#allocation2], 275
    %v1561 = vld [vmem:[%s1560] ss:$2 sm:$0xff]
    %s1562 = scalar_lea.vmem [#allocation2], 291
    %v1563 = vld [vmem:[%s1562] ss:$2 sm:$0xff]
    %s1564 = scalar_lea.vmem [#allocation2], 307
    %v1565 = vld [vmem:[%s1564] ss:$2 sm:$0xff]
    %s1566 = scalar_lea.vmem [#allocation2], 323
    %v1567 = vld [vmem:[%s1566] ss:$2 sm:$0xff]
    %s1568 = scalar_lea.vmem [#allocation2], 339
    %v1569 = vld [vmem:[%s1568] ss:$2 sm:$0xff]
    %s1570 = scalar_lea.vmem [#allocation2], 355
    %v1571 = vld [vmem:[%s1570] ss:$2 sm:$0x3f]
    %v1573 = vsel %vm33, %v1527, 0
    %v1576 = vsel %vm33, %v1529, 0
    %v1579 = vsel %vm33, %v1531, 0
    %v1582 = vsel %vm33, %v1533, 0
    %v1585 = vsel %vm33, %v1535, 0
    %v1588 = vsel %vm33, %v1537, 0
    %v1591 = vsel %vm33, %v1539, 0
    %v1594 = vsel %vm33, %v1541, 0
    %v1597 = vsel %vm33, %v1543, 0
    %v1600 = vsel %vm33, %v1545, 0
    %v1603 = vsel %vm33, %v1547, 0
    %v1606 = vsel %vm33, %v1549, 0
    %v1609 = vsel %vm33, %v1551, 0
    %v1612 = vsel %vm33, %v1553, 0
    %v1615 = vsel %vm33, %v1555, 0
    %v1618 = vsel %vm33, %v1557, 0
    %v1621 = vsel %vm33, %v1559, 0
    %v1624 = vsel %vm33, %v1561, 0
    %v1627 = vsel %vm33, %v1563, 0
    %v1630 = vsel %vm33, %v1565, 0
    %v1633 = vsel %vm33, %v1567, 0
    %v1636 = vsel %vm33, %v1569, 0
    %v1639 = vsel %vm33, %v1571, 0
    %1641 = vmatprep.subr.mxu0 0.0
    %1642 = vmatpush1.msra.mxu0 %v839
    %1643 = vmatprep.subr.mxu0 0.0
    %1644 = vmatpush1.msra.mxu0 %v840
    %1645 = vmatprep.subr.mxu0 0.0
    %1646 = vmatpush1.msra.mxu0 0.0
    %1647 = vmatprep.subr.mxu0 0.0
    %1648 = vmatpush1.msra.mxu0 0.0
    %1649 = vmatprep.subr.mxu0 0.0
    %1650 = vmatpush1.msra.mxu0 0.0
    %1651 = vmatprep.subr.mxu0 0.0
    %1652 = vmatpush1.msra.mxu0 0.0
    %1653 = vmatprep.subr.mxu0 0.0
    %1654 = vmatpush1.msra.mxu0 0.0
    %1655 = vmatprep.subr.mxu0 0.0
    %1656 = vmatpush1.msra.mxu0 0.0
    %1657 = vmatprep.subr.mxu0 0.0
    %1658 = vmatpush1.msra.mxu0 0.0
    %1659 = vmatprep.subr.mxu0 0.0
    %1660 = vmatpush1.msra.mxu0 0.0
    %1661 = vmatprep.subr.mxu0 0.0
    %1662 = vmatpush1.msra.mxu0 0.0
    %1663 = vmatprep.subr.mxu0 0.0
    %1664 = vmatpush1.msra.mxu0 0.0
    %1665 = vmatprep.subr.mxu0 0.0
    %1666 = vmatpush1.msra.mxu0 0.0
    %1667 = vmatprep.subr.mxu0 0.0
    %1668 = vmatpush1.msra.mxu0 0.0
    %1669 = vmatprep.subr.mxu0 0.0
    %1670 = vmatpush1.msra.mxu0 0.0
    %1671 = vmatprep.subr.mxu0 0.0
    %1672 = vmatpush1.msra.mxu0 0.0
    %1673 = vmatprep.subr.mxu0 0.0
    %1674 = vmatpush1.msra.mxu0 0.0
    %1675 = vmatprep.subr.mxu0 0.0
    %1676 = vmatpush1.msra.mxu0 0.0
    %1677 = vmatprep.subr.mxu0 0.0
    %1678 = vmatpush1.msra.mxu0 0.0
    %1679 = vmatprep.subr.mxu0 0.0
    %1680 = vmatpush1.msra.mxu0 0.0
    %1681 = vmatprep.subr.mxu0 0.0
    %1682 = vmatpush1.msra.mxu0 0.0
    %1683 = vmatprep.subr.mxu0 0.0
    %1684 = vmatpush1.msra.mxu0 0.0
    %1685 = vmatprep.subr.mxu0 0.0
    %1686 = vmatpush1.msra.mxu0 0.0
    %1687 = vmatprep.subr.mxu0 0.0
    %1688 = vmatpush1.msra.mxu0 0.0
    %1689 = vmatprep.subr.mxu0 0.0
    %1690 = vmatpush1.msra.mxu0 0.0
    %1691 = vmatprep.subr.mxu0 0.0
    %1692 = vmatpush1.msra.mxu0 0.0
    %1693 = vmatprep.subr.mxu0 0.0
    %1694 = vmatpush1.msra.mxu0 0.0
    %1695 = vmatprep.subr.mxu0 0.0
    %1696 = vmatpush1.msra.mxu0 0.0
    %1697 = vmatprep.subr.mxu0 0.0
    %1698 = vmatpush1.msra.mxu0 0.0
    %1699 = vmatprep.subr.mxu0 0.0
    %1700 = vmatpush1.msra.mxu0 0.0
    %1701 = vmatprep.subr.mxu0 0.0
    %1702 = vmatpush1.msra.mxu0 0.0
    %1703 = vmatprep.subr.mxu0 0.0
    %1704 = vmatpush1.msra.mxu0 0.0
    %1705 = vmatprep.mubr.f32.mxu0 0.0
    %1706 = vmatmul.mubr.f32.gmra.mrb[0].mxu0 %v1573
    %v1707 = vpop.f32.mrb[0].mxu0
    %v1708 = vadd.f32 0.0, %v1707
    %v1709 = vpop.f32.mrb[0].mxu0
    %1710 = vmatprep.mubr.f32.mxu0 0.0
    %1711 = vmatmul.mubr.f32.gmra.mrb[0].mxu0 %v1576
    %v1712 = vpop.f32.mrb[0].mxu0
    %v1713 = vadd.f32 0.0, %v1712
    %v1714 = vpop.f32.mrb[0].mxu0
    %1715 = vmatprep.mubr.f32.mxu0 0.0
    %1716 = vmatmul.mubr.f32.gmra.mrb[0].mxu0 %v1579
    %v1717 = vpop.f32.mrb[0].mxu0
    %v1718 = vadd.f32 0.0, %v1717
    %v1719 = vpop.f32.mrb[0].mxu0
    %1720 = vmatprep.mubr.f32.mxu0 0.0
    %1721 = vmatmul.mubr.f32.gmra.mrb[0].mxu0 %v1582
    %v1722 = vpop.f32.mrb[0].mxu0
    %v1723 = vadd.f32 0.0, %v1722
    %v1724 = vpop.f32.mrb[0].mxu0
    %1725 = vmatprep.mubr.f32.mxu0 0.0
    %1726 = vmatmul.mubr.f32.gmra.mrb[0].mxu0 %v1585
    %v1727 = vpop.f32.mrb[0].mxu0
    %v1728 = vadd.f32 0.0, %v1727
    %v1729 = vpop.f32.mrb[0].mxu0
    %1730 = vmatprep.mubr.f32.mxu0 0.0
    %1731 = vmatmul.mubr.f32.gmra.mrb[0].mxu0 %v1588
    %v1732 = vpop.f32.mrb[0].mxu0
    %v1733 = vadd.f32 0.0, %v1732
    %v1734 = vpop.f32.mrb[0].mxu0
    %1735 = vmatprep.mubr.f32.mxu0 0.0
    %1736 = vmatmul.mubr.f32.gmra.mrb[0].mxu0 %v1591
    %v1737 = vpop.f32.mrb[0].mxu0
    %v1738 = vadd.f32 0.0, %v1737
    %v1739 = vpop.f32.mrb[0].mxu0
    %1740 = vmatprep.mubr.f32.mxu0 0.0
    %1741 = vmatmul.mubr.f32.gmra.mrb[0].mxu0 %v1594
    %v1742 = vpop.f32.mrb[0].mxu0
    %v1743 = vadd.f32 0.0, %v1742
    %v1744 = vpop.f32.mrb[0].mxu0
    %1745 = vmatprep.mubr.f32.mxu0 0.0
    %1746 = vmatmul.mubr.f32.gmra.mrb[0].mxu0 %v1597
    %v1747 = vpop.f32.mrb[0].mxu0
    %v1748 = vadd.f32 0.0, %v1747
    %v1749 = vpop.f32.mrb[0].mxu0
    %1750 = vmatprep.mubr.f32.mxu0 0.0
    %1751 = vmatmul.mubr.f32.gmra.mrb[0].mxu0 %v1600
    %v1752 = vpop.f32.mrb[0].mxu0
    %v1753 = vadd.f32 0.0, %v1752
    %v1754 = vpop.f32.mrb[0].mxu0
    %1755 = vmatprep.mubr.f32.mxu0 0.0
    %1756 = vmatmul.mubr.f32.gmra.mrb[0].mxu0 %v1603
    %v1757 = vpop.f32.mrb[0].mxu0
    %v1758 = vadd.f32 0.0, %v1757
    %v1759 = vpop.f32.mrb[0].mxu0
    %1760 = vmatprep.mubr.f32.mxu0 0.0
    %1761 = vmatmul.mubr.f32.gmra.mrb[0].mxu0 %v1606
    %v1762 = vpop.f32.mrb[0].mxu0
    %v1763 = vadd.f32 0.0, %v1762
    %v1764 = vpop.f32.mrb[0].mxu0
    %1765 = vmatprep.mubr.f32.mxu0 0.0
    %1766 = vmatmul.mubr.f32.gmra.mrb[0].mxu0 %v1609
    %v1767 = vpop.f32.mrb[0].mxu0
    %v1768 = vadd.f32 0.0, %v1767
    %v1769 = vpop.f32.mrb[0].mxu0
    %1770 = vmatprep.mubr.f32.mxu0 0.0
    %1771 = vmatmul.mubr.f32.gmra.mrb[0].mxu0 %v1612
    %v1772 = vpop.f32.mrb[0].mxu0
    %v1773 = vadd.f32 0.0, %v1772
    %v1774 = vpop.f32.mrb[0].mxu0
    %1775 = vmatprep.mubr.f32.mxu0 0.0
    %1776 = vmatmul.mubr.f32.gmra.mrb[0].mxu0 %v1615
    %v1777 = vpop.f32.mrb[0].mxu0
    %v1778 = vadd.f32 0.0, %v1777
    %v1779 = vpop.f32.mrb[0].mxu0
    %1780 = vmatprep.mubr.f32.mxu0 0.0
    %1781 = vmatmul.mubr.f32.gmra.mrb[0].mxu0 %v1618
    %v1782 = vpop.f32.mrb[0].mxu0
    %v1783 = vadd.f32 0.0, %v1782
    %v1784 = vpop.f32.mrb[0].mxu0
    %1785 = vmatprep.mubr.f32.mxu0 0.0
    %1786 = vmatmul.mubr.f32.gmra.mrb[0].mxu0 %v1621
    %v1787 = vpop.f32.mrb[0].mxu0
    %v1788 = vadd.f32 0.0, %v1787
    %v1789 = vpop.f32.mrb[0].mxu0
    %1790 = vmatprep.mubr.f32.mxu0 0.0
    %1791 = vmatmul.mubr.f32.gmra.mrb[0].mxu0 %v1624
    %v1792 = vpop.f32.mrb[0].mxu0
    %v1793 = vadd.f32 0.0, %v1792
    %v1794 = vpop.f32.mrb[0].mxu0
    %1795 = vmatprep.mubr.f32.mxu0 0.0
    %1796 = vmatmul.mubr.f32.gmra.mrb[0].mxu0 %v1627
    %v1797 = vpop.f32.mrb[0].mxu0
    %v1798 = vadd.f32 0.0, %v1797
    %v1799 = vpop.f32.mrb[0].mxu0
    %1800 = vmatprep.mubr.f32.mxu0 0.0
    %1801 = vmatmul.mubr.f32.gmra.mrb[0].mxu0 %v1630
    %v1802 = vpop.f32.mrb[0].mxu0
    %v1803 = vadd.f32 0.0, %v1802
    %v1804 = vpop.f32.mrb[0].mxu0
    %1805 = vmatprep.mubr.f32.mxu0 0.0
    %1806 = vmatmul.mubr.f32.gmra.mrb[0].mxu0 %v1633
    %v1807 = vpop.f32.mrb[0].mxu0
    %v1808 = vadd.f32 0.0, %v1807
    %v1809 = vpop.f32.mrb[0].mxu0
    %1810 = vmatprep.mubr.f32.mxu0 0.0
    %1811 = vmatmul.mubr.f32.gmra.mrb[0].mxu0 %v1636
    %v1812 = vpop.f32.mrb[0].mxu0
    %v1813 = vadd.f32 0.0, %v1812
    %v1814 = vpop.f32.mrb[0].mxu0
    %1815 = vmatprep.mubr.f32.mxu0 0.0
    %1816 = vmatmul.mubr.f32.gmra.mrb[0].mxu0 %v1639
    %v1817 = vpop.f32.mrb[0].mxu0
    %v1818 = vadd.f32 0.0, %v1817
    %v1819 = vpop.f32.mrb[0].mxu0
    %1820 = vdwg.mxu0
    %v1821 = vadd.f32 %v1413, %v1708
    %v1822 = vadd.f32 %v1418, %v1713
    %v1823 = vadd.f32 %v1423, %v1718
    %v1824 = vadd.f32 %v1428, %v1723
    %v1825 = vadd.f32 %v1433, %v1728
    %v1826 = vadd.f32 %v1438, %v1733
    %v1827 = vadd.f32 %v1443, %v1738
    %v1828 = vadd.f32 %v1448, %v1743
    %v1829 = vadd.f32 %v1453, %v1748
    %v1830 = vadd.f32 %v1458, %v1753
    %v1831 = vadd.f32 %v1463, %v1758
    %v1832 = vadd.f32 %v1468, %v1763
    %v1833 = vadd.f32 %v1473, %v1768
    %v1834 = vadd.f32 %v1478, %v1773
    %v1835 = vadd.f32 %v1483, %v1778
    %v1836 = vadd.f32 %v1488, %v1783
    %v1837 = vadd.f32 %v1493, %v1788
    %v1838 = vadd.f32 %v1498, %v1793
    %v1839 = vadd.f32 %v1503, %v1798
    %v1840 = vadd.f32 %v1508, %v1803
    %v1841 = vadd.f32 %v1513, %v1808
    %v1842 = vadd.f32 %v1518, %v1813
    %v1843 = vadd.f32 %v1523, %v1818
    %v1844 = vadd.f32 %v1821, %v1118
    %v1845 = vadd.f32 %v1822, %v1118
    %v1846 = vadd.f32 %v1823, %v1118
    %v1847 = vadd.f32 %v1824, %v1118
    %v1848 = vadd.f32 %v1825, %v1118
    %v1849 = vadd.f32 %v1826, %v1118
    %v1850 = vadd.f32 %v1827, %v1118
    %v1851 = vadd.f32 %v1828, %v1118
    %v1852 = vadd.f32 %v1829, %v1118
    %v1853 = vadd.f32 %v1830, %v1118
    %v1854 = vadd.f32 %v1831, %v1118
    %v1855 = vadd.f32 %v1832, %v1118
    %v1856 = vadd.f32 %v1833, %v1118
    %v1857 = vadd.f32 %v1834, %v1118
    %v1858 = vadd.f32 %v1835, %v1118
    %v1859 = vadd.f32 %v1836, %v1118
    %v1860 = vadd.f32 %v1837, %v1118
    %v1861 = vadd.f32 %v1838, %v1118
    %v1862 = vadd.f32 %v1839, %v1118
    %v1863 = vadd.f32 %v1840, %v1118
    %v1864 = vadd.f32 %v1841, %v1118
    %v1865 = vadd.f32 %v1842, %v1118
    %v1866 = vadd.f32 %v1843, %v1118
    %v1867 = vmax.f32 %v1844, 0.0
    %v1868 = vmax.f32 %v1845, 0.0
    %v1869 = vmax.f32 %v1846, 0.0
    %v1870 = vmax.f32 %v1847, 0.0
    %v1871 = vmax.f32 %v1848, 0.0
    %v1872 = vmax.f32 %v1849, 0.0
    %v1873 = vmax.f32 %v1850, 0.0
    %v1874 = vmax.f32 %v1851, 0.0
    %v1875 = vmax.f32 %v1852, 0.0
    %v1876 = vmax.f32 %v1853, 0.0
    %v1877 = vmax.f32 %v1854, 0.0
    %v1878 = vmax.f32 %v1855, 0.0
    %v1879 = vmax.f32 %v1856, 0.0
    %v1880 = vmax.f32 %v1857, 0.0
    %v1881 = vmax.f32 %v1858, 0.0
    %v1882 = vmax.f32 %v1859, 0.0
    %v1883 = vmax.f32 %v1860, 0.0
    %v1884 = vmax.f32 %v1861, 0.0
    %v1885 = vmax.f32 %v1862, 0.0
    %v1886 = vmax.f32 %v1863, 0.0
    %v1887 = vmax.f32 %v1864, 0.0
    %v1888 = vmax.f32 %v1865, 0.0
    %v1889 = vmax.f32 %v1866, 0.0
    %v1890 = vmax.f32 %v1143, %v1867
    %v1891 = vmax.f32 %v1144, %v1868
    %v1892 = vmax.f32 %v1145, %v1869
    %v1893 = vmax.f32 %v1146, %v1870
    %v1894 = vmax.f32 %v1147, %v1871
    %v1895 = vmax.f32 %v1148, %v1872
    %v1896 = vmax.f32 %v1149, %v1873
    %v1897 = vmax.f32 %v1150, %v1874
    %v1898 = vmax.f32 %v1151, %v1875
    %v1899 = vmax.f32 %v1152, %v1876
    %v1900 = vmax.f32 %v1153, %v1877
    %v1901 = vmax.f32 %v1154, %v1878
    %v1902 = vmax.f32 %v1155, %v1879
    %v1903 = vmax.f32 %v1156, %v1880
    %v1904 = vmax.f32 %v1157, %v1881
    %v1905 = vmax.f32 %v1158, %v1882
    %v1906 = vmax.f32 %v1159, %v1883
    %v1907 = vmax.f32 %v1160, %v1884
    %v1908 = vmax.f32 %v1161, %v1885
    %v1909 = vmax.f32 %v1162, %v1886
    %v1910 = vmax.f32 %v1163, %v1887
    %v1911 = vmax.f32 %v1164, %v1888
    %v1912 = vmax.f32 %v1165, %v1889
    %v1913 = vlaneseq
    %v1914 = vshrl.u32 %v1913, 7
    %v1915 = vadd.s32 %v1914, 8
    %v1916 = vadd.s32 %v1914, 16
    %v1917 = vadd.s32 %v1914, 24
    %v1918 = vadd.s32 %v1914, 32
    %v1919 = vadd.s32 %v1914, 40
    %v1920 = vadd.s32 %v1914, 48
    %v1921 = vadd.s32 %v1914, 56
    %v1922 = vadd.s32 %v1914, 64
    %v1923 = vadd.s32 %v1914, 72
    %v1924 = vadd.s32 %v1914, 80
    %v1925 = vadd.s32 %v1914, 88
    %v1926 = vadd.s32 %v1914, 96
    %v1927 = vadd.s32 %v1914, 104
    %v1928 = vadd.s32 %v1914, 112
    %v1929 = vadd.s32 %v1914, 120
    %v1930 = vadd.s32 %v1914, 128
    %v1931 = vadd.s32 %v1914, 136
    %v1932 = vadd.s32 %v1914, 144
    %v1933 = vadd.s32 %v1914, 152
    %v1934 = vadd.s32 %v1914, 160
    %v1935 = vadd.s32 %v1914, 168
    %v1936 = vadd.s32 %v1914, 176
    %vm1937 = vcmp.lt.s32.totalorder %v1914, 0
    %vm1938 = vcmp.lt.s32.totalorder %v1915, 0
    %vm1939 = vcmp.lt.s32.totalorder %v1916, 0
    %vm1940 = vcmp.lt.s32.totalorder %v1917, 0
    %vm1941 = vcmp.lt.s32.totalorder %v1918, 0
    %vm1942 = vcmp.lt.s32.totalorder %v1919, 0
    %vm1943 = vcmp.lt.s32.totalorder %v1920, 0
    %vm1944 = vcmp.lt.s32.totalorder %v1921, 0
    %vm1945 = vcmp.lt.s32.totalorder %v1922, 0
    %vm1946 = vcmp.lt.s32.totalorder %v1923, 0
    %vm1947 = vcmp.lt.s32.totalorder %v1924, 0
    %vm1948 = vcmp.lt.s32.totalorder %v1925, 0
    %vm1949 = vcmp.lt.s32.totalorder %v1926, 0
    %vm1950 = vcmp.lt.s32.totalorder %v1927, 0
    %vm1951 = vcmp.lt.s32.totalorder %v1928, 0
    %vm1952 = vcmp.lt.s32.totalorder %v1929, 0
    %vm1953 = vcmp.lt.s32.totalorder %v1930, 0
    %vm1954 = vcmp.lt.s32.totalorder %v1931, 0
    %vm1955 = vcmp.lt.s32.totalorder %v1932, 0
    %vm1956 = vcmp.lt.s32.totalorder %v1933, 0
    %vm1957 = vcmp.lt.s32.totalorder %v1934, 0
    %vm1958 = vcmp.lt.s32.totalorder %v1935, 0
    %vm1959 = vcmp.lt.s32.totalorder %v1936, 0
    %vm1960 = vcmp.ge.s32.totalorder %v1914, 90
    %vm1961 = vcmp.ge.s32.totalorder %v1915, 90
    %vm1962 = vcmp.ge.s32.totalorder %v1916, 90
    %vm1963 = vcmp.ge.s32.totalorder %v1917, 90
    %vm1964 = vcmp.ge.s32.totalorder %v1918, 90
    %vm1965 = vcmp.ge.s32.totalorder %v1919, 90
    %vm1966 = vcmp.ge.s32.totalorder %v1920, 90
    %vm1967 = vcmp.ge.s32.totalorder %v1921, 90
    %vm1968 = vcmp.ge.s32.totalorder %v1922, 90
    %vm1969 = vcmp.ge.s32.totalorder %v1923, 90
    %vm1970 = vcmp.ge.s32.totalorder %v1924, 90
    %vm1971 = vcmp.ge.s32.totalorder %v1925, 90
    %vm1972 = vcmp.ge.s32.totalorder %v1926, 90
    %vm1973 = vcmp.ge.s32.totalorder %v1927, 90
    %vm1974 = vcmp.ge.s32.totalorder %v1928, 90
    %vm1975 = vcmp.ge.s32.totalorder %v1929, 90
    %vm1976 = vcmp.ge.s32.totalorder %v1930, 90
    %vm1977 = vcmp.ge.s32.totalorder %v1931, 90
    %vm1978 = vcmp.ge.s32.totalorder %v1932, 90
    %vm1979 = vcmp.ge.s32.totalorder %v1933, 90
    %vm1980 = vcmp.ge.s32.totalorder %v1934, 90
    %vm1981 = vcmp.ge.s32.totalorder %v1935, 90
    %vm1982 = vcmp.ge.s32.totalorder %v1936, 90
    %vm1983 = vcmp.lt.s32.totalorder %v1914, 92
    %vm1984 = vcmp.lt.s32.totalorder %v1915, 92
    %vm1985 = vcmp.lt.s32.totalorder %v1916, 92
    %vm1986 = vcmp.lt.s32.totalorder %v1917, 92
    %vm1987 = vcmp.lt.s32.totalorder %v1918, 92
    %vm1988 = vcmp.lt.s32.totalorder %v1919, 92
    %vm1989 = vcmp.lt.s32.totalorder %v1920, 92
    %vm1990 = vcmp.lt.s32.totalorder %v1921, 92
    %vm1991 = vcmp.lt.s32.totalorder %v1922, 92
    %vm1992 = vcmp.lt.s32.totalorder %v1923, 92
    %vm1993 = vcmp.lt.s32.totalorder %v1924, 92
    %vm1994 = vcmp.lt.s32.totalorder %v1925, 92
    %vm1995 = vcmp.lt.s32.totalorder %v1926, 92
    %vm1996 = vcmp.lt.s32.totalorder %v1927, 92
    %vm1997 = vcmp.lt.s32.totalorder %v1928, 92
    %vm1998 = vcmp.lt.s32.totalorder %v1929, 92
    %vm1999 = vcmp.lt.s32.totalorder %v1930, 92
    %vm2000 = vcmp.lt.s32.totalorder %v1931, 92
    %vm2001 = vcmp.lt.s32.totalorder %v1932, 92
    %vm2002 = vcmp.lt.s32.totalorder %v1933, 92
    %vm2003 = vcmp.lt.s32.totalorder %v1934, 92
    %vm2004 = vcmp.lt.s32.totalorder %v1935, 92
    %vm2005 = vcmp.lt.s32.totalorder %v1936, 92
    %vm2006 = vmand %vm1960, %vm1983
    %vm2007 = vmand %vm1961, %vm1984
    %vm2008 = vmand %vm1962, %vm1985
    %vm2009 = vmand %vm1963, %vm1986
    %vm2010 = vmand %vm1964, %vm1987
    %vm2011 = vmand %vm1965, %vm1988
    %vm2012 = vmand %vm1966, %vm1989
    %vm2013 = vmand %vm1967, %vm1990
    %vm2014 = vmand %vm1968, %vm1991
    %vm2015 = vmand %vm1969, %vm1992
    %vm2016 = vmand %vm1970, %vm1993
    %vm2017 = vmand %vm1971, %vm1994
    %vm2018 = vmand %vm1972, %vm1995
    %vm2019 = vmand %vm1973, %vm1996
    %vm2020 = vmand %vm1974, %vm1997
    %vm2021 = vmand %vm1975, %vm1998
    %vm2022 = vmand %vm1976, %vm1999
    %vm2023 = vmand %vm1977, %vm2000
    %vm2024 = vmand %vm1978, %vm2001
    %vm2025 = vmand %vm1979, %vm2002
    %vm2026 = vmand %vm1980, %vm2003
    %vm2027 = vmand %vm1981, %vm2004
    %vm2028 = vmand %vm1982, %vm2005
    %vm2029 = vmor %vm1937, %vm2006
    %vm2030 = vmor %vm1938, %vm2007
    %vm2031 = vmor %vm1939, %vm2008
    %vm2032 = vmor %vm1940, %vm2009
    %vm2033 = vmor %vm1941, %vm2010
    %vm2034 = vmor %vm1942, %vm2011
    %vm2035 = vmor %vm1943, %vm2012
    %vm2036 = vmor %vm1944, %vm2013
    %vm2037 = vmor %vm1945, %vm2014
    %vm2038 = vmor %vm1946, %vm2015
    %vm2039 = vmor %vm1947, %vm2016
    %vm2040 = vmor %vm1948, %vm2017
    %vm2041 = vmor %vm1949, %vm2018
    %vm2042 = vmor %vm1950, %vm2019
    %vm2043 = vmor %vm1951, %vm2020
    %vm2044 = vmor %vm1952, %vm2021
    %vm2045 = vmor %vm1953, %vm2022
    %vm2046 = vmor %vm1954, %vm2023
    %vm2047 = vmor %vm1955, %vm2024
    %vm2048 = vmor %vm1956, %vm2025
    %vm2049 = vmor %vm1957, %vm2026
    %vm2050 = vmor %vm1958, %vm2027
    %vm2051 = vmor %vm1959, %vm2028
    %v2052 = vsel %vm2029, 0.0, %v1890
    %v2053 = vsel %vm2030, 0.0, %v1891
    %v2054 = vsel %vm2031, 0.0, %v1892
    %v2055 = vsel %vm2032, 0.0, %v1893
    %v2056 = vsel %vm2033, 0.0, %v1894
    %v2057 = vsel %vm2034, 0.0, %v1895
    %v2058 = vsel %vm2035, 0.0, %v1896
    %v2059 = vsel %vm2036, 0.0, %v1897
    %v2060 = vsel %vm2037, 0.0, %v1898
    %v2061 = vsel %vm2038, 0.0, %v1899
    %v2062 = vsel %vm2039, 0.0, %v1900
    %v2063 = vsel %vm2040, 0.0, %v1901
    %v2064 = vsel %vm2041, 0.0, %v1902
    %v2065 = vsel %vm2042, 0.0, %v1903
    %v2066 = vsel %vm2043, 0.0, %v1904
    %v2067 = vsel %vm2044, 0.0, %v1905
    %v2068 = vsel %vm2045, 0.0, %v1906
    %v2069 = vsel %vm2046, 0.0, %v1907
    %v2070 = vsel %vm2047, 0.0, %v1908
    %v2071 = vsel %vm2048, 0.0, %v1909
    %v2072 = vsel %vm2049, 0.0, %v1910
    %v2073 = vsel %vm2050, 0.0, %v1911
    %v2074 = vsel %vm2051, 0.0, %v1912
    %2075 = vst.msk [vmem:[#allocation3 + $0x1] sm:$0xff] %vm80, %v2052
    %2076 = vst.msk [vmem:[#allocation3 + $0x9] sm:$0xff] %vm80, %v2053
    %2077 = vst.msk [vmem:[#allocation3 + $0x11] sm:$0xff] %vm80, %v2054
    %2078 = vst.msk [vmem:[#allocation3 + $0x19] sm:$0xff] %vm80, %v2055
    %2079 = vst.msk [vmem:[#allocation3 + $0x21] sm:$0xff] %vm80, %v2056
    %2080 = vst.msk [vmem:[#allocation3 + $0x29] sm:$0xff] %vm80, %v2057
    %2081 = vst.msk [vmem:[#allocation3 + $0x31] sm:$0xff] %vm80, %v2058
    %2082 = vst.msk [vmem:[#allocation3 + $0x39] sm:$0xff] %vm80, %v2059
    %2083 = vst.msk [vmem:[#allocation3 + $0x41] sm:$0xff] %vm80, %v2060
    %2084 = vst.msk [vmem:[#allocation3 + $0x49] sm:$0xff] %vm80, %v2061
    %2085 = vst.msk [vmem:[#allocation3 + $0x51] sm:$0xff] %vm80, %v2062
    %2086 = vst.msk [vmem:[#allocation3 + $0x59] sm:$0xff] %vm80, %v2063
    %2087 = vst.msk [vmem:[#allocation3 + $0x61] sm:$0xff] %vm80, %v2064
    %2088 = vst.msk [vmem:[#allocation3 + $0x69] sm:$0xff] %vm80, %v2065
    %2089 = vst.msk [vmem:[#allocation3 + $0x71] sm:$0xff] %vm80, %v2066
    %2090 = vst.msk [vmem:[#allocation3 + $0x79] sm:$0xff] %vm80, %v2067
    %2091 = vst.msk [vmem:[#allocation3 + $0x81] sm:$0xff] %vm80, %v2068
    %2092 = vst.msk [vmem:[#allocation3 + $0x89] sm:$0xff] %vm80, %v2069
    %2093 = vst.msk [vmem:[#allocation3 + $0x91] sm:$0xff] %vm80, %v2070
    %2094 = vst.msk [vmem:[#allocation3 + $0x99] sm:$0xff] %vm80, %v2071
    %2095 = vst.msk [vmem:[#allocation3 + $0xa1] sm:$0xff] %vm80, %v2072
    %2096 = vst.msk [vmem:[#allocation3 + $0xa9] sm:$0xff] %vm80, %v2073
    %vm2097 = vcmask 259072
    %2098 = vst.msk [vmem:[#allocation3 + $0xb1] sm:$0x3f] %vm2097, %v2074
    %v2099 = vld [vmem:[#allocation3] ss:$2 sm:$0xff]
    %s2100 = scalar_lea.vmem [#allocation3], 16
    %v2101 = vld [vmem:[%s2100] ss:$2 sm:$0xff]
    %s2102 = scalar_lea.vmem [#allocation3], 32
    %v2103 = vld [vmem:[%s2102] ss:$2 sm:$0xff]
    %s2104 = scalar_lea.vmem [#allocation3], 48
    %v2105 = vld [vmem:[%s2104] ss:$2 sm:$0xff]
    %s2106 = scalar_lea.vmem [#allocation3], 64
    %v2107 = vld [vmem:[%s2106] ss:$2 sm:$0xff]
    %s2108 = scalar_lea.vmem [#allocation3], 80
    %v2109 = vld [vmem:[%s2108] ss:$2 sm:$0xff]
    %s2110 = scalar_lea.vmem [#allocation3], 96
    %v2111 = vld [vmem:[%s2110] ss:$2 sm:$0xff]
    %s2112 = scalar_lea.vmem [#allocation3], 112
    %v2113 = vld [vmem:[%s2112] ss:$2 sm:$0xff]
    %s2114 = scalar_lea.vmem [#allocation3], 128
    %v2115 = vld [vmem:[%s2114] ss:$2 sm:$0xff]
    %s2116 = scalar_lea.vmem [#allocation3], 144
    %v2117 = vld [vmem:[%s2116] ss:$2 sm:$0xff]
    %s2118 = scalar_lea.vmem [#allocation3], 160
    %v2119 = vld [vmem:[%s2118] ss:$2 sm:$0xff]
    %s2120 = scalar_lea.vmem [#allocation3], 176
    %v2121 = vld [vmem:[%s2120] ss:$2 sm:$0x7]
    %v2122 = vld [vmem:[%s3] sm:$0xff]
    %v2123 = vld [vmem:[%s3 + $0x8] sm:$0xff]
    %v2124 = vld [vmem:[%s3 + $0x10] sm:$0xff]
    %v2125 = vld [vmem:[%s3 + $0x18] sm:$0xff]
    %s2126 = scalar_lea.vmem [#allocation3], 1
    %v2127 = vld [vmem:[%s2126] ss:$2 sm:$0xff]
    %s2128 = scalar_lea.vmem [#allocation3], 17
    %v2129 = vld [vmem:[%s2128] ss:$2 sm:$0xff]
    %s2130 = scalar_lea.vmem [#allocation3], 33
    %v2131 = vld [vmem:[%s2130] ss:$2 sm:$0xff]
    %s2132 = scalar_lea.vmem [#allocation3], 49
    %v2133 = vld [vmem:[%s2132] ss:$2 sm:$0xff]
    %s2134 = scalar_lea.vmem [#allocation3], 65
    %v2135 = vld [vmem:[%s2134] ss:$2 sm:$0xff]
    %s2136 = scalar_lea.vmem [#allocation3], 81
    %v2137 = vld [vmem:[%s2136] ss:$2 sm:$0xff]
    %s2138 = scalar_lea.vmem [#allocation3], 97
    %v2139 = vld [vmem:[%s2138] ss:$2 sm:$0xff]
    %s2140 = scalar_lea.vmem [#allocation3], 113
    %v2141 = vld [vmem:[%s2140] ss:$2 sm:$0xff]
    %s2142 = scalar_lea.vmem [#allocation3], 129
    %v2143 = vld [vmem:[%s2142] ss:$2 sm:$0xff]
    %s2144 = scalar_lea.vmem [#allocation3], 145
    %v2145 = vld [vmem:[%s2144] ss:$2 sm:$0xff]
    %s2146 = scalar_lea.vmem [#allocation3], 161
    %v2147 = vld [vmem:[%s2146] ss:$2 sm:$0xff]
    %s2148 = scalar_lea.vmem [#allocation3], 177
    %v2149 = vld [vmem:[%s2148] ss:$2 sm:$0x7]
    %s2150 = scalar_lea.vmem %s3, 32
    %v2151 = vld [vmem:[%s2150] sm:$0xff]
    %v2152 = vld [vmem:[%s2150 + $0x8] sm:$0xff]
    %v2153 = vld [vmem:[%s2150 + $0x10] sm:$0xff]
    %v2154 = vld [vmem:[%s2150 + $0x18] sm:$0xff]
    %v2156 = vsel %vm80, %v2127, 0
    %v2159 = vsel %vm80, %v2129, 0
    %v2162 = vsel %vm80, %v2131, 0
    %v2165 = vsel %vm80, %v2133, 0
    %v2168 = vsel %vm80, %v2135, 0
    %v2171 = vsel %vm80, %v2137, 0
    %v2174 = vsel %vm80, %v2139, 0
    %v2177 = vsel %vm80, %v2141, 0
    %v2180 = vsel %vm80, %v2143, 0
    %v2183 = vsel %vm80, %v2145, 0
    %v2186 = vsel %vm80, %v2147, 0
    %v2189 = vsel %vm80, %v2149, 0
    %2191 = vmatprep.subr.mxu0 0.0
    %2192 = vmatpush1.msra.mxu0 %v2151
    %2193 = vmatprep.subr.mxu0 0.0
    %2194 = vmatpush1.msra.mxu0 %v2152
    %2195 = vmatprep.subr.mxu0 0.0
    %2196 = vmatpush1.msra.mxu0 %v2153
    %2197 = vmatprep.subr.mxu0 0.0
    %2198 = vmatpush1.msra.mxu0 %v2154
    %2199 = vmatprep.subr.mxu0 0.0
    %2200 = vmatpush1.msra.mxu0 0.0
    %2201 = vmatprep.subr.mxu0 0.0
    %2202 = vmatpush1.msra.mxu0 0.0
    %2203 = vmatprep.subr.mxu0 0.0
    %2204 = vmatpush1.msra.mxu0 0.0
    %2205 = vmatprep.subr.mxu0 0.0
    %2206 = vmatpush1.msra.mxu0 0.0
    %2207 = vmatprep.subr.mxu0 0.0
    %2208 = vmatpush1.msra.mxu0 0.0
    %2209 = vmatprep.subr.mxu0 0.0
    %2210 = vmatpush1.msra.mxu0 0.0
    %2211 = vmatprep.subr.mxu0 0.0
    %2212 = vmatpush1.msra.mxu0 0.0
    %2213 = vmatprep.subr.mxu0 0.0
    %2214 = vmatpush1.msra.mxu0 0.0
    %2215 = vmatprep.subr.mxu0 0.0
    %2216 = vmatpush1.msra.mxu0 0.0
    %2217 = vmatprep.subr.mxu0 0.0
    %2218 = vmatpush1.msra.mxu0 0.0
    %2219 = vmatprep.subr.mxu0 0.0
    %2220 = vmatpush1.msra.mxu0 0.0
    %2221 = vmatprep.subr.mxu0 0.0
    %2222 = vmatpush1.msra.mxu0 0.0
    %2223 = vmatprep.subr.mxu0 0.0
    %2224 = vmatpush1.msra.mxu0 0.0
    %2225 = vmatprep.subr.mxu0 0.0
    %2226 = vmatpush1.msra.mxu0 0.0
    %2227 = vmatprep.subr.mxu0 0.0
    %2228 = vmatpush1.msra.mxu0 0.0
    %2229 = vmatprep.subr.mxu0 0.0
    %2230 = vmatpush1.msra.mxu0 0.0
    %2231 = vmatprep.subr.mxu0 0.0
    %2232 = vmatpush1.msra.mxu0 0.0
    %2233 = vmatprep.subr.mxu0 0.0
    %2234 = vmatpush1.msra.mxu0 0.0
    %2235 = vmatprep.subr.mxu0 0.0
    %2236 = vmatpush1.msra.mxu0 0.0
    %2237 = vmatprep.subr.mxu0 0.0
    %2238 = vmatpush1.msra.mxu0 0.0
    %2239 = vmatprep.subr.mxu0 0.0
    %2240 = vmatpush1.msra.mxu0 0.0
    %2241 = vmatprep.subr.mxu0 0.0
    %2242 = vmatpush1.msra.mxu0 0.0
    %2243 = vmatprep.subr.mxu0 0.0
    %2244 = vmatpush1.msra.mxu0 0.0
    %2245 = vmatprep.subr.mxu0 0.0
    %2246 = vmatpush1.msra.mxu0 0.0
    %2247 = vmatprep.subr.mxu0 0.0
    %2248 = vmatpush1.msra.mxu0 0.0
    %2249 = vmatprep.subr.mxu0 0.0
    %2250 = vmatpush1.msra.mxu0 0.0
    %2251 = vmatprep.subr.mxu0 0.0
    %2252 = vmatpush1.msra.mxu0 0.0
    %2253 = vmatprep.subr.mxu0 0.0
    %2254 = vmatpush1.msra.mxu0 0.0
    %2255 = vmatprep.mubr.f32.mxu0 0.0
    %2256 = vmatmul.mubr.f32.gmra.mrb[0].mxu0 %v2156
    %v2257 = vpop.f32.mrb[0].mxu0
    %v2258 = vadd.f32 0.0, %v2257
    %v2259 = vpop.f32.mrb[0].mxu0
    %2260 = vmatprep.mubr.f32.mxu0 0.0
    %2261 = vmatmul.mubr.f32.gmra.mrb[0].mxu0 %v2159
    %v2262 = vpop.f32.mrb[0].mxu0
    %v2263 = vadd.f32 0.0, %v2262
    %v2264 = vpop.f32.mrb[0].mxu0
    %2265 = vmatprep.mubr.f32.mxu0 0.0
    %2266 = vmatmul.mubr.f32.gmra.mrb[0].mxu0 %v2162
    %v2267 = vpop.f32.mrb[0].mxu0
    %v2268 = vadd.f32 0.0, %v2267
    %v2269 = vpop.f32.mrb[0].mxu0
    %2270 = vmatprep.mubr.f32.mxu0 0.0
    %2271 = vmatmul.mubr.f32.gmra.mrb[0].mxu0 %v2165
    %v2272 = vpop.f32.mrb[0].mxu0
    %v2273 = vadd.f32 0.0, %v2272
    %v2274 = vpop.f32.mrb[0].mxu0
    %2275 = vmatprep.mubr.f32.mxu0 0.0
    %2276 = vmatmul.mubr.f32.gmra.mrb[0].mxu0 %v2168
    %v2277 = vpop.f32.mrb[0].mxu0
    %v2278 = vadd.f32 0.0, %v2277
    %v2279 = vpop.f32.mrb[0].mxu0
    %2280 = vmatprep.mubr.f32.mxu0 0.0
    %2281 = vmatmul.mubr.f32.gmra.mrb[0].mxu0 %v2171
    %v2282 = vpop.f32.mrb[0].mxu0
    %v2283 = vadd.f32 0.0, %v2282
    %v2284 = vpop.f32.mrb[0].mxu0
    %2285 = vmatprep.mubr.f32.mxu0 0.0
    %2286 = vmatmul.mubr.f32.gmra.mrb[0].mxu0 %v2174
    %v2287 = vpop.f32.mrb[0].mxu0
    %v2288 = vadd.f32 0.0, %v2287
    %v2289 = vpop.f32.mrb[0].mxu0
    %2290 = vmatprep.mubr.f32.mxu0 0.0
    %2291 = vmatmul.mubr.f32.gmra.mrb[0].mxu0 %v2177
    %v2292 = vpop.f32.mrb[0].mxu0
    %v2293 = vadd.f32 0.0, %v2292
    %v2294 = vpop.f32.mrb[0].mxu0
    %2295 = vmatprep.mubr.f32.mxu0 0.0
    %2296 = vmatmul.mubr.f32.gmra.mrb[0].mxu0 %v2180
    %v2297 = vpop.f32.mrb[0].mxu0
    %v2298 = vadd.f32 0.0, %v2297
    %v2299 = vpop.f32.mrb[0].mxu0
    %2300 = vmatprep.mubr.f32.mxu0 0.0
    %2301 = vmatmul.mubr.f32.gmra.mrb[0].mxu0 %v2183
    %v2302 = vpop.f32.mrb[0].mxu0
    %v2303 = vadd.f32 0.0, %v2302
    %v2304 = vpop.f32.mrb[0].mxu0
    %2305 = vmatprep.mubr.f32.mxu0 0.0
    %2306 = vmatmul.mubr.f32.gmra.mrb[0].mxu0 %v2186
    %v2307 = vpop.f32.mrb[0].mxu0
    %v2308 = vadd.f32 0.0, %v2307
    %v2309 = vpop.f32.mrb[0].mxu0
    %2310 = vmatprep.mubr.f32.mxu0 0.0
    %2311 = vmatmul.mubr.f32.gmra.mrb[0].mxu0 %v2189
    %v2312 = vpop.f32.mrb[0].mxu0
    %v2313 = vadd.f32 0.0, %v2312
    %v2314 = vpop.f32.mrb[0].mxu0
    %2315 = vdwg.mxu0
    %v2317 = vsel %vm80, %v2099, 0
    %v2320 = vsel %vm80, %v2101, 0
    %v2323 = vsel %vm80, %v2103, 0
    %v2326 = vsel %vm80, %v2105, 0
    %v2329 = vsel %vm80, %v2107, 0
    %v2332 = vsel %vm80, %v2109, 0
    %v2335 = vsel %vm80, %v2111, 0
    %v2338 = vsel %vm80, %v2113, 0
    %v2341 = vsel %vm80, %v2115, 0
    %v2344 = vsel %vm80, %v2117, 0
    %v2347 = vsel %vm80, %v2119, 0
    %v2350 = vsel %vm80, %v2121, 0
    %2352 = vmatprep.subr.mxu0 0.0
    %2353 = vmatpush1.msra.mxu0 %v2122
    %2354 = vmatprep.subr.mxu0 0.0
    %2355 = vmatpush1.msra.mxu0 %v2123
    %2356 = vmatprep.subr.mxu0 0.0
    %2357 = vmatpush1.msra.mxu0 %v2124
    %2358 = vmatprep.subr.mxu0 0.0
    %2359 = vmatpush1.msra.mxu0 %v2125
    %2360 = vmatprep.subr.mxu0 0.0
    %2361 = vmatpush1.msra.mxu0 0.0
    %2362 = vmatprep.subr.mxu0 0.0
    %2363 = vmatpush1.msra.mxu0 0.0
    %2364 = vmatprep.subr.mxu0 0.0
    %2365 = vmatpush1.msra.mxu0 0.0
    %2366 = vmatprep.subr.mxu0 0.0
    %2367 = vmatpush1.msra.mxu0 0.0
    %2368 = vmatprep.subr.mxu0 0.0
    %2369 = vmatpush1.msra.mxu0 0.0
    %2370 = vmatprep.subr.mxu0 0.0
    %2371 = vmatpush1.msra.mxu0 0.0
    %2372 = vmatprep.subr.mxu0 0.0
    %2373 = vmatpush1.msra.mxu0 0.0
    %2374 = vmatprep.subr.mxu0 0.0
    %2375 = vmatpush1.msra.mxu0 0.0
    %2376 = vmatprep.subr.mxu0 0.0
    %2377 = vmatpush1.msra.mxu0 0.0
    %2378 = vmatprep.subr.mxu0 0.0
    %2379 = vmatpush1.msra.mxu0 0.0
    %2380 = vmatprep.subr.mxu0 0.0
    %2381 = vmatpush1.msra.mxu0 0.0
    %2382 = vmatprep.subr.mxu0 0.0
    %2383 = vmatpush1.msra.mxu0 0.0
    %2384 = vmatprep.subr.mxu0 0.0
    %2385 = vmatpush1.msra.mxu0 0.0
    %2386 = vmatprep.subr.mxu0 0.0
    %2387 = vmatpush1.msra.mxu0 0.0
    %2388 = vmatprep.subr.mxu0 0.0
    %2389 = vmatpush1.msra.mxu0 0.0
    %2390 = vmatprep.subr.mxu0 0.0
    %2391 = vmatpush1.msra.mxu0 0.0
    %2392 = vmatprep.subr.mxu0 0.0
    %2393 = vmatpush1.msra.mxu0 0.0
    %2394 = vmatprep.subr.mxu0 0.0
    %2395 = vmatpush1.msra.mxu0 0.0
    %2396 = vmatprep.subr.mxu0 0.0
    %2397 = vmatpush1.msra.mxu0 0.0
    %2398 = vmatprep.subr.mxu0 0.0
    %2399 = vmatpush1.msra.mxu0 0.0
    %2400 = vmatprep.subr.mxu0 0.0
    %2401 = vmatpush1.msra.mxu0 0.0
    %2402 = vmatprep.subr.mxu0 0.0
    %2403 = vmatpush1.msra.mxu0 0.0
    %2404 = vmatprep.subr.mxu0 0.0
    %2405 = vmatpush1.msra.mxu0 0.0
    %2406 = vmatprep.subr.mxu0 0.0
    %2407 = vmatpush1.msra.mxu0 0.0
    %2408 = vmatprep.subr.mxu0 0.0
    %2409 = vmatpush1.msra.mxu0 0.0
    %2410 = vmatprep.subr.mxu0 0.0
    %2411 = vmatpush1.msra.mxu0 0.0
    %2412 = vmatprep.subr.mxu0 0.0
    %2413 = vmatpush1.msra.mxu0 0.0
    %2414 = vmatprep.subr.mxu0 0.0
    %2415 = vmatpush1.msra.mxu0 0.0
    %2416 = vmatprep.mubr.f32.mxu0 0.0
    %2417 = vmatmul.mubr.f32.gmra.mrb[0].mxu0 %v2317
    %v2418 = vpop.f32.mrb[0].mxu0
    %v2419 = vadd.f32 %v2258, %v2418
    %v2420 = vpop.f32.mrb[0].mxu0
    %2421 = vmatprep.mubr.f32.mxu0 0.0
    %2422 = vmatmul.mubr.f32.gmra.mrb[0].mxu0 %v2320
    %v2423 = vpop.f32.mrb[0].mxu0
    %v2424 = vadd.f32 %v2263, %v2423
    %v2425 = vpop.f32.mrb[0].mxu0
    %2426 = vmatprep.mubr.f32.mxu0 0.0
    %2427 = vmatmul.mubr.f32.gmra.mrb[0].mxu0 %v2323
    %v2428 = vpop.f32.mrb[0].mxu0
    %v2429 = vadd.f32 %v2268, %v2428
    %v2430 = vpop.f32.mrb[0].mxu0
    %2431 = vmatprep.mubr.f32.mxu0 0.0
    %2432 = vmatmul.mubr.f32.gmra.mrb[0].mxu0 %v2326
    %v2433 = vpop.f32.mrb[0].mxu0
    %v2434 = vadd.f32 %v2273, %v2433
    %v2435 = vpop.f32.mrb[0].mxu0
    %2436 = vmatprep.mubr.f32.mxu0 0.0
    %2437 = vmatmul.mubr.f32.gmra.mrb[0].mxu0 %v2329
    %v2438 = vpop.f32.mrb[0].mxu0
    %v2439 = vadd.f32 %v2278, %v2438
    %v2440 = vpop.f32.mrb[0].mxu0
    %2441 = vmatprep.mubr.f32.mxu0 0.0
    %2442 = vmatmul.mubr.f32.gmra.mrb[0].mxu0 %v2332
    %v2443 = vpop.f32.mrb[0].mxu0
    %v2444 = vadd.f32 %v2283, %v2443
    %v2445 = vpop.f32.mrb[0].mxu0
    %2446 = vmatprep.mubr.f32.mxu0 0.0
    %2447 = vmatmul.mubr.f32.gmra.mrb[0].mxu0 %v2335
    %v2448 = vpop.f32.mrb[0].mxu0
    %v2449 = vadd.f32 %v2288, %v2448
    %v2450 = vpop.f32.mrb[0].mxu0
    %2451 = vmatprep.mubr.f32.mxu0 0.0
    %2452 = vmatmul.mubr.f32.gmra.mrb[0].mxu0 %v2338
    %v2453 = vpop.f32.mrb[0].mxu0
    %v2454 = vadd.f32 %v2293, %v2453
    %v2455 = vpop.f32.mrb[0].mxu0
    %2456 = vmatprep.mubr.f32.mxu0 0.0
    %2457 = vmatmul.mubr.f32.gmra.mrb[0].mxu0 %v2341
    %v2458 = vpop.f32.mrb[0].mxu0
    %v2459 = vadd.f32 %v2298, %v2458
    %v2460 = vpop.f32.mrb[0].mxu0
    %2461 = vmatprep.mubr.f32.mxu0 0.0
    %2462 = vmatmul.mubr.f32.gmra.mrb[0].mxu0 %v2344
    %v2463 = vpop.f32.mrb[0].mxu0
    %v2464 = vadd.f32 %v2303, %v2463
    %v2465 = vpop.f32.mrb[0].mxu0
    %2466 = vmatprep.mubr.f32.mxu0 0.0
    %2467 = vmatmul.mubr.f32.gmra.mrb[0].mxu0 %v2347
    %v2468 = vpop.f32.mrb[0].mxu0
    %v2469 = vadd.f32 %v2308, %v2468
    %v2470 = vpop.f32.mrb[0].mxu0
    %2471 = vmatprep.mubr.f32.mxu0 0.0
    %2472 = vmatmul.mubr.f32.gmra.mrb[0].mxu0 %v2350
    %v2473 = vpop.f32.mrb[0].mxu0
    %v2474 = vadd.f32 %v2313, %v2473
    %v2475 = vpop.f32.mrb[0].mxu0
    %2476 = vdwg.mxu0
    %s2477 = scalar_lea.vmem [#allocation3], 2
    %v2478 = vld [vmem:[%s2477] ss:$2 sm:$0xff]
    %s2479 = scalar_lea.vmem [#allocation3], 18
    %v2480 = vld [vmem:[%s2479] ss:$2 sm:$0xff]
    %s2481 = scalar_lea.vmem [#allocation3], 34
    %v2482 = vld [vmem:[%s2481] ss:$2 sm:$0xff]
    %s2483 = scalar_lea.vmem [#allocation3], 50
    %v2484 = vld [vmem:[%s2483] ss:$2 sm:$0xff]
    %s2485 = scalar_lea.vmem [#allocation3], 66
    %v2486 = vld [vmem:[%s2485] ss:$2 sm:$0xff]
    %s2487 = scalar_lea.vmem [#allocation3], 82
    %v2488 = vld [vmem:[%s2487] ss:$2 sm:$0xff]
    %s2489 = scalar_lea.vmem [#allocation3], 98
    %v2490 = vld [vmem:[%s2489] ss:$2 sm:$0xff]
    %s2491 = scalar_lea.vmem [#allocation3], 114
    %v2492 = vld [vmem:[%s2491] ss:$2 sm:$0xff]
    %s2493 = scalar_lea.vmem [#allocation3], 130
    %v2494 = vld [vmem:[%s2493] ss:$2 sm:$0xff]
    %s2495 = scalar_lea.vmem [#allocation3], 146
    %v2496 = vld [vmem:[%s2495] ss:$2 sm:$0xff]
    %s2497 = scalar_lea.vmem [#allocation3], 162
    %v2498 = vld [vmem:[%s2497] ss:$2 sm:$0xff]
    %s2499 = scalar_lea.vmem [#allocation3], 178
    %v2500 = vld [vmem:[%s2499] ss:$2 sm:$0x7]
    %s2501 = scalar_lea.vmem %s3, 64
    %v2502 = vld [vmem:[%s2501] sm:$0xff]
    %v2503 = vld [vmem:[%s2501 + $0x8] sm:$0xff]
    %v2504 = vld [vmem:[%s2501 + $0x10] sm:$0xff]
    %v2505 = vld [vmem:[%s2501 + $0x18] sm:$0xff]
    %v2507 = vsel %vm80, %v2478, 0
    %v2510 = vsel %vm80, %v2480, 0
    %v2513 = vsel %vm80, %v2482, 0
    %v2516 = vsel %vm80, %v2484, 0
    %v2519 = vsel %vm80, %v2486, 0
    %v2522 = vsel %vm80, %v2488, 0
    %v2525 = vsel %vm80, %v2490, 0
    %v2528 = vsel %vm80, %v2492, 0
    %v2531 = vsel %vm80, %v2494, 0
    %v2534 = vsel %vm80, %v2496, 0
    %v2537 = vsel %vm80, %v2498, 0
    %v2540 = vsel %vm80, %v2500, 0
    %2542 = vmatprep.subr.mxu0 0.0
    %2543 = vmatpush1.msra.mxu0 %v2502
    %2544 = vmatprep.subr.mxu0 0.0
    %2545 = vmatpush1.msra.mxu0 %v2503
    %2546 = vmatprep.subr.mxu0 0.0
    %2547 = vmatpush1.msra.mxu0 %v2504
    %2548 = vmatprep.subr.mxu0 0.0
    %2549 = vmatpush1.msra.mxu0 %v2505
    %2550 = vmatprep.subr.mxu0 0.0
    %2551 = vmatpush1.msra.mxu0 0.0
    %2552 = vmatprep.subr.mxu0 0.0
    %2553 = vmatpush1.msra.mxu0 0.0
    %2554 = vmatprep.subr.mxu0 0.0
    %2555 = vmatpush1.msra.mxu0 0.0
    %2556 = vmatprep.subr.mxu0 0.0
    %2557 = vmatpush1.msra.mxu0 0.0
    %2558 = vmatprep.subr.mxu0 0.0
    %2559 = vmatpush1.msra.mxu0 0.0
    %2560 = vmatprep.subr.mxu0 0.0
    %2561 = vmatpush1.msra.mxu0 0.0
    %2562 = vmatprep.subr.mxu0 0.0
    %2563 = vmatpush1.msra.mxu0 0.0
    %2564 = vmatprep.subr.mxu0 0.0
    %2565 = vmatpush1.msra.mxu0 0.0
    %2566 = vmatprep.subr.mxu0 0.0
    %2567 = vmatpush1.msra.mxu0 0.0
    %2568 = vmatprep.subr.mxu0 0.0
    %2569 = vmatpush1.msra.mxu0 0.0
    %2570 = vmatprep.subr.mxu0 0.0
    %2571 = vmatpush1.msra.mxu0 0.0
    %2572 = vmatprep.subr.mxu0 0.0
    %2573 = vmatpush1.msra.mxu0 0.0
    %2574 = vmatprep.subr.mxu0 0.0
    %2575 = vmatpush1.msra.mxu0 0.0
    %2576 = vmatprep.subr.mxu0 0.0
    %2577 = vmatpush1.msra.mxu0 0.0
    %2578 = vmatprep.subr.mxu0 0.0
    %2579 = vmatpush1.msra.mxu0 0.0
    %2580 = vmatprep.subr.mxu0 0.0
    %2581 = vmatpush1.msra.mxu0 0.0
    %2582 = vmatprep.subr.mxu0 0.0
    %2583 = vmatpush1.msra.mxu0 0.0
    %2584 = vmatprep.subr.mxu0 0.0
    %2585 = vmatpush1.msra.mxu0 0.0
    %2586 = vmatprep.subr.mxu0 0.0
    %2587 = vmatpush1.msra.mxu0 0.0
    %2588 = vmatprep.subr.mxu0 0.0
    %2589 = vmatpush1.msra.mxu0 0.0
    %2590 = vmatprep.subr.mxu0 0.0
    %2591 = vmatpush1.msra.mxu0 0.0
    %2592 = vmatprep.subr.mxu0 0.0
    %2593 = vmatpush1.msra.mxu0 0.0
    %2594 = vmatprep.subr.mxu0 0.0
    %2595 = vmatpush1.msra.mxu0 0.0
    %2596 = vmatprep.subr.mxu0 0.0
    %2597 = vmatpush1.msra.mxu0 0.0
    %2598 = vmatprep.subr.mxu0 0.0
    %2599 = vmatpush1.msra.mxu0 0.0
    %2600 = vmatprep.subr.mxu0 0.0
    %2601 = vmatpush1.msra.mxu0 0.0
    %2602 = vmatprep.subr.mxu0 0.0
    %2603 = vmatpush1.msra.mxu0 0.0
    %2604 = vmatprep.subr.mxu0 0.0
    %2605 = vmatpush1.msra.mxu0 0.0
    %2606 = vmatprep.mubr.f32.mxu0 0.0
    %2607 = vmatmul.mubr.f32.gmra.mrb[0].mxu0 %v2507
    %v2608 = vpop.f32.mrb[0].mxu0
    %v2609 = vadd.f32 0.0, %v2608
    %v2610 = vpop.f32.mrb[0].mxu0
    %2611 = vmatprep.mubr.f32.mxu0 0.0
    %2612 = vmatmul.mubr.f32.gmra.mrb[0].mxu0 %v2510
    %v2613 = vpop.f32.mrb[0].mxu0
    %v2614 = vadd.f32 0.0, %v2613
    %v2615 = vpop.f32.mrb[0].mxu0
    %2616 = vmatprep.mubr.f32.mxu0 0.0
    %2617 = vmatmul.mubr.f32.gmra.mrb[0].mxu0 %v2513
    %v2618 = vpop.f32.mrb[0].mxu0
    %v2619 = vadd.f32 0.0, %v2618
    %v2620 = vpop.f32.mrb[0].mxu0
    %2621 = vmatprep.mubr.f32.mxu0 0.0
    %2622 = vmatmul.mubr.f32.gmra.mrb[0].mxu0 %v2516
    %v2623 = vpop.f32.mrb[0].mxu0
    %v2624 = vadd.f32 0.0, %v2623
    %v2625 = vpop.f32.mrb[0].mxu0
    %2626 = vmatprep.mubr.f32.mxu0 0.0
    %2627 = vmatmul.mubr.f32.gmra.mrb[0].mxu0 %v2519
    %v2628 = vpop.f32.mrb[0].mxu0
    %v2629 = vadd.f32 0.0, %v2628
    %v2630 = vpop.f32.mrb[0].mxu0
    %2631 = vmatprep.mubr.f32.mxu0 0.0
    %2632 = vmatmul.mubr.f32.gmra.mrb[0].mxu0 %v2522
    %v2633 = vpop.f32.mrb[0].mxu0
    %v2634 = vadd.f32 0.0, %v2633
    %v2635 = vpop.f32.mrb[0].mxu0
    %2636 = vmatprep.mubr.f32.mxu0 0.0
    %2637 = vmatmul.mubr.f32.gmra.mrb[0].mxu0 %v2525
    %v2638 = vpop.f32.mrb[0].mxu0
    %v2639 = vadd.f32 0.0, %v2638
    %v2640 = vpop.f32.mrb[0].mxu0
    %2641 = vmatprep.mubr.f32.mxu0 0.0
    %2642 = vmatmul.mubr.f32.gmra.mrb[0].mxu0 %v2528
    %v2643 = vpop.f32.mrb[0].mxu0
    %v2644 = vadd.f32 0.0, %v2643
    %v2645 = vpop.f32.mrb[0].mxu0
    %2646 = vmatprep.mubr.f32.mxu0 0.0
    %2647 = vmatmul.mubr.f32.gmra.mrb[0].mxu0 %v2531
    %v2648 = vpop.f32.mrb[0].mxu0
    %v2649 = vadd.f32 0.0, %v2648
    %v2650 = vpop.f32.mrb[0].mxu0
    %2651 = vmatprep.mubr.f32.mxu0 0.0
    %2652 = vmatmul.mubr.f32.gmra.mrb[0].mxu0 %v2534
    %v2653 = vpop.f32.mrb[0].mxu0
    %v2654 = vadd.f32 0.0, %v2653
    %v2655 = vpop.f32.mrb[0].mxu0
    %2656 = vmatprep.mubr.f32.mxu0 0.0
    %2657 = vmatmul.mubr.f32.gmra.mrb[0].mxu0 %v2537
    %v2658 = vpop.f32.mrb[0].mxu0
    %v2659 = vadd.f32 0.0, %v2658
    %v2660 = vpop.f32.mrb[0].mxu0
    %2661 = vmatprep.mubr.f32.mxu0 0.0
    %2662 = vmatmul.mubr.f32.gmra.mrb[0].mxu0 %v2540
    %v2663 = vpop.f32.mrb[0].mxu0
    %v2664 = vadd.f32 0.0, %v2663
    %v2665 = vpop.f32.mrb[0].mxu0
    %2666 = vdwg.mxu0
    %v2667 = vadd.f32 %v2419, %v2609
    %v2668 = vadd.f32 %v2424, %v2614
    %v2669 = vadd.f32 %v2429, %v2619
    %v2670 = vadd.f32 %v2434, %v2624
    %v2671 = vadd.f32 %v2439, %v2629
    %v2672 = vadd.f32 %v2444, %v2634
    %v2673 = vadd.f32 %v2449, %v2639
    %v2674 = vadd.f32 %v2454, %v2644
    %v2675 = vadd.f32 %v2459, %v2649
    %v2676 = vadd.f32 %v2464, %v2654
    %v2677 = vadd.f32 %v2469, %v2659
    %v2678 = vadd.f32 %v2474, %v2664
    %v2679 = vld [vmem:[%s4] sm:$0x1]
    %v2681 = vlaneseq
    %v2682 = vshrl.u32 %v2681, 7
    %v2683 = vsub.s32 0, %v2682
    %v2684 = vrot.slane %v2679, %v2683
    %v2686 = vadd.f32 %v2667, %v2684
    %v2687 = vadd.f32 %v2668, %v2684
    %v2688 = vadd.f32 %v2669, %v2684
    %v2689 = vadd.f32 %v2670, %v2684
    %v2690 = vadd.f32 %v2671, %v2684
    %v2691 = vadd.f32 %v2672, %v2684
    %v2692 = vadd.f32 %v2673, %v2684
    %v2693 = vadd.f32 %v2674, %v2684
    %v2694 = vadd.f32 %v2675, %v2684
    %v2695 = vadd.f32 %v2676, %v2684
    %v2696 = vadd.f32 %v2677, %v2684
    %v2697 = vadd.f32 %v2678, %v2684
    %v2698 = vmax.f32 %v2686, 0.0
    %v2699 = vmax.f32 %v2687, 0.0
    %v2700 = vmax.f32 %v2688, 0.0
    %v2701 = vmax.f32 %v2689, 0.0
    %v2702 = vmax.f32 %v2690, 0.0
    %v2703 = vmax.f32 %v2691, 0.0
    %v2704 = vmax.f32 %v2692, 0.0
    %v2705 = vmax.f32 %v2693, 0.0
    %v2706 = vmax.f32 %v2694, 0.0
    %v2707 = vmax.f32 %v2695, 0.0
    %v2708 = vmax.f32 %v2696, 0.0
    %v2709 = vmax.f32 %v2697, 0.0
    %2710 = vmatprep.subr.mxu0 0.0
    %2711 = vmatpush1.msra.mxu0 %v2151
    %2712 = vmatprep.subr.mxu0 0.0
    %2713 = vmatpush1.msra.mxu0 %v2152
    %2714 = vmatprep.subr.mxu0 0.0
    %2715 = vmatpush1.msra.mxu0 %v2153
    %2716 = vmatprep.subr.mxu0 0.0
    %2717 = vmatpush1.msra.mxu0 %v2154
    %2718 = vmatprep.subr.mxu0 0.0
    %2719 = vmatpush1.msra.mxu0 0.0
    %2720 = vmatprep.subr.mxu0 0.0
    %2721 = vmatpush1.msra.mxu0 0.0
    %2722 = vmatprep.subr.mxu0 0.0
    %2723 = vmatpush1.msra.mxu0 0.0
    %2724 = vmatprep.subr.mxu0 0.0
    %2725 = vmatpush1.msra.mxu0 0.0
    %2726 = vmatprep.subr.mxu0 0.0
    %2727 = vmatpush1.msra.mxu0 0.0
    %2728 = vmatprep.subr.mxu0 0.0
    %2729 = vmatpush1.msra.mxu0 0.0
    %2730 = vmatprep.subr.mxu0 0.0
    %2731 = vmatpush1.msra.mxu0 0.0
    %2732 = vmatprep.subr.mxu0 0.0
    %2733 = vmatpush1.msra.mxu0 0.0
    %2734 = vmatprep.subr.mxu0 0.0
    %2735 = vmatpush1.msra.mxu0 0.0
    %2736 = vmatprep.subr.mxu0 0.0
    %2737 = vmatpush1.msra.mxu0 0.0
    %2738 = vmatprep.subr.mxu0 0.0
    %2739 = vmatpush1.msra.mxu0 0.0
    %2740 = vmatprep.subr.mxu0 0.0
    %2741 = vmatpush1.msra.mxu0 0.0
    %2742 = vmatprep.subr.mxu0 0.0
    %2743 = vmatpush1.msra.mxu0 0.0
    %2744 = vmatprep.subr.mxu0 0.0
    %2745 = vmatpush1.msra.mxu0 0.0
    %2746 = vmatprep.subr.mxu0 0.0
    %2747 = vmatpush1.msra.mxu0 0.0
    %2748 = vmatprep.subr.mxu0 0.0
    %2749 = vmatpush1.msra.mxu0 0.0
    %2750 = vmatprep.subr.mxu0 0.0
    %2751 = vmatpush1.msra.mxu0 0.0
    %2752 = vmatprep.subr.mxu0 0.0
    %2753 = vmatpush1.msra.mxu0 0.0
    %2754 = vmatprep.subr.mxu0 0.0
    %2755 = vmatpush1.msra.mxu0 0.0
    %2756 = vmatprep.subr.mxu0 0.0
    %2757 = vmatpush1.msra.mxu0 0.0
    %2758 = vmatprep.subr.mxu0 0.0
    %2759 = vmatpush1.msra.mxu0 0.0
    %2760 = vmatprep.subr.mxu0 0.0
    %2761 = vmatpush1.msra.mxu0 0.0
    %2762 = vmatprep.subr.mxu0 0.0
    %2763 = vmatpush1.msra.mxu0 0.0
    %2764 = vmatprep.subr.mxu0 0.0
    %2765 = vmatpush1.msra.mxu0 0.0
    %2766 = vmatprep.subr.mxu0 0.0
    %2767 = vmatpush1.msra.mxu0 0.0
    %2768 = vmatprep.subr.mxu0 0.0
    %2769 = vmatpush1.msra.mxu0 0.0
    %2770 = vmatprep.subr.mxu0 0.0
    %2771 = vmatpush1.msra.mxu0 0.0
    %2772 = vmatprep.subr.mxu0 0.0
    %2773 = vmatpush1.msra.mxu0 0.0
    %2774 = vmatprep.mubr.f32.mxu0 0.0
    %2775 = vmatmul.mubr.f32.gmra.mrb[0].mxu0 %v2507
    %v2776 = vpop.f32.mrb[0].mxu0
    %v2777 = vadd.f32 0.0, %v2776
    %v2778 = vpop.f32.mrb[0].mxu0
    %2779 = vmatprep.mubr.f32.mxu0 0.0
    %2780 = vmatmul.mubr.f32.gmra.mrb[0].mxu0 %v2510
    %v2781 = vpop.f32.mrb[0].mxu0
    %v2782 = vadd.f32 0.0, %v2781
    %v2783 = vpop.f32.mrb[0].mxu0
    %2784 = vmatprep.mubr.f32.mxu0 0.0
    %2785 = vmatmul.mubr.f32.gmra.mrb[0].mxu0 %v2513
    %v2786 = vpop.f32.mrb[0].mxu0
    %v2787 = vadd.f32 0.0, %v2786
    %v2788 = vpop.f32.mrb[0].mxu0
    %2789 = vmatprep.mubr.f32.mxu0 0.0
    %2790 = vmatmul.mubr.f32.gmra.mrb[0].mxu0 %v2516
    %v2791 = vpop.f32.mrb[0].mxu0
    %v2792 = vadd.f32 0.0, %v2791
    %v2793 = vpop.f32.mrb[0].mxu0
    %2794 = vmatprep.mubr.f32.mxu0 0.0
    %2795 = vmatmul.mubr.f32.gmra.mrb[0].mxu0 %v2519
    %v2796 = vpop.f32.mrb[0].mxu0
    %v2797 = vadd.f32 0.0, %v2796
    %v2798 = vpop.f32.mrb[0].mxu0
    %2799 = vmatprep.mubr.f32.mxu0 0.0
    %2800 = vmatmul.mubr.f32.gmra.mrb[0].mxu0 %v2522
    %v2801 = vpop.f32.mrb[0].mxu0
    %v2802 = vadd.f32 0.0, %v2801
    %v2803 = vpop.f32.mrb[0].mxu0
    %2804 = vmatprep.mubr.f32.mxu0 0.0
    %2805 = vmatmul.mubr.f32.gmra.mrb[0].mxu0 %v2525
    %v2806 = vpop.f32.mrb[0].mxu0
    %v2807 = vadd.f32 0.0, %v2806
    %v2808 = vpop.f32.mrb[0].mxu0
    %2809 = vmatprep.mubr.f32.mxu0 0.0
    %2810 = vmatmul.mubr.f32.gmra.mrb[0].mxu0 %v2528
    %v2811 = vpop.f32.mrb[0].mxu0
    %v2812 = vadd.f32 0.0, %v2811
    %v2813 = vpop.f32.mrb[0].mxu0
    %2814 = vmatprep.mubr.f32.mxu0 0.0
    %2815 = vmatmul.mubr.f32.gmra.mrb[0].mxu0 %v2531
    %v2816 = vpop.f32.mrb[0].mxu0
    %v2817 = vadd.f32 0.0, %v2816
    %v2818 = vpop.f32.mrb[0].mxu0
    %2819 = vmatprep.mubr.f32.mxu0 0.0
    %2820 = vmatmul.mubr.f32.gmra.mrb[0].mxu0 %v2534
    %v2821 = vpop.f32.mrb[0].mxu0
    %v2822 = vadd.f32 0.0, %v2821
    %v2823 = vpop.f32.mrb[0].mxu0
    %2824 = vmatprep.mubr.f32.mxu0 0.0
    %2825 = vmatmul.mubr.f32.gmra.mrb[0].mxu0 %v2537
    %v2826 = vpop.f32.mrb[0].mxu0
    %v2827 = vadd.f32 0.0, %v2826
    %v2828 = vpop.f32.mrb[0].mxu0
    %2829 = vmatprep.mubr.f32.mxu0 0.0
    %2830 = vmatmul.mubr.f32.gmra.mrb[0].mxu0 %v2540
    %v2831 = vpop.f32.mrb[0].mxu0
    %v2832 = vadd.f32 0.0, %v2831
    %v2833 = vpop.f32.mrb[0].mxu0
    %2834 = vdwg.mxu0
    %2835 = vmatprep.subr.mxu0 0.0
    %2836 = vmatpush1.msra.mxu0 %v2122
    %2837 = vmatprep.subr.mxu0 0.0
    %2838 = vmatpush1.msra.mxu0 %v2123
    %2839 = vmatprep.subr.mxu0 0.0
    %2840 = vmatpush1.msra.mxu0 %v2124
    %2841 = vmatprep.subr.mxu0 0.0
    %2842 = vmatpush1.msra.mxu0 %v2125
    %2843 = vmatprep.subr.mxu0 0.0
    %2844 = vmatpush1.msra.mxu0 0.0
    %2845 = vmatprep.subr.mxu0 0.0
    %2846 = vmatpush1.msra.mxu0 0.0
    %2847 = vmatprep.subr.mxu0 0.0
    %2848 = vmatpush1.msra.mxu0 0.0
    %2849 = vmatprep.subr.mxu0 0.0
    %2850 = vmatpush1.msra.mxu0 0.0
    %2851 = vmatprep.subr.mxu0 0.0
    %2852 = vmatpush1.msra.mxu0 0.0
    %2853 = vmatprep.subr.mxu0 0.0
    %2854 = vmatpush1.msra.mxu0 0.0
    %2855 = vmatprep.subr.mxu0 0.0
    %2856 = vmatpush1.msra.mxu0 0.0
    %2857 = vmatprep.subr.mxu0 0.0
    %2858 = vmatpush1.msra.mxu0 0.0
    %2859 = vmatprep.subr.mxu0 0.0
    %2860 = vmatpush1.msra.mxu0 0.0
    %2861 = vmatprep.subr.mxu0 0.0
    %2862 = vmatpush1.msra.mxu0 0.0
    %2863 = vmatprep.subr.mxu0 0.0
    %2864 = vmatpush1.msra.mxu0 0.0
    %2865 = vmatprep.subr.mxu0 0.0
    %2866 = vmatpush1.msra.mxu0 0.0
    %2867 = vmatprep.subr.mxu0 0.0
    %2868 = vmatpush1.msra.mxu0 0.0
    %2869 = vmatprep.subr.mxu0 0.0
    %2870 = vmatpush1.msra.mxu0 0.0
    %2871 = vmatprep.subr.mxu0 0.0
    %2872 = vmatpush1.msra.mxu0 0.0
    %2873 = vmatprep.subr.mxu0 0.0
    %2874 = vmatpush1.msra.mxu0 0.0
    %2875 = vmatprep.subr.mxu0 0.0
    %2876 = vmatpush1.msra.mxu0 0.0
    %2877 = vmatprep.subr.mxu0 0.0
    %2878 = vmatpush1.msra.mxu0 0.0
    %2879 = vmatprep.subr.mxu0 0.0
    %2880 = vmatpush1.msra.mxu0 0.0
    %2881 = vmatprep.subr.mxu0 0.0
    %2882 = vmatpush1.msra.mxu0 0.0
    %2883 = vmatprep.subr.mxu0 0.0
    %2884 = vmatpush1.msra.mxu0 0.0
    %2885 = vmatprep.subr.mxu0 0.0
    %2886 = vmatpush1.msra.mxu0 0.0
    %2887 = vmatprep.subr.mxu0 0.0
    %2888 = vmatpush1.msra.mxu0 0.0
    %2889 = vmatprep.subr.mxu0 0.0
    %2890 = vmatpush1.msra.mxu0 0.0
    %2891 = vmatprep.subr.mxu0 0.0
    %2892 = vmatpush1.msra.mxu0 0.0
    %2893 = vmatprep.subr.mxu0 0.0
    %2894 = vmatpush1.msra.mxu0 0.0
    %2895 = vmatprep.subr.mxu0 0.0
    %2896 = vmatpush1.msra.mxu0 0.0
    %2897 = vmatprep.subr.mxu0 0.0
    %2898 = vmatpush1.msra.mxu0 0.0
    %2899 = vmatprep.mubr.f32.mxu0 0.0
    %2900 = vmatmul.mubr.f32.gmra.mrb[0].mxu0 %v2156
    %v2901 = vpop.f32.mrb[0].mxu0
    %v2902 = vadd.f32 %v2777, %v2901
    %v2903 = vpop.f32.mrb[0].mxu0
    %2904 = vmatprep.mubr.f32.mxu0 0.0
    %2905 = vmatmul.mubr.f32.gmra.mrb[0].mxu0 %v2159
    %v2906 = vpop.f32.mrb[0].mxu0
    %v2907 = vadd.f32 %v2782, %v2906
    %v2908 = vpop.f32.mrb[0].mxu0
    %2909 = vmatprep.mubr.f32.mxu0 0.0
    %2910 = vmatmul.mubr.f32.gmra.mrb[0].mxu0 %v2162
    %v2911 = vpop.f32.mrb[0].mxu0
    %v2912 = vadd.f32 %v2787, %v2911
    %v2913 = vpop.f32.mrb[0].mxu0
    %2914 = vmatprep.mubr.f32.mxu0 0.0
    %2915 = vmatmul.mubr.f32.gmra.mrb[0].mxu0 %v2165
    %v2916 = vpop.f32.mrb[0].mxu0
    %v2917 = vadd.f32 %v2792, %v2916
    %v2918 = vpop.f32.mrb[0].mxu0
    %2919 = vmatprep.mubr.f32.mxu0 0.0
    %2920 = vmatmul.mubr.f32.gmra.mrb[0].mxu0 %v2168
    %v2921 = vpop.f32.mrb[0].mxu0
    %v2922 = vadd.f32 %v2797, %v2921
    %v2923 = vpop.f32.mrb[0].mxu0
    %2924 = vmatprep.mubr.f32.mxu0 0.0
    %2925 = vmatmul.mubr.f32.gmra.mrb[0].mxu0 %v2171
    %v2926 = vpop.f32.mrb[0].mxu0
    %v2927 = vadd.f32 %v2802, %v2926
    %v2928 = vpop.f32.mrb[0].mxu0
    %2929 = vmatprep.mubr.f32.mxu0 0.0
    %2930 = vmatmul.mubr.f32.gmra.mrb[0].mxu0 %v2174
    %v2931 = vpop.f32.mrb[0].mxu0
    %v2932 = vadd.f32 %v2807, %v2931
    %v2933 = vpop.f32.mrb[0].mxu0
    %2934 = vmatprep.mubr.f32.mxu0 0.0
    %2935 = vmatmul.mubr.f32.gmra.mrb[0].mxu0 %v2177
    %v2936 = vpop.f32.mrb[0].mxu0
    %v2937 = vadd.f32 %v2812, %v2936
    %v2938 = vpop.f32.mrb[0].mxu0
    %2939 = vmatprep.mubr.f32.mxu0 0.0
    %2940 = vmatmul.mubr.f32.gmra.mrb[0].mxu0 %v2180
    %v2941 = vpop.f32.mrb[0].mxu0
    %v2942 = vadd.f32 %v2817, %v2941
    %v2943 = vpop.f32.mrb[0].mxu0
    %2944 = vmatprep.mubr.f32.mxu0 0.0
    %2945 = vmatmul.mubr.f32.gmra.mrb[0].mxu0 %v2183
    %v2946 = vpop.f32.mrb[0].mxu0
    %v2947 = vadd.f32 %v2822, %v2946
    %v2948 = vpop.f32.mrb[0].mxu0
    %2949 = vmatprep.mubr.f32.mxu0 0.0
    %2950 = vmatmul.mubr.f32.gmra.mrb[0].mxu0 %v2186
    %v2951 = vpop.f32.mrb[0].mxu0
    %v2952 = vadd.f32 %v2827, %v2951
    %v2953 = vpop.f32.mrb[0].mxu0
    %2954 = vmatprep.mubr.f32.mxu0 0.0
    %2955 = vmatmul.mubr.f32.gmra.mrb[0].mxu0 %v2189
    %v2956 = vpop.f32.mrb[0].mxu0
    %v2957 = vadd.f32 %v2832, %v2956
    %v2958 = vpop.f32.mrb[0].mxu0
    %2959 = vdwg.mxu0
    %s2960 = scalar_lea.vmem [#allocation3], 3
    %v2961 = vld [vmem:[%s2960] ss:$2 sm:$0xff]
    %s2962 = scalar_lea.vmem [#allocation3], 19
    %v2963 = vld [vmem:[%s2962] ss:$2 sm:$0xff]
    %s2964 = scalar_lea.vmem [#allocation3], 35
    %v2965 = vld [vmem:[%s2964] ss:$2 sm:$0xff]
    %s2966 = scalar_lea.vmem [#allocation3], 51
    %v2967 = vld [vmem:[%s2966] ss:$2 sm:$0xff]
    %s2968 = scalar_lea.vmem [#allocation3], 67
    %v2969 = vld [vmem:[%s2968] ss:$2 sm:$0xff]
    %s2970 = scalar_lea.vmem [#allocation3], 83
    %v2971 = vld [vmem:[%s2970] ss:$2 sm:$0xff]
    %s2972 = scalar_lea.vmem [#allocation3], 99
    %v2973 = vld [vmem:[%s2972] ss:$2 sm:$0xff]
    %s2974 = scalar_lea.vmem [#allocation3], 115
    %v2975 = vld [vmem:[%s2974] ss:$2 sm:$0xff]
    %s2976 = scalar_lea.vmem [#allocation3], 131
    %v2977 = vld [vmem:[%s2976] ss:$2 sm:$0xff]
    %s2978 = scalar_lea.vmem [#allocation3], 147
    %v2979 = vld [vmem:[%s2978] ss:$2 sm:$0xff]
    %s2980 = scalar_lea.vmem [#allocation3], 163
    %v2981 = vld [vmem:[%s2980] ss:$2 sm:$0xff]
    %s2982 = scalar_lea.vmem [#allocation3], 179
    %v2983 = vld [vmem:[%s2982] ss:$2 sm:$0x7]
    %v2985 = vsel %vm80, %v2961, 0
    %v2988 = vsel %vm80, %v2963, 0
    %v2991 = vsel %vm80, %v2965, 0
    %v2994 = vsel %vm80, %v2967, 0
    %v2997 = vsel %vm80, %v2969, 0
    %v3000 = vsel %vm80, %v2971, 0
    %v3003 = vsel %vm80, %v2973, 0
    %v3006 = vsel %vm80, %v2975, 0
    %v3009 = vsel %vm80, %v2977, 0
    %v3012 = vsel %vm80, %v2979, 0
    %v3015 = vsel %vm80, %v2981, 0
    %v3018 = vsel %vm80, %v2983, 0
    %3020 = vmatprep.subr.mxu0 0.0
    %3021 = vmatpush1.msra.mxu0 %v2502
    %3022 = vmatprep.subr.mxu0 0.0
    %3023 = vmatpush1.msra.mxu0 %v2503
    %3024 = vmatprep.subr.mxu0 0.0
    %3025 = vmatpush1.msra.mxu0 %v2504
    %3026 = vmatprep.subr.mxu0 0.0
    %3027 = vmatpush1.msra.mxu0 %v2505
    %3028 = vmatprep.subr.mxu0 0.0
    %3029 = vmatpush1.msra.mxu0 0.0
    %3030 = vmatprep.subr.mxu0 0.0
    %3031 = vmatpush1.msra.mxu0 0.0
    %3032 = vmatprep.subr.mxu0 0.0
    %3033 = vmatpush1.msra.mxu0 0.0
    %3034 = vmatprep.subr.mxu0 0.0
    %3035 = vmatpush1.msra.mxu0 0.0
    %3036 = vmatprep.subr.mxu0 0.0
    %3037 = vmatpush1.msra.mxu0 0.0
    %3038 = vmatprep.subr.mxu0 0.0
    %3039 = vmatpush1.msra.mxu0 0.0
    %3040 = vmatprep.subr.mxu0 0.0
    %3041 = vmatpush1.msra.mxu0 0.0
    %3042 = vmatprep.subr.mxu0 0.0
    %3043 = vmatpush1.msra.mxu0 0.0
    %3044 = vmatprep.subr.mxu0 0.0
    %3045 = vmatpush1.msra.mxu0 0.0
    %3046 = vmatprep.subr.mxu0 0.0
    %3047 = vmatpush1.msra.mxu0 0.0
    %3048 = vmatprep.subr.mxu0 0.0
    %3049 = vmatpush1.msra.mxu0 0.0
    %3050 = vmatprep.subr.mxu0 0.0
    %3051 = vmatpush1.msra.mxu0 0.0
    %3052 = vmatprep.subr.mxu0 0.0
    %3053 = vmatpush1.msra.mxu0 0.0
    %3054 = vmatprep.subr.mxu0 0.0
    %3055 = vmatpush1.msra.mxu0 0.0
    %3056 = vmatprep.subr.mxu0 0.0
    %3057 = vmatpush1.msra.mxu0 0.0
    %3058 = vmatprep.subr.mxu0 0.0
    %3059 = vmatpush1.msra.mxu0 0.0
    %3060 = vmatprep.subr.mxu0 0.0
    %3061 = vmatpush1.msra.mxu0 0.0
    %3062 = vmatprep.subr.mxu0 0.0
    %3063 = vmatpush1.msra.mxu0 0.0
    %3064 = vmatprep.subr.mxu0 0.0
    %3065 = vmatpush1.msra.mxu0 0.0
    %3066 = vmatprep.subr.mxu0 0.0
    %3067 = vmatpush1.msra.mxu0 0.0
    %3068 = vmatprep.subr.mxu0 0.0
    %3069 = vmatpush1.msra.mxu0 0.0
    %3070 = vmatprep.subr.mxu0 0.0
    %3071 = vmatpush1.msra.mxu0 0.0
    %3072 = vmatprep.subr.mxu0 0.0
    %3073 = vmatpush1.msra.mxu0 0.0
    %3074 = vmatprep.subr.mxu0 0.0
    %3075 = vmatpush1.msra.mxu0 0.0
    %3076 = vmatprep.subr.mxu0 0.0
    %3077 = vmatpush1.msra.mxu0 0.0
    %3078 = vmatprep.subr.mxu0 0.0
    %3079 = vmatpush1.msra.mxu0 0.0
    %3080 = vmatprep.subr.mxu0 0.0
    %3081 = vmatpush1.msra.mxu0 0.0
    %3082 = vmatprep.subr.mxu0 0.0
    %3083 = vmatpush1.msra.mxu0 0.0
    %3084 = vmatprep.mubr.f32.mxu0 0.0
    %3085 = vmatmul.mubr.f32.gmra.mrb[0].mxu0 %v2985
    %v3086 = vpop.f32.mrb[0].mxu0
    %v3087 = vadd.f32 0.0, %v3086
    %v3088 = vpop.f32.mrb[0].mxu0
    %3089 = vmatprep.mubr.f32.mxu0 0.0
    %3090 = vmatmul.mubr.f32.gmra.mrb[0].mxu0 %v2988
    %v3091 = vpop.f32.mrb[0].mxu0
    %v3092 = vadd.f32 0.0, %v3091
    %v3093 = vpop.f32.mrb[0].mxu0
    %3094 = vmatprep.mubr.f32.mxu0 0.0
    %3095 = vmatmul.mubr.f32.gmra.mrb[0].mxu0 %v2991
    %v3096 = vpop.f32.mrb[0].mxu0
    %v3097 = vadd.f32 0.0, %v3096
    %v3098 = vpop.f32.mrb[0].mxu0
    %3099 = vmatprep.mubr.f32.mxu0 0.0
    %3100 = vmatmul.mubr.f32.gmra.mrb[0].mxu0 %v2994
    %v3101 = vpop.f32.mrb[0].mxu0
    %v3102 = vadd.f32 0.0, %v3101
    %v3103 = vpop.f32.mrb[0].mxu0
    %3104 = vmatprep.mubr.f32.mxu0 0.0
    %3105 = vmatmul.mubr.f32.gmra.mrb[0].mxu0 %v2997
    %v3106 = vpop.f32.mrb[0].mxu0
    %v3107 = vadd.f32 0.0, %v3106
    %v3108 = vpop.f32.mrb[0].mxu0
    %3109 = vmatprep.mubr.f32.mxu0 0.0
    %3110 = vmatmul.mubr.f32.gmra.mrb[0].mxu0 %v3000
    %v3111 = vpop.f32.mrb[0].mxu0
    %v3112 = vadd.f32 0.0, %v3111
    %v3113 = vpop.f32.mrb[0].mxu0
    %3114 = vmatprep.mubr.f32.mxu0 0.0
    %3115 = vmatmul.mubr.f32.gmra.mrb[0].mxu0 %v3003
    %v3116 = vpop.f32.mrb[0].mxu0
    %v3117 = vadd.f32 0.0, %v3116
    %v3118 = vpop.f32.mrb[0].mxu0
    %3119 = vmatprep.mubr.f32.mxu0 0.0
    %3120 = vmatmul.mubr.f32.gmra.mrb[0].mxu0 %v3006
    %v3121 = vpop.f32.mrb[0].mxu0
    %v3122 = vadd.f32 0.0, %v3121
    %v3123 = vpop.f32.mrb[0].mxu0
    %3124 = vmatprep.mubr.f32.mxu0 0.0
    %3125 = vmatmul.mubr.f32.gmra.mrb[0].mxu0 %v3009
    %v3126 = vpop.f32.mrb[0].mxu0
    %v3127 = vadd.f32 0.0, %v3126
    %v3128 = vpop.f32.mrb[0].mxu0
    %3129 = vmatprep.mubr.f32.mxu0 0.0
    %3130 = vmatmul.mubr.f32.gmra.mrb[0].mxu0 %v3012
    %v3131 = vpop.f32.mrb[0].mxu0
    %v3132 = vadd.f32 0.0, %v3131
    %v3133 = vpop.f32.mrb[0].mxu0
    %3134 = vmatprep.mubr.f32.mxu0 0.0
    %3135 = vmatmul.mubr.f32.gmra.mrb[0].mxu0 %v3015
    %v3136 = vpop.f32.mrb[0].mxu0
    %v3137 = vadd.f32 0.0, %v3136
    %v3138 = vpop.f32.mrb[0].mxu0
    %3139 = vmatprep.mubr.f32.mxu0 0.0
    %3140 = vmatmul.mubr.f32.gmra.mrb[0].mxu0 %v3018
    %v3141 = vpop.f32.mrb[0].mxu0
    %v3142 = vadd.f32 0.0, %v3141
    %v3143 = vpop.f32.mrb[0].mxu0
    %3144 = vdwg.mxu0
    %v3145 = vadd.f32 %v2902, %v3087
    %v3146 = vadd.f32 %v2907, %v3092
    %v3147 = vadd.f32 %v2912, %v3097
    %v3148 = vadd.f32 %v2917, %v3102
    %v3149 = vadd.f32 %v2922, %v3107
    %v3150 = vadd.f32 %v2927, %v3112
    %v3151 = vadd.f32 %v2932, %v3117
    %v3152 = vadd.f32 %v2937, %v3122
    %v3153 = vadd.f32 %v2942, %v3127
    %v3154 = vadd.f32 %v2947, %v3132
    %v3155 = vadd.f32 %v2952, %v3137
    %v3156 = vadd.f32 %v2957, %v3142
    %v3157 = vadd.f32 %v3145, %v2684
    %v3158 = vadd.f32 %v3146, %v2684
    %v3159 = vadd.f32 %v3147, %v2684
    %v3160 = vadd.f32 %v3148, %v2684
    %v3161 = vadd.f32 %v3149, %v2684
    %v3162 = vadd.f32 %v3150, %v2684
    %v3163 = vadd.f32 %v3151, %v2684
    %v3164 = vadd.f32 %v3152, %v2684
    %v3165 = vadd.f32 %v3153, %v2684
    %v3166 = vadd.f32 %v3154, %v2684
    %v3167 = vadd.f32 %v3155, %v2684
    %v3168 = vadd.f32 %v3156, %v2684
    %v3169 = vmax.f32 %v3157, 0.0
    %v3170 = vmax.f32 %v3158, 0.0
    %v3171 = vmax.f32 %v3159, 0.0
    %v3172 = vmax.f32 %v3160, 0.0
    %v3173 = vmax.f32 %v3161, 0.0
    %v3174 = vmax.f32 %v3162, 0.0
    %v3175 = vmax.f32 %v3163, 0.0
    %v3176 = vmax.f32 %v3164, 0.0
    %v3177 = vmax.f32 %v3165, 0.0
    %v3178 = vmax.f32 %v3166, 0.0
    %v3179 = vmax.f32 %v3167, 0.0
    %v3180 = vmax.f32 %v3168, 0.0
    %v3181 = vmax.f32 %v2698, %v3169
    %v3182 = vmax.f32 %v2699, %v3170
    %v3183 = vmax.f32 %v2700, %v3171
    %v3184 = vmax.f32 %v2701, %v3172
    %v3185 = vmax.f32 %v2702, %v3173
    %v3186 = vmax.f32 %v2703, %v3174
    %v3187 = vmax.f32 %v2704, %v3175
    %v3188 = vmax.f32 %v2705, %v3176
    %v3189 = vmax.f32 %v2706, %v3177
    %v3190 = vmax.f32 %v2707, %v3178
    %v3191 = vmax.f32 %v2708, %v3179
    %v3192 = vmax.f32 %v2709, %v3180
    %v3193 = vld [vmem:[%s5] sm:$0xff]
    %v3194 = vld [vmem:[%s5 + $0x8] sm:$0xff]
    %v3195 = vld [vmem:[%s5 + $0x10] sm:$0xff]
    %v3196 = vld [vmem:[%s5 + $0x18] sm:$0xff]
    %v3197 = vld [vmem:[%s5 + $0x20] sm:$0xff]
    %v3198 = vld [vmem:[%s5 + $0x28] sm:$0xff]
    %v3199 = vld [vmem:[%s5 + $0x30] sm:$0xff]
    %v3200 = vld [vmem:[%s5 + $0x38] sm:$0xff]
    %v3201 = vld [vmem:[%s5 + $0x40] sm:$0xff]
    %v3202 = vld [vmem:[%s5 + $0x48] sm:$0xff]
    %v3203 = vld [vmem:[%s5 + $0x50] sm:$0xff]
    %v3204 = vld [vmem:[%s5 + $0x58] sm:$0x7]
    %3206 = vset.pattern.permute.xlu0 0
    %3207 = vperm.xlu0 %3206, %v3181
    %v3208 = vpop.permute.xlu0 %3207
    %3211 = vset.pattern.permute.xlu0 0
    %3212 = vperm.xlu0 %3211, %v3182
    %v3213 = vpop.permute.xlu0 %3212
    %3216 = vset.pattern.permute.xlu0 0
    %3217 = vperm.xlu0 %3216, %v3183
    %v3218 = vpop.permute.xlu0 %3217
    %3221 = vset.pattern.permute.xlu0 0
    %3222 = vperm.xlu0 %3221, %v3184
    %v3223 = vpop.permute.xlu0 %3222
    %3226 = vset.pattern.permute.xlu0 0
    %3227 = vperm.xlu0 %3226, %v3185
    %v3228 = vpop.permute.xlu0 %3227
    %3231 = vset.pattern.permute.xlu0 0
    %3232 = vperm.xlu0 %3231, %v3186
    %v3233 = vpop.permute.xlu0 %3232
    %3236 = vset.pattern.permute.xlu0 0
    %3237 = vperm.xlu0 %3236, %v3187
    %v3238 = vpop.permute.xlu0 %3237
    %3241 = vset.pattern.permute.xlu0 0
    %3242 = vperm.xlu0 %3241, %v3188
    %v3243 = vpop.permute.xlu0 %3242
    %3246 = vset.pattern.permute.xlu0 0
    %3247 = vperm.xlu0 %3246, %v3189
    %v3248 = vpop.permute.xlu0 %3247
    %3251 = vset.pattern.permute.xlu0 0
    %3252 = vperm.xlu0 %3251, %v3190
    %v3253 = vpop.permute.xlu0 %3252
    %3256 = vset.pattern.permute.xlu0 0
    %3257 = vperm.xlu0 %3256, %v3191
    %v3258 = vpop.permute.xlu0 %3257
    %3261 = vset.pattern.permute.xlu0 0
    %3262 = vperm.xlu0 %3261, %v3192
    %v3263 = vpop.permute.xlu0 %3262
    %v3265 = vmul.f32 %v3208, %v3193
    %v3266 = vmul.f32 %v3213, %v3194
    %v3267 = vmul.f32 %v3218, %v3195
    %v3268 = vmul.f32 %v3223, %v3196
    %v3269 = vmul.f32 %v3228, %v3197
    %v3270 = vmul.f32 %v3233, %v3198
    %v3271 = vmul.f32 %v3238, %v3199
    %v3272 = vmul.f32 %v3243, %v3200
    %v3273 = vmul.f32 %v3248, %v3201
    %v3274 = vmul.f32 %v3253, %v3202
    %v3275 = vmul.f32 %v3258, %v3203
    %v3276 = vmul.f32 %v3263, %v3204
    %s3277 = scalar_lea.vmem %s5, 96
    %v3278 = vld [vmem:[%s3277] sm:$0xff]
    %v3279 = vld [vmem:[%s3277 + $0x8] sm:$0xff]
    %v3280 = vld [vmem:[%s3277 + $0x10] sm:$0xff]
    %v3281 = vld [vmem:[%s3277 + $0x18] sm:$0xff]
    %v3282 = vld [vmem:[%s3277 + $0x20] sm:$0xff]
    %v3283 = vld [vmem:[%s3277 + $0x28] sm:$0xff]
    %v3284 = vld [vmem:[%s3277 + $0x30] sm:$0xff]
    %v3285 = vld [vmem:[%s3277 + $0x38] sm:$0xff]
    %v3286 = vld [vmem:[%s3277 + $0x40] sm:$0xff]
    %v3287 = vld [vmem:[%s3277 + $0x48] sm:$0xff]
    %v3288 = vld [vmem:[%s3277 + $0x50] sm:$0xff]
    %v3289 = vld [vmem:[%s3277 + $0x58] sm:$0x7]
    %3290 = vset.pattern.permute.xlu0 1
    %3291 = vperm.xlu0 %3290, %v3181
    %v3292 = vpop.permute.xlu0 %3291
    %3294 = vset.pattern.permute.xlu0 1
    %3295 = vperm.xlu0 %3294, %v3182
    %v3296 = vpop.permute.xlu0 %3295
    %3298 = vset.pattern.permute.xlu0 1
    %3299 = vperm.xlu0 %3298, %v3183
    %v3300 = vpop.permute.xlu0 %3299
    %3302 = vset.pattern.permute.xlu0 1
    %3303 = vperm.xlu0 %3302, %v3184
    %v3304 = vpop.permute.xlu0 %3303
    %3306 = vset.pattern.permute.xlu0 1
    %3307 = vperm.xlu0 %3306, %v3185
    %v3308 = vpop.permute.xlu0 %3307
    %3310 = vset.pattern.permute.xlu0 1
    %3311 = vperm.xlu0 %3310, %v3186
    %v3312 = vpop.permute.xlu0 %3311
    %3314 = vset.pattern.permute.xlu0 1
    %3315 = vperm.xlu0 %3314, %v3187
    %v3316 = vpop.permute.xlu0 %3315
    %3318 = vset.pattern.permute.xlu0 1
    %3319 = vperm.xlu0 %3318, %v3188
    %v3320 = vpop.permute.xlu0 %3319
    %3322 = vset.pattern.permute.xlu0 1
    %3323 = vperm.xlu0 %3322, %v3189
    %v3324 = vpop.permute.xlu0 %3323
    %3326 = vset.pattern.permute.xlu0 1
    %3327 = vperm.xlu0 %3326, %v3190
    %v3328 = vpop.permute.xlu0 %3327
    %3330 = vset.pattern.permute.xlu0 1
    %3331 = vperm.xlu0 %3330, %v3191
    %v3332 = vpop.permute.xlu0 %3331
    %3334 = vset.pattern.permute.xlu0 1
    %3335 = vperm.xlu0 %3334, %v3192
    %v3336 = vpop.permute.xlu0 %3335
    %v3338 = vmul.f32 %v3292, %v3278
    %v3339 = vmul.f32 %v3296, %v3279
    %v3340 = vmul.f32 %v3300, %v3280
    %v3341 = vmul.f32 %v3304, %v3281
    %v3342 = vmul.f32 %v3308, %v3282
    %v3343 = vmul.f32 %v3312, %v3283
    %v3344 = vmul.f32 %v3316, %v3284
    %v3345 = vmul.f32 %v3320, %v3285
    %v3346 = vmul.f32 %v3324, %v3286
    %v3347 = vmul.f32 %v3328, %v3287
    %v3348 = vmul.f32 %v3332, %v3288
    %v3349 = vmul.f32 %v3336, %v3289
    %v3350 = vadd.f32 %v3265, %v3338
    %v3351 = vadd.f32 %v3266, %v3339
    %v3352 = vadd.f32 %v3267, %v3340
    %v3353 = vadd.f32 %v3268, %v3341
    %v3354 = vadd.f32 %v3269, %v3342
    %v3355 = vadd.f32 %v3270, %v3343
    %v3356 = vadd.f32 %v3271, %v3344
    %v3357 = vadd.f32 %v3272, %v3345
    %v3358 = vadd.f32 %v3273, %v3346
    %v3359 = vadd.f32 %v3274, %v3347
    %v3360 = vadd.f32 %v3275, %v3348
    %v3361 = vadd.f32 %v3276, %v3349
    %s3362 = scalar_lea.vmem %s5, 192
    %v3363 = vld [vmem:[%s3362] sm:$0xff]
    %v3364 = vld [vmem:[%s3362 + $0x8] sm:$0xff]
    %v3365 = vld [vmem:[%s3362 + $0x10] sm:$0xff]
    %v3366 = vld [vmem:[%s3362 + $0x18] sm:$0xff]
    %v3367 = vld [vmem:[%s3362 + $0x20] sm:$0xff]
    %v3368 = vld [vmem:[%s3362 + $0x28] sm:$0xff]
    %v3369 = vld [vmem:[%s3362 + $0x30] sm:$0xff]
    %v3370 = vld [vmem:[%s3362 + $0x38] sm:$0xff]
    %v3371 = vld [vmem:[%s3362 + $0x40] sm:$0xff]
    %v3372 = vld [vmem:[%s3362 + $0x48] sm:$0xff]
    %v3373 = vld [vmem:[%s3362 + $0x50] sm:$0xff]
    %v3374 = vld [vmem:[%s3362 + $0x58] sm:$0x7]
    %3375 = vset.pattern.permute.xlu0 2
    %3376 = vperm.xlu0 %3375, %v3181
    %v3377 = vpop.permute.xlu0 %3376
    %3379 = vset.pattern.permute.xlu0 2
    %3380 = vperm.xlu0 %3379, %v3182
    %v3381 = vpop.permute.xlu0 %3380
    %3383 = vset.pattern.permute.xlu0 2
    %3384 = vperm.xlu0 %3383, %v3183
    %v3385 = vpop.permute.xlu0 %3384
    %3387 = vset.pattern.permute.xlu0 2
    %3388 = vperm.xlu0 %3387, %v3184
    %v3389 = vpop.permute.xlu0 %3388
    %3391 = vset.pattern.permute.xlu0 2
    %3392 = vperm.xlu0 %3391, %v3185
    %v3393 = vpop.permute.xlu0 %3392
    %3395 = vset.pattern.permute.xlu0 2
    %3396 = vperm.xlu0 %3395, %v3186
    %v3397 = vpop.permute.xlu0 %3396
    %3399 = vset.pattern.permute.xlu0 2
    %3400 = vperm.xlu0 %3399, %v3187
    %v3401 = vpop.permute.xlu0 %3400
    %3403 = vset.pattern.permute.xlu0 2
    %3404 = vperm.xlu0 %3403, %v3188
    %v3405 = vpop.permute.xlu0 %3404
    %3407 = vset.pattern.permute.xlu0 2
    %3408 = vperm.xlu0 %3407, %v3189
    %v3409 = vpop.permute.xlu0 %3408
    %3411 = vset.pattern.permute.xlu0 2
    %3412 = vperm.xlu0 %3411, %v3190
    %v3413 = vpop.permute.xlu0 %3412
    %3415 = vset.pattern.permute.xlu0 2
    %3416 = vperm.xlu0 %3415, %v3191
    %v3417 = vpop.permute.xlu0 %3416
    %3419 = vset.pattern.permute.xlu0 2
    %3420 = vperm.xlu0 %3419, %v3192
    %v3421 = vpop.permute.xlu0 %3420
    %v3423 = vmul.f32 %v3377, %v3363
    %v3424 = vmul.f32 %v3381, %v3364
    %v3425 = vmul.f32 %v3385, %v3365
    %v3426 = vmul.f32 %v3389, %v3366
    %v3427 = vmul.f32 %v3393, %v3367
    %v3428 = vmul.f32 %v3397, %v3368
    %v3429 = vmul.f32 %v3401, %v3369
    %v3430 = vmul.f32 %v3405, %v3370
    %v3431 = vmul.f32 %v3409, %v3371
    %v3432 = vmul.f32 %v3413, %v3372
    %v3433 = vmul.f32 %v3417, %v3373
    %v3434 = vmul.f32 %v3421, %v3374
    %v3435 = vadd.f32 %v3350, %v3423
    %v3436 = vadd.f32 %v3351, %v3424
    %v3437 = vadd.f32 %v3352, %v3425
    %v3438 = vadd.f32 %v3353, %v3426
    %v3439 = vadd.f32 %v3354, %v3427
    %v3440 = vadd.f32 %v3355, %v3428
    %v3441 = vadd.f32 %v3356, %v3429
    %v3442 = vadd.f32 %v3357, %v3430
    %v3443 = vadd.f32 %v3358, %v3431
    %v3444 = vadd.f32 %v3359, %v3432
    %v3445 = vadd.f32 %v3360, %v3433
    %v3446 = vadd.f32 %v3361, %v3434
    %s3447 = scalar_lea.vmem %s5, 288
    %v3448 = vld [vmem:[%s3447] sm:$0xff]
    %v3449 = vld [vmem:[%s3447 + $0x8] sm:$0xff]
    %v3450 = vld [vmem:[%s3447 + $0x10] sm:$0xff]
    %v3451 = vld [vmem:[%s3447 + $0x18] sm:$0xff]
    %v3452 = vld [vmem:[%s3447 + $0x20] sm:$0xff]
    %v3453 = vld [vmem:[%s3447 + $0x28] sm:$0xff]
    %v3454 = vld [vmem:[%s3447 + $0x30] sm:$0xff]
    %v3455 = vld [vmem:[%s3447 + $0x38] sm:$0xff]
    %v3456 = vld [vmem:[%s3447 + $0x40] sm:$0xff]
    %v3457 = vld [vmem:[%s3447 + $0x48] sm:$0xff]
    %v3458 = vld [vmem:[%s3447 + $0x50] sm:$0xff]
    %v3459 = vld [vmem:[%s3447 + $0x58] sm:$0x7]
    %3460 = vset.pattern.permute.xlu0 3
    %3461 = vperm.xlu0 %3460, %v3181
    %v3462 = vpop.permute.xlu0 %3461
    %3464 = vset.pattern.permute.xlu0 3
    %3465 = vperm.xlu0 %3464, %v3182
    %v3466 = vpop.permute.xlu0 %3465
    %3468 = vset.pattern.permute.xlu0 3
    %3469 = vperm.xlu0 %3468, %v3183
    %v3470 = vpop.permute.xlu0 %3469
    %3472 = vset.pattern.permute.xlu0 3
    %3473 = vperm.xlu0 %3472, %v3184
    %v3474 = vpop.permute.xlu0 %3473
    %3476 = vset.pattern.permute.xlu0 3
    %3477 = vperm.xlu0 %3476, %v3185
    %v3478 = vpop.permute.xlu0 %3477
    %3480 = vset.pattern.permute.xlu0 3
    %3481 = vperm.xlu0 %3480, %v3186
    %v3482 = vpop.permute.xlu0 %3481
    %3484 = vset.pattern.permute.xlu0 3
    %3485 = vperm.xlu0 %3484, %v3187
    %v3486 = vpop.permute.xlu0 %3485
    %3488 = vset.pattern.permute.xlu0 3
    %3489 = vperm.xlu0 %3488, %v3188
    %v3490 = vpop.permute.xlu0 %3489
    %3492 = vset.pattern.permute.xlu0 3
    %3493 = vperm.xlu0 %3492, %v3189
    %v3494 = vpop.permute.xlu0 %3493
    %3496 = vset.pattern.permute.xlu0 3
    %3497 = vperm.xlu0 %3496, %v3190
    %v3498 = vpop.permute.xlu0 %3497
    %3500 = vset.pattern.permute.xlu0 3
    %3501 = vperm.xlu0 %3500, %v3191
    %v3502 = vpop.permute.xlu0 %3501
    %3504 = vset.pattern.permute.xlu0 3
    %3505 = vperm.xlu0 %3504, %v3192
    %v3506 = vpop.permute.xlu0 %3505
    %v3508 = vmul.f32 %v3462, %v3448
    %v3509 = vmul.f32 %v3466, %v3449
    %v3510 = vmul.f32 %v3470, %v3450
    %v3511 = vmul.f32 %v3474, %v3451
    %v3512 = vmul.f32 %v3478, %v3452
    %v3513 = vmul.f32 %v3482, %v3453
    %v3514 = vmul.f32 %v3486, %v3454
    %v3515 = vmul.f32 %v3490, %v3455
    %v3516 = vmul.f32 %v3494, %v3456
    %v3517 = vmul.f32 %v3498, %v3457
    %v3518 = vmul.f32 %v3502, %v3458
    %v3519 = vmul.f32 %v3506, %v3459
    %v3520 = vadd.f32 %v3435, %v3508
    %v3521 = vadd.f32 %v3436, %v3509
    %v3522 = vadd.f32 %v3437, %v3510
    %v3523 = vadd.f32 %v3438, %v3511
    %v3524 = vadd.f32 %v3439, %v3512
    %v3525 = vadd.f32 %v3440, %v3513
    %v3526 = vadd.f32 %v3441, %v3514
    %v3527 = vadd.f32 %v3442, %v3515
    %v3528 = vadd.f32 %v3443, %v3516
    %v3529 = vadd.f32 %v3444, %v3517
    %v3530 = vadd.f32 %v3445, %v3518
    %v3531 = vadd.f32 %v3446, %v3519
    %s3532 = scalar_lea.vmem %s5, 384
    %v3533 = vld [vmem:[%s3532] sm:$0xff]
    %v3534 = vld [vmem:[%s3532 + $0x8] sm:$0xff]
    %v3535 = vld [vmem:[%s3532 + $0x10] sm:$0xff]
    %v3536 = vld [vmem:[%s3532 + $0x18] sm:$0xff]
    %v3537 = vld [vmem:[%s3532 + $0x20] sm:$0xff]
    %v3538 = vld [vmem:[%s3532 + $0x28] sm:$0xff]
    %v3539 = vld [vmem:[%s3532 + $0x30] sm:$0xff]
    %v3540 = vld [vmem:[%s3532 + $0x38] sm:$0xff]
    %v3541 = vld [vmem:[%s3532 + $0x40] sm:$0xff]
    %v3542 = vld [vmem:[%s3532 + $0x48] sm:$0xff]
    %v3543 = vld [vmem:[%s3532 + $0x50] sm:$0xff]
    %v3544 = vld [vmem:[%s3532 + $0x58] sm:$0x7]
    %3545 = vset.pattern.permute.xlu0 4
    %3546 = vperm.xlu0 %3545, %v3181
    %v3547 = vpop.permute.xlu0 %3546
    %3549 = vset.pattern.permute.xlu0 4
    %3550 = vperm.xlu0 %3549, %v3182
    %v3551 = vpop.permute.xlu0 %3550
    %3553 = vset.pattern.permute.xlu0 4
    %3554 = vperm.xlu0 %3553, %v3183
    %v3555 = vpop.permute.xlu0 %3554
    %3557 = vset.pattern.permute.xlu0 4
    %3558 = vperm.xlu0 %3557, %v3184
    %v3559 = vpop.permute.xlu0 %3558
    %3561 = vset.pattern.permute.xlu0 4
    %3562 = vperm.xlu0 %3561, %v3185
    %v3563 = vpop.permute.xlu0 %3562
    %3565 = vset.pattern.permute.xlu0 4
    %3566 = vperm.xlu0 %3565, %v3186
    %v3567 = vpop.permute.xlu0 %3566
    %3569 = vset.pattern.permute.xlu0 4
    %3570 = vperm.xlu0 %3569, %v3187
    %v3571 = vpop.permute.xlu0 %3570
    %3573 = vset.pattern.permute.xlu0 4
    %3574 = vperm.xlu0 %3573, %v3188
    %v3575 = vpop.permute.xlu0 %3574
    %3577 = vset.pattern.permute.xlu0 4
    %3578 = vperm.xlu0 %3577, %v3189
    %v3579 = vpop.permute.xlu0 %3578
    %3581 = vset.pattern.permute.xlu0 4
    %3582 = vperm.xlu0 %3581, %v3190
    %v3583 = vpop.permute.xlu0 %3582
    %3585 = vset.pattern.permute.xlu0 4
    %3586 = vperm.xlu0 %3585, %v3191
    %v3587 = vpop.permute.xlu0 %3586
    %3589 = vset.pattern.permute.xlu0 4
    %3590 = vperm.xlu0 %3589, %v3192
    %v3591 = vpop.permute.xlu0 %3590
    %v3593 = vmul.f32 %v3547, %v3533
    %v3594 = vmul.f32 %v3551, %v3534
    %v3595 = vmul.f32 %v3555, %v3535
    %v3596 = vmul.f32 %v3559, %v3536
    %v3597 = vmul.f32 %v3563, %v3537
    %v3598 = vmul.f32 %v3567, %v3538
    %v3599 = vmul.f32 %v3571, %v3539
    %v3600 = vmul.f32 %v3575, %v3540
    %v3601 = vmul.f32 %v3579, %v3541
    %v3602 = vmul.f32 %v3583, %v3542
    %v3603 = vmul.f32 %v3587, %v3543
    %v3604 = vmul.f32 %v3591, %v3544
    %v3605 = vadd.f32 %v3520, %v3593
    %v3606 = vadd.f32 %v3521, %v3594
    %v3607 = vadd.f32 %v3522, %v3595
    %v3608 = vadd.f32 %v3523, %v3596
    %v3609 = vadd.f32 %v3524, %v3597
    %v3610 = vadd.f32 %v3525, %v3598
    %v3611 = vadd.f32 %v3526, %v3599
    %v3612 = vadd.f32 %v3527, %v3600
    %v3613 = vadd.f32 %v3528, %v3601
    %v3614 = vadd.f32 %v3529, %v3602
    %v3615 = vadd.f32 %v3530, %v3603
    %v3616 = vadd.f32 %v3531, %v3604
    %v3617 = vlaneseq
    %v3618 = vand.u32 %v3617, 127
    %v3619 = vmul.u32 %v1914, 46
    %vm3620 = vcmp.ge.s32.totalorder %v3618, %v3619
    %v3621 = vadd.s32 %v3619, 45
    %vm3622 = vcmp.lt.s32.totalorder %v3618, %v3621
    %vm3623 = vmand %vm3620, %vm3622
    %v3624 = vsel %vm3623, 1, 0
    %v3625 = vcvt.s32.f32 %v3624
    %v3626 = vld [vmem:[%s6] sm:$0x1]
    %v3628 = vlaneseq
    %v3629 = vshrl.u32 %v3628, 7
    %v3630 = vsub.s32 0, %v3629
    %v3631 = vrot.slane %v3626, %v3630
    %vm3633 = vcmask 744448
    %v3635 = vsel %vm3633, %v3625, 0
    %vm3637 = vcmask 1042432
    %v3639 = vsel %vm3637, %v3616, 0
    %3641 = vmatprep.subr.mxu0 0.0
    %3642 = vmatpush1.msra.mxu0 %v3605
    %3643 = vmatprep.subr.mxu0 0.0
    %3644 = vmatpush1.msra.mxu0 %v3606
    %3645 = vmatprep.subr.mxu0 0.0
    %3646 = vmatpush1.msra.mxu0 %v3607
    %3647 = vmatprep.subr.mxu0 0.0
    %3648 = vmatpush1.msra.mxu0 %v3608
    %3649 = vmatprep.subr.mxu0 0.0
    %3650 = vmatpush1.msra.mxu0 %v3609
    %3651 = vmatprep.subr.mxu0 0.0
    %3652 = vmatpush1.msra.mxu0 %v3610
    %3653 = vmatprep.subr.mxu0 0.0
    %3654 = vmatpush1.msra.mxu0 %v3611
    %3655 = vmatprep.subr.mxu0 0.0
    %3656 = vmatpush1.msra.mxu0 %v3612
    %3657 = vmatprep.subr.mxu0 0.0
    %3658 = vmatpush1.msra.mxu0 %v3613
    %3659 = vmatprep.subr.mxu0 0.0
    %3660 = vmatpush1.msra.mxu0 %v3614
    %3661 = vmatprep.subr.mxu0 0.0
    %3662 = vmatpush1.msra.mxu0 %v3615
    %3663 = vmatprep.subr.mxu0 0.0
    %3664 = vmatpush1.msra.mxu0 %v3639
    %3665 = vmatprep.subr.mxu0 0.0
    %3666 = vmatpush1.msra.mxu0 0.0
    %3667 = vmatprep.subr.mxu0 0.0
    %3668 = vmatpush1.msra.mxu0 0.0
    %3669 = vmatprep.subr.mxu0 0.0
    %3670 = vmatpush1.msra.mxu0 0.0
    %3671 = vmatprep.subr.mxu0 0.0
    %3672 = vmatpush1.msra.mxu0 0.0
    %3673 = vmatprep.subr.mxu0 0.0
    %3674 = vmatpush1.msra.mxu0 0.0
    %3675 = vmatprep.subr.mxu0 0.0
    %3676 = vmatpush1.msra.mxu0 0.0
    %3677 = vmatprep.subr.mxu0 0.0
    %3678 = vmatpush1.msra.mxu0 0.0
    %3679 = vmatprep.subr.mxu0 0.0
    %3680 = vmatpush1.msra.mxu0 0.0
    %3681 = vmatprep.subr.mxu0 0.0
    %3682 = vmatpush1.msra.mxu0 0.0
    %3683 = vmatprep.subr.mxu0 0.0
    %3684 = vmatpush1.msra.mxu0 0.0
    %3685 = vmatprep.subr.mxu0 0.0
    %3686 = vmatpush1.msra.mxu0 0.0
    %3687 = vmatprep.subr.mxu0 0.0
    %3688 = vmatpush1.msra.mxu0 0.0
    %3689 = vmatprep.subr.mxu0 0.0
    %3690 = vmatpush1.msra.mxu0 0.0
    %3691 = vmatprep.subr.mxu0 0.0
    %3692 = vmatpush1.msra.mxu0 0.0
    %3693 = vmatprep.subr.mxu0 0.0
    %3694 = vmatpush1.msra.mxu0 0.0
    %3695 = vmatprep.subr.mxu0 0.0
    %3696 = vmatpush1.msra.mxu0 0.0
    %3697 = vmatprep.subr.mxu0 0.0
    %3698 = vmatpush1.msra.mxu0 0.0
    %3699 = vmatprep.subr.mxu0 0.0
    %3700 = vmatpush1.msra.mxu0 0.0
    %3701 = vmatprep.subr.mxu0 0.0
    %3702 = vmatpush1.msra.mxu0 0.0
    %3703 = vmatprep.subr.mxu0 0.0
    %3704 = vmatpush1.msra.mxu0 0.0
    %3705 = vmatprep.mubr.f32.mxu0 0.0
    %3706 = vmatmul.mubr.f32.gmra.mrb[0].mxu0 %v3635
    %v3707 = vpop.f32.mrb[0].mxu0
    %v3708 = vadd.f32 %v3631, %v3707
    %v3709 = vpop.f32.mrb[0].mxu0
    %3710 = vdwg.mxu0
    %v3711 = vld [vmem:[%s7] sm:$0xff]
    %v3712 = vld [vmem:[%s7 + $0x8] sm:$0xff]
    %v3713 = vld [vmem:[%s7 + $0x10] sm:$0xff]
    %v3714 = vld [vmem:[%s7 + $0x18] sm:$0xff]
    %v3715 = vld [vmem:[%s7 + $0x20] sm:$0xff]
    %v3716 = vld [vmem:[%s7 + $0x28] sm:$0xff]
    %v3717 = vld [vmem:[%s7 + $0x30] sm:$0xff]
    %v3718 = vld [vmem:[%s7 + $0x38] sm:$0xff]
    %v3719 = vld [vmem:[%s7 + $0x40] sm:$0xff]
    %v3720 = vld [vmem:[%s7 + $0x48] sm:$0xff]
    %v3721 = vld [vmem:[%s7 + $0x50] sm:$0xff]
    %v3722 = vld [vmem:[%s7 + $0x58] sm:$0xff]
    %v3723 = vld [vmem:[%s7 + $0x60] sm:$0xff]
    %v3724 = vld [vmem:[%s7 + $0x68] sm:$0xff]
    %v3725 = vld [vmem:[%s7 + $0x70] sm:$0xff]
    %v3726 = vld [vmem:[%s7 + $0x78] sm:$0xff]
    %v3727 = vld [vmem:[%s8] sm:$0x1]
    %v3729 = vlaneseq
    %v3730 = vshrl.u32 %v3729, 7
    %v3731 = vsub.s32 0, %v3730
    %v3732 = vrot.slane %v3727, %v3731
    %3734 = vmatprep.subr.mxu0 0.0
    %3735 = vmatpush1.msra.mxu0 %v3711
    %3736 = vmatprep.subr.mxu0 0.0
    %3737 = vmatpush1.msra.mxu0 %v3712
    %3738 = vmatprep.subr.mxu0 0.0
    %3739 = vmatpush1.msra.mxu0 %v3713
    %3740 = vmatprep.subr.mxu0 0.0
    %3741 = vmatpush1.msra.mxu0 %v3714
    %3742 = vmatprep.subr.mxu0 0.0
    %3743 = vmatpush1.msra.mxu0 %v3715
    %3744 = vmatprep.subr.mxu0 0.0
    %3745 = vmatpush1.msra.mxu0 %v3716
    %3746 = vmatprep.subr.mxu0 0.0
    %3747 = vmatpush1.msra.mxu0 %v3717
    %3748 = vmatprep.subr.mxu0 0.0
    %3749 = vmatpush1.msra.mxu0 %v3718
    %3750 = vmatprep.subr.mxu0 0.0
    %3751 = vmatpush1.msra.mxu0 %v3719
    %3752 = vmatprep.subr.mxu0 0.0
    %3753 = vmatpush1.msra.mxu0 %v3720
    %3754 = vmatprep.subr.mxu0 0.0
    %3755 = vmatpush1.msra.mxu0 %v3721
    %3756 = vmatprep.subr.mxu0 0.0
    %3757 = vmatpush1.msra.mxu0 %v3722
    %3758 = vmatprep.subr.mxu0 0.0
    %3759 = vmatpush1.msra.mxu0 %v3723
    %3760 = vmatprep.subr.mxu0 0.0
    %3761 = vmatpush1.msra.mxu0 %v3724
    %3762 = vmatprep.subr.mxu0 0.0
    %3763 = vmatpush1.msra.mxu0 %v3725
    %3764 = vmatprep.subr.mxu0 0.0
    %3765 = vmatpush1.msra.mxu0 %v3726
    %3766 = vmatprep.subr.mxu0 0.0
    %3767 = vmatpush1.msra.mxu0 0.0
    %3768 = vmatprep.subr.mxu0 0.0
    %3769 = vmatpush1.msra.mxu0 0.0
    %3770 = vmatprep.subr.mxu0 0.0
    %3771 = vmatpush1.msra.mxu0 0.0
    %3772 = vmatprep.subr.mxu0 0.0
    %3773 = vmatpush1.msra.mxu0 0.0
    %3774 = vmatprep.subr.mxu0 0.0
    %3775 = vmatpush1.msra.mxu0 0.0
    %3776 = vmatprep.subr.mxu0 0.0
    %3777 = vmatpush1.msra.mxu0 0.0
    %3778 = vmatprep.subr.mxu0 0.0
    %3779 = vmatpush1.msra.mxu0 0.0
    %3780 = vmatprep.subr.mxu0 0.0
    %3781 = vmatpush1.msra.mxu0 0.0
    %3782 = vmatprep.subr.mxu0 0.0
    %3783 = vmatpush1.msra.mxu0 0.0
    %3784 = vmatprep.subr.mxu0 0.0
    %3785 = vmatpush1.msra.mxu0 0.0
    %3786 = vmatprep.subr.mxu0 0.0
    %3787 = vmatpush1.msra.mxu0 0.0
    %3788 = vmatprep.subr.mxu0 0.0
    %3789 = vmatpush1.msra.mxu0 0.0
    %3790 = vmatprep.subr.mxu0 0.0
    %3791 = vmatpush1.msra.mxu0 0.0
    %3792 = vmatprep.subr.mxu0 0.0
    %3793 = vmatpush1.msra.mxu0 0.0
    %3794 = vmatprep.subr.mxu0 0.0
    %3795 = vmatpush1.msra.mxu0 0.0
    %3796 = vmatprep.subr.mxu0 0.0
    %3797 = vmatpush1.msra.mxu0 0.0
    %3798 = vmatprep.mubr.f32.mxu0 0.0
    %3799 = vmatmul.mubr.f32.gmra.mrb[0].mxu0 %v3708
    %v3800 = vpop.f32.mrb[0].mxu0
    %v3801 = vadd.f32 %v3732, %v3800
    %v3802 = vpop.f32.mrb[0].mxu0
    %3803 = vdwg.mxu0
    %vm3804 = vcmask 33792
    %3805 = vst.msk [vmem:[#allocation4] sm:$0x3] %vm3804, %v3801
    // Predicated region
    $region38: #{cnn_forward.1} parent=1 // pred_check
      _
    $region39: #{cnn_forward.1} parent=1 // pred_check_branch
      %3807 = sbr.rel (0) target = $region41
    $region40: #{cnn_forward.1} parent=1 // pred_region
      %s3809 = ssub.s32 32, 32
      %3810 = vsyncadd [#allocation5], %s3809
      %s3812 = sshll.u32 [#allocation4], 4
      %s3813 = int_to_ptr.vmem [resolvable:$true] %s3812
      %3815 = dma.vmem_to_hbm [thread:$0]  %s3813, 32, %s9, [#allocation5]
    $region41: #{cnn_forward.1} parent=1 // pred_fallthru
      _
    // Predicated region
    $region42: #{cnn_forward.1} parent=1 // pred_check
      _
    $region43: #{cnn_forward.1} parent=1 // pred_check_branch
      %3817 = sbr.rel (0) target = $region45
    $region44: #{cnn_forward.1} parent=1 // pred_region
      %3818 = dma.done [#allocation5], 32
    $region45: #{cnn_forward.1} parent=1 // pred_fallthru
      _
    %3819 = vsyncpa [#allocation5], 1

</llo_original>
